<compile_context>
chip_gen: v6e
topology: v6e:2x2x1
jax: 0.10.0
libtpu: 0.0.40
codegen_flags: <defaults>
</compile_context>

<pallas_src>
import math

import jax
import jax.numpy as jnp
from jax.experimental import pallas as pl
from jax.experimental.pallas import tpu as pltpu

NUM_HEADS = 4
D_MODEL = 32          # input_size / d_model
D_K = D_MODEL // NUM_HEADS
OUT_SIZE = 16         # output_size


def _self_attn_kernel(q_ref, kv_ref,
                      wq_ref, bq_ref, wkv_ref, bkv_ref, wf_ref, bf_ref,
                      *out_refs):
    """One grid step handles B_BLK batch elements entirely in VMEM."""
    out_ref = out_refs[0]
    attn_ref = out_refs[1] if len(out_refs) == 2 else None

    bb, sq, d = q_ref.shape
    sk = kv_ref.shape[1]
    dk = d // NUM_HEADS

    # Flatten the batch block so the dense projections are big MXU matmuls.
    q2 = q_ref[...].reshape(bb * sq, d)          # (bb*Sq, D)
    kv2 = kv_ref[...].reshape(bb * sk, d)        # (bb*Sk, D)

    Q = jnp.dot(q2, wq_ref[...], preferred_element_type=jnp.float32) + bq_ref[...]
    KV = jnp.dot(kv2, wkv_ref[...], preferred_element_type=jnp.float32) + bkv_ref[...]

    Q3 = Q.reshape(bb, sq, d)                    # (bb, Sq, D)
    K3 = KV[:, :d].reshape(bb, sk, d)            # (bb, Sk, D)
    V3 = KV[:, d:].reshape(bb, sk, d)            # (bb, Sk, D)

    inv_sqrt_dk = 1.0 / math.sqrt(dk)
    probs, ctxs = [], []
    for h in range(NUM_HEADS):                   # static unrolled loop over heads
        sl = slice(h * dk, (h + 1) * dk)
        s = jnp.einsum('bqd,bkd->bqk', Q3[..., sl], K3[..., sl],
                       preferred_element_type=jnp.float32) * inv_sqrt_dk
        m = jnp.max(s, axis=-1, keepdims=True)
        e = jnp.exp(s - m)
        p = e / jnp.sum(e, axis=-1, keepdims=True)       # softmax over keys
        probs.append(p)
        ctxs.append(jnp.einsum('bqk,bkd->bqd', p, V3[..., sl],
                               preferred_element_type=jnp.float32))

    if attn_ref is not None:
        # Single stacked store per grid step instead of one per head.
        attn_ref[...] = jnp.stack(probs, axis=1)          # (bb, H, Sq, Sk)

    x = jnp.concatenate(ctxs, axis=-1).reshape(bb * sq, d)  # (bb*Sq, D)
    # Fused output_linear + out_layer projection.
    out = jnp.dot(x, wf_ref[...], preferred_element_type=jnp.float32) + bf_ref[...]
    out_ref[...] = out.reshape(bb, sq, -1)


def self_attention_feature_extract(inputs, query, params, *, b_blk=None,
                                    return_attn=True):
    """inputs: (B, Sk, D) keys/values; query: (B, Sq, D)."""
    wq, bq, wk, bk, wv, bv, wo, bo, wout, bout = params
    B, Sq, D = query.shape
    Sk = inputs.shape[1]
    O = wout.shape[1]
    H = NUM_HEADS

    # ---- inference-time parameter fusion (done once, outside the kernel) ----
    wkv = jnp.concatenate([wk, wv], axis=1)      # (D, 2D)
    bkv = jnp.concatenate([bk, bv], axis=1)      # (1, 2D)
    wf = wo @ wout                               # (D, O): output_linear ∘ out_layer
    bf = bo @ wout + bout                        # (1, O)

    if b_blk is None:
        b_blk = B if B <= 8 else next(bb for bb in (16, 8, 4, 2, 1) if B % bb == 0)
    assert B % b_blk == 0, "batch must be divisible by the batch block"
    nb = B // b_blk

    def _full(shape):
        # whole-array block (no tiling) -> satisfies the (8,128) rule trivially
        return pl.BlockSpec(shape, lambda b, _n=len(shape): (0,) * _n)

    in_specs = [
        pl.BlockSpec((b_blk, Sq, D), lambda b: (b, 0, 0)),   # query block
        pl.BlockSpec((b_blk, Sk, D), lambda b: (b, 0, 0)),   # key/value block
        _full((D, D)), _full((1, D)),                        # Wq, bq
        _full((D, 2 * D)), _full((1, 2 * D)),                # [Wk|Wv], [bk|bv]
        _full((D, O)), _full((1, O)),                        # fused Wo@Wout, bias
    ]
    out_spec = pl.BlockSpec((b_blk, Sq, O), lambda b: (b, 0, 0))
    if return_attn:
        out_shape = (jax.ShapeDtypeStruct((B, Sq, O), jnp.float32),
                     jax.ShapeDtypeStruct((B, H, Sq, Sk), jnp.float32))
        out_specs = [out_spec,
                     pl.BlockSpec((b_blk, H, Sq, Sk), lambda b: (b, 0, 0, 0))]
    else:
        out_shape = jax.ShapeDtypeStruct((B, Sq, O), jnp.float32)
        out_specs = out_spec

    flops = (2 * B * Sq * D * D            # Q projection
             + 2 * B * Sk * D * 2 * D      # fused KV projection
             + 4 * B * H * Sq * Sk * (D // H)  # QK^T + PV
             + 2 * B * Sq * D * O)         # fused output projection
    bytes_accessed = 4 * (query.size + inputs.size + wq.size + bq.size
                          + wkv.size + bkv.size + wf.size + bf.size
                          + B * Sq * O + (B * H * Sq * Sk if return_attn else 0))

    return pl.pallas_call(
        _self_attn_kernel,
        out_shape=out_shape,
        grid_spec=pltpu.PrefetchScalarGridSpec(
            num_scalar_prefetch=0,
            grid=(nb,),
            in_specs=in_specs,
            out_specs=out_specs,
        ),
        compiler_params=pltpu.CompilerParams(dimension_semantics=("parallel",)),
        cost_estimate=pl.CostEstimate(flops=flops,
                                      transcendentals=B * H * Sq * Sk,
                                      bytes_accessed=bytes_accessed),
    )(query, inputs, wq, bq, wkv, bkv, wf, bf)


def reference(inputs, query, params):
    """Pure-JAX reference mirroring the (unfused) PyTorch forward."""
    wq, bq, wk, bk, wv, bv, wo, bo, wout, bout = params
    B, Sq, D = query.shape
    Q = query @ wq + bq
    K = inputs @ wk + bk
    V = inputs @ wv + bv

    def split(x):
        return x.reshape(B, -1, NUM_HEADS, D_K).transpose(0, 2, 1, 3)

    Qh, Kh, Vh = split(Q), split(K), split(V)
    scores = jnp.einsum('bhqd,bhkd->bhqk', Qh, Kh) / math.sqrt(D_K)
    attn = jax.nn.softmax(scores, axis=-1)
    x = jnp.einsum('bhqk,bhkd->bhqd', attn, Vh).transpose(0, 2, 1, 3).reshape(B, Sq, D)
    feats = x @ wo + bo
    return feats @ wout + bout, attn


def init_params(key):
    ks = jax.random.split(key, 10)
    s = 0.1
    wq = s * jax.random.normal(ks[0], (D_MODEL, D_MODEL), jnp.float32)
    bq = s * jax.random.normal(ks[1], (1, D_MODEL), jnp.float32)
    wk = s * jax.random.normal(ks[2], (D_MODEL, D_MODEL), jnp.float32)
    bk = s * jax.random.normal(ks[3], (1, D_MODEL), jnp.float32)
    wv = s * jax.random.normal(ks[4], (D_MODEL, D_MODEL), jnp.float32)
    bv = s * jax.random.normal(ks[5], (1, D_MODEL), jnp.float32)
    wo = s * jax.random.normal(ks[6], (D_MODEL, D_MODEL), jnp.float32)
    bo = s * jax.random.normal(ks[7], (1, D_MODEL), jnp.float32)
    wout = s * jax.random.normal(ks[8], (D_MODEL, OUT_SIZE), jnp.float32)
    bout = s * jax.random.normal(ks[9], (1, OUT_SIZE), jnp.float32)
    return (wq, bq, wk, bk, wv, bv, wo, bo, wout, bout)


if __name__ == "__main__":
    key = jax.random.PRNGKey(0)
    k_in, k_q, k_p = jax.random.split(key, 3)

    B, Sq, Sk = 8, 8, 8
    inputs = jax.random.normal(k_in, (B, Sk, D_MODEL), jnp.float32)   # key/value source
    query = jax.random.normal(k_q, (B, Sq, D_MODEL), jnp.float32)     # query source
    params = init_params(k_p)

    # Main path: whole batch in one grid step (B_BLK = B), attn returned.
    out, attn = self_attention_feature_extract(inputs, query, params)
    out = jax.block_until_ready(out)
    attn = jax.block_until_ready(attn)

    ref_out, ref_attn = reference(inputs, query, params)
    assert out.shape == (B, Sq, OUT_SIZE)
    assert attn.shape == (B, NUM_HEADS, Sq, Sk)
    assert jnp.allclose(out, ref_out, rtol=1e-4, atol=1e-5), "output mismatch"
    assert jnp.allclose(attn, ref_attn, rtol=1e-4, atol=1e-5), "attn mismatch"

    # Exercise a multi-step grid (b_blk=2 -> grid=(4,)) and the attn-free fast path.
    out2 = self_attention_feature_extract(inputs, query, params, b_blk=2,
                                          return_attn=False)
    out2 = jax.block_until_ready(out2)
    assert jnp.allclose(out2, ref_out, rtol=1e-4, atol=1e-5), "blocked output mismatch"

    print("KERNEL_OK")
</pallas_src>

<mosaic_0001>
module attributes {stable_mosaic.version = 11 : i64} {
  func.func @_self_attn_kernel(%arg0: i32, %arg1: memref<8x8x32xf32, #tpu.memory_space<vmem>>, %arg2: memref<8x8x32xf32, #tpu.memory_space<vmem>>, %arg3: memref<32x32xf32, #tpu.memory_space<vmem>>, %arg4: memref<1x32xf32, #tpu.memory_space<vmem>>, %arg5: memref<32x64xf32, #tpu.memory_space<vmem>>, %arg6: memref<1x64xf32, #tpu.memory_space<vmem>>, %arg7: memref<32x16xf32, #tpu.memory_space<vmem>>, %arg8: memref<1x16xf32, #tpu.memory_space<vmem>>, %arg9: memref<8x8x16xf32, #tpu.memory_space<vmem>>, %arg10: memref<8x4x8x8xf32, #tpu.memory_space<vmem>>) attributes {dimension_semantics = [#tpu.dimension_semantics<parallel>], iteration_bounds = array<i64: 1>, scalar_prefetch = 0 : i64, scratch_operands = 0 : i64, tpu.core_type = #tpu.core_type<tc>, window_params = [{transform_indices = @transform_0, window_bounds = array<i64: 8, 8, 32>}, {transform_indices = @transform_1, window_bounds = array<i64: 8, 8, 32>}, {pipeline_mode = #tpu.pipeline_mode<synchronous>, transform_indices = @transform_2, window_bounds = array<i64: 32, 32>}, {pipeline_mode = #tpu.pipeline_mode<synchronous>, transform_indices = @transform_3, window_bounds = array<i64: 1, 32>}, {pipeline_mode = #tpu.pipeline_mode<synchronous>, transform_indices = @transform_4, window_bounds = array<i64: 32, 64>}, {pipeline_mode = #tpu.pipeline_mode<synchronous>, transform_indices = @transform_5, window_bounds = array<i64: 1, 64>}, {pipeline_mode = #tpu.pipeline_mode<synchronous>, transform_indices = @transform_6, window_bounds = array<i64: 32, 16>}, {pipeline_mode = #tpu.pipeline_mode<synchronous>, transform_indices = @transform_7, window_bounds = array<i64: 1, 16>}, {transform_indices = @transform_8, window_bounds = array<i64: 8, 8, 16>}, {transform_indices = @transform_9, window_bounds = array<i64: 8, 4, 8, 8>}]} {
    %c0 = arith.constant 0 : index
    %c0_0 = arith.constant 0 : index
    %c0_1 = arith.constant 0 : index
    %0 = vector.load %arg1[%c0, %c0_0, %c0_1] : memref<8x8x32xf32, #tpu.memory_space<vmem>>, vector<8x8x32xf32>
    %1 = vector.shape_cast %0 : vector<8x8x32xf32> to vector<64x32xf32>
    %c0_2 = arith.constant 0 : index
    %c0_3 = arith.constant 0 : index
    %c0_4 = arith.constant 0 : index
    %2 = vector.load %arg2[%c0_2, %c0_3, %c0_4] : memref<8x8x32xf32, #tpu.memory_space<vmem>>, vector<8x8x32xf32>
    %3 = vector.shape_cast %2 : vector<8x8x32xf32> to vector<64x32xf32>
    %c0_5 = arith.constant 0 : index
    %c0_6 = arith.constant 0 : index
    %4 = vector.load %arg3[%c0_5, %c0_6] : memref<32x32xf32, #tpu.memory_space<vmem>>, vector<32x32xf32>
    %cst = arith.constant dense<0.000000e+00> : vector<64x32xf32>
    %5 = tpu.matmul %1, %4, %cst {dimension_numbers = #tpu.dot_dimension_numbers<[1], [0], [0], [1], [0, 0, 1, 1], [], []>} : vector<64x32xf32>, vector<32x32xf32>, vector<64x32xf32> -> vector<64x32xf32>
    %c0_7 = arith.constant 0 : index
    %c0_8 = arith.constant 0 : index
    %6 = vector.load %arg4[%c0_7, %c0_8] : memref<1x32xf32, #tpu.memory_space<vmem>>, vector<1x32xf32>
    %7 = vector.broadcast %6 : vector<1x32xf32> to vector<64x32xf32>
    %8 = arith.addf %5, %7 : vector<64x32xf32>
    %c0_9 = arith.constant 0 : index
    %c0_10 = arith.constant 0 : index
    %9 = vector.load %arg5[%c0_9, %c0_10] : memref<32x64xf32, #tpu.memory_space<vmem>>, vector<32x64xf32>
    %cst_11 = arith.constant dense<0.000000e+00> : vector<64x64xf32>
    %10 = tpu.matmul %3, %9, %cst_11 {dimension_numbers = #tpu.dot_dimension_numbers<[1], [0], [0], [1], [0, 0, 1, 1], [], []>} : vector<64x32xf32>, vector<32x64xf32>, vector<64x64xf32> -> vector<64x64xf32>
    %c0_12 = arith.constant 0 : index
    %c0_13 = arith.constant 0 : index
    %11 = vector.load %arg6[%c0_12, %c0_13] : memref<1x64xf32, #tpu.memory_space<vmem>>, vector<1x64xf32>
    %12 = vector.broadcast %11 : vector<1x64xf32> to vector<64x64xf32>
    %13 = arith.addf %10, %12 : vector<64x64xf32>
    %14 = vector.shape_cast %8 : vector<64x32xf32> to vector<8x8x32xf32>
    %15 = vector.extract_strided_slice %13 {offsets = [0, 0], sizes = [64, 32], strides = [1, 1]} : vector<64x64xf32> to vector<64x32xf32>
    %16 = vector.shape_cast %15 : vector<64x32xf32> to vector<8x8x32xf32>
    %17 = vector.extract_strided_slice %13 {offsets = [0, 32], sizes = [64, 32], strides = [1, 1]} : vector<64x64xf32> to vector<64x32xf32>
    %18 = vector.shape_cast %17 : vector<64x32xf32> to vector<8x8x32xf32>
    %19 = vector.extract_strided_slice %14 {offsets = [0, 0, 0], sizes = [8, 8, 8], strides = [1, 1, 1]} : vector<8x8x32xf32> to vector<8x8x8xf32>
    %20 = vector.extract_strided_slice %16 {offsets = [0, 0, 0], sizes = [8, 8, 8], strides = [1, 1, 1]} : vector<8x8x32xf32> to vector<8x8x8xf32>
    "tpu.trace_start"() <{level = 10 : i32, message = "bqd,bkd->bqk"}> : () -> ()
    %cst_14 = arith.constant dense<0.000000e+00> : vector<8x8x8xf32>
    %21 = tpu.matmul %19, %20, %cst_14 {dimension_numbers = #tpu.dot_dimension_numbers<[2], [2], [1], [1], [0, 0, 0, 1, 1, 1], [0], [0]>} : vector<8x8x8xf32>, vector<8x8x8xf32>, vector<8x8x8xf32> -> vector<8x8x8xf32>
    "tpu.trace_stop"() : () -> ()
    %cst_15 = arith.constant 0.353553385 : f32
    %22 = vector.broadcast %cst_15 : f32 to vector<8x8x8xf32>
    %23 = arith.mulf %21, %22 : vector<8x8x8xf32>
    %cst_16 = arith.constant dense<0xFF800000> : vector<8x8xf32>
    %24 = vector.multi_reduction <maximumf>, %23, %cst_16 [2] : vector<8x8x8xf32> to vector<8x8xf32>
    %25 = vector.shape_cast %24 : vector<8x8xf32> to vector<8x8x1xf32>
    %26 = vector.broadcast %25 : vector<8x8x1xf32> to vector<8x8x8xf32>
    %27 = arith.subf %23, %26 : vector<8x8x8xf32>
    %28 = math.exp %27 : vector<8x8x8xf32>
    %cst_17 = arith.constant dense<0.000000e+00> : vector<8x8xf32>
    %29 = vector.multi_reduction <add>, %28, %cst_17 [2] : vector<8x8x8xf32> to vector<8x8xf32>
    %30 = vector.shape_cast %29 : vector<8x8xf32> to vector<8x8x1xf32>
    %31 = vector.broadcast %30 : vector<8x8x1xf32> to vector<8x8x8xf32>
    %32 = arith.divf %28, %31 : vector<8x8x8xf32>
    %33 = vector.extract_strided_slice %18 {offsets = [0, 0, 0], sizes = [8, 8, 8], strides = [1, 1, 1]} : vector<8x8x32xf32> to vector<8x8x8xf32>
    "tpu.trace_start"() <{level = 10 : i32, message = "bqk,bkd->bqd"}> : () -> ()
    %cst_18 = arith.constant dense<0.000000e+00> : vector<8x8x8xf32>
    %34 = tpu.matmul %32, %33, %cst_18 {dimension_numbers = #tpu.dot_dimension_numbers<[2], [1], [1], [2], [0, 0, 0, 1, 1, 2], [0], [0]>} : vector<8x8x8xf32>, vector<8x8x8xf32>, vector<8x8x8xf32> -> vector<8x8x8xf32>
    "tpu.trace_stop"() : () -> ()
    %35 = vector.extract_strided_slice %14 {offsets = [0, 0, 8], sizes = [8, 8, 8], strides = [1, 1, 1]} : vector<8x8x32xf32> to vector<8x8x8xf32>
    %36 = vector.extract_strided_slice %16 {offsets = [0, 0, 8], sizes = [8, 8, 8], strides = [1, 1, 1]} : vector<8x8x32xf32> to vector<8x8x8xf32>
    "tpu.trace_start"() <{level = 10 : i32, message = "bqd,bkd->bqk"}> : () -> ()
    %cst_19 = arith.constant dense<0.000000e+00> : vector<8x8x8xf32>
    %37 = tpu.matmul %35, %36, %cst_19 {dimension_numbers = #tpu.dot_dimension_numbers<[2], [2], [1], [1], [0, 0, 0, 1, 1, 1], [0], [0]>} : vector<8x8x8xf32>, vector<8x8x8xf32>, vector<8x8x8xf32> -> vector<8x8x8xf32>
    "tpu.trace_stop"() : () -> ()
    %cst_20 = arith.constant 0.353553385 : f32
    %38 = vector.broadcast %cst_20 : f32 to vector<8x8x8xf32>
    %39 = arith.mulf %37, %38 : vector<8x8x8xf32>
    %cst_21 = arith.constant dense<0xFF800000> : vector<8x8xf32>
    %40 = vector.multi_reduction <maximumf>, %39, %cst_21 [2] : vector<8x8x8xf32> to vector<8x8xf32>
    %41 = vector.shape_cast %40 : vector<8x8xf32> to vector<8x8x1xf32>
    %42 = vector.broadcast %41 : vector<8x8x1xf32> to vector<8x8x8xf32>
    %43 = arith.subf %39, %42 : vector<8x8x8xf32>
    %44 = math.exp %43 : vector<8x8x8xf32>
    %cst_22 = arith.constant dense<0.000000e+00> : vector<8x8xf32>
    %45 = vector.multi_reduction <add>, %44, %cst_22 [2] : vector<8x8x8xf32> to vector<8x8xf32>
    %46 = vector.shape_cast %45 : vector<8x8xf32> to vector<8x8x1xf32>
    %47 = vector.broadcast %46 : vector<8x8x1xf32> to vector<8x8x8xf32>
    %48 = arith.divf %44, %47 : vector<8x8x8xf32>
    %49 = vector.extract_strided_slice %18 {offsets = [0, 0, 8], sizes = [8, 8, 8], strides = [1, 1, 1]} : vector<8x8x32xf32> to vector<8x8x8xf32>
    "tpu.trace_start"() <{level = 10 : i32, message = "bqk,bkd->bqd"}> : () -> ()
    %cst_23 = arith.constant dense<0.000000e+00> : vector<8x8x8xf32>
    %50 = tpu.matmul %48, %49, %cst_23 {dimension_numbers = #tpu.dot_dimension_numbers<[2], [1], [1], [2], [0, 0, 0, 1, 1, 2], [0], [0]>} : vector<8x8x8xf32>, vector<8x8x8xf32>, vector<8x8x8xf32> -> vector<8x8x8xf32>
    "tpu.trace_stop"() : () -> ()
    %51 = vector.extract_strided_slice %14 {offsets = [0, 0, 16], sizes = [8, 8, 8], strides = [1, 1, 1]} : vector<8x8x32xf32> to vector<8x8x8xf32>
    %52 = vector.extract_strided_slice %16 {offsets = [0, 0, 16], sizes = [8, 8, 8], strides = [1, 1, 1]} : vector<8x8x32xf32> to vector<8x8x8xf32>
    "tpu.trace_start"() <{level = 10 : i32, message = "bqd,bkd->bqk"}> : () -> ()
    %cst_24 = arith.constant dense<0.000000e+00> : vector<8x8x8xf32>
    %53 = tpu.matmul %51, %52, %cst_24 {dimension_numbers = #tpu.dot_dimension_numbers<[2], [2], [1], [1], [0, 0, 0, 1, 1, 1], [0], [0]>} : vector<8x8x8xf32>, vector<8x8x8xf32>, vector<8x8x8xf32> -> vector<8x8x8xf32>
    "tpu.trace_stop"() : () -> ()
    %cst_25 = arith.constant 0.353553385 : f32
    %54 = vector.broadcast %cst_25 : f32 to vector<8x8x8xf32>
    %55 = arith.mulf %53, %54 : vector<8x8x8xf32>
    %cst_26 = arith.constant dense<0xFF800000> : vector<8x8xf32>
    %56 = vector.multi_reduction <maximumf>, %55, %cst_26 [2] : vector<8x8x8xf32> to vector<8x8xf32>
    %57 = vector.shape_cast %56 : vector<8x8xf32> to vector<8x8x1xf32>
    %58 = vector.broadcast %57 : vector<8x8x1xf32> to vector<8x8x8xf32>
    %59 = arith.subf %55, %58 : vector<8x8x8xf32>
    %60 = math.exp %59 : vector<8x8x8xf32>
    %cst_27 = arith.constant dense<0.000000e+00> : vector<8x8xf32>
    %61 = vector.multi_reduction <add>, %60, %cst_27 [2] : vector<8x8x8xf32> to vector<8x8xf32>
    %62 = vector.shape_cast %61 : vector<8x8xf32> to vector<8x8x1xf32>
    %63 = vector.broadcast %62 : vector<8x8x1xf32> to vector<8x8x8xf32>
    %64 = arith.divf %60, %63 : vector<8x8x8xf32>
    %65 = vector.extract_strided_slice %18 {offsets = [0, 0, 16], sizes = [8, 8, 8], strides = [1, 1, 1]} : vector<8x8x32xf32> to vector<8x8x8xf32>
    "tpu.trace_start"() <{level = 10 : i32, message = "bqk,bkd->bqd"}> : () -> ()
    %cst_28 = arith.constant dense<0.000000e+00> : vector<8x8x8xf32>
    %66 = tpu.matmul %64, %65, %cst_28 {dimension_numbers = #tpu.dot_dimension_numbers<[2], [1], [1], [2], [0, 0, 0, 1, 1, 2], [0], [0]>} : vector<8x8x8xf32>, vector<8x8x8xf32>, vector<8x8x8xf32> -> vector<8x8x8xf32>
    "tpu.trace_stop"() : () -> ()
    %67 = vector.extract_strided_slice %14 {offsets = [0, 0, 24], sizes = [8, 8, 8], strides = [1, 1, 1]} : vector<8x8x32xf32> to vector<8x8x8xf32>
    %68 = vector.extract_strided_slice %16 {offsets = [0, 0, 24], sizes = [8, 8, 8], strides = [1, 1, 1]} : vector<8x8x32xf32> to vector<8x8x8xf32>
    "tpu.trace_start"() <{level = 10 : i32, message = "bqd,bkd->bqk"}> : () -> ()
    %cst_29 = arith.constant dense<0.000000e+00> : vector<8x8x8xf32>
    %69 = tpu.matmul %67, %68, %cst_29 {dimension_numbers = #tpu.dot_dimension_numbers<[2], [2], [1], [1], [0, 0, 0, 1, 1, 1], [0], [0]>} : vector<8x8x8xf32>, vector<8x8x8xf32>, vector<8x8x8xf32> -> vector<8x8x8xf32>
    "tpu.trace_stop"() : () -> ()
    %cst_30 = arith.constant 0.353553385 : f32
    %70 = vector.broadcast %cst_30 : f32 to vector<8x8x8xf32>
    %71 = arith.mulf %69, %70 : vector<8x8x8xf32>
    %cst_31 = arith.constant dense<0xFF800000> : vector<8x8xf32>
    %72 = vector.multi_reduction <maximumf>, %71, %cst_31 [2] : vector<8x8x8xf32> to vector<8x8xf32>
    %73 = vector.shape_cast %72 : vector<8x8xf32> to vector<8x8x1xf32>
    %74 = vector.broadcast %73 : vector<8x8x1xf32> to vector<8x8x8xf32>
    %75 = arith.subf %71, %74 : vector<8x8x8xf32>
    %76 = math.exp %75 : vector<8x8x8xf32>
    %cst_32 = arith.constant dense<0.000000e+00> : vector<8x8xf32>
    %77 = vector.multi_reduction <add>, %76, %cst_32 [2] : vector<8x8x8xf32> to vector<8x8xf32>
    %78 = vector.shape_cast %77 : vector<8x8xf32> to vector<8x8x1xf32>
    %79 = vector.broadcast %78 : vector<8x8x1xf32> to vector<8x8x8xf32>
    %80 = arith.divf %76, %79 : vector<8x8x8xf32>
    %81 = vector.extract_strided_slice %18 {offsets = [0, 0, 24], sizes = [8, 8, 8], strides = [1, 1, 1]} : vector<8x8x32xf32> to vector<8x8x8xf32>
    "tpu.trace_start"() <{level = 10 : i32, message = "bqk,bkd->bqd"}> : () -> ()
    %cst_33 = arith.constant dense<0.000000e+00> : vector<8x8x8xf32>
    %82 = tpu.matmul %80, %81, %cst_33 {dimension_numbers = #tpu.dot_dimension_numbers<[2], [1], [1], [2], [0, 0, 0, 1, 1, 2], [0], [0]>} : vector<8x8x8xf32>, vector<8x8x8xf32>, vector<8x8x8xf32> -> vector<8x8x8xf32>
    "tpu.trace_stop"() : () -> ()
    %83 = vector.shape_cast %32 : vector<8x8x8xf32> to vector<8x1x8x8xf32>
    %84 = vector.shape_cast %48 : vector<8x8x8xf32> to vector<8x1x8x8xf32>
    %85 = vector.shape_cast %64 : vector<8x8x8xf32> to vector<8x1x8x8xf32>
    %86 = vector.shape_cast %80 : vector<8x8x8xf32> to vector<8x1x8x8xf32>
    %87 = tpu.concatenate %83, %84, %85, %86 in 1 : vector<8x1x8x8xf32>, vector<8x1x8x8xf32>, vector<8x1x8x8xf32>, vector<8x1x8x8xf32> -> vector<8x4x8x8xf32>
    %c0_34 = arith.constant 0 : index
    %c0_35 = arith.constant 0 : index
    %c0_36 = arith.constant 0 : index
    %c0_37 = arith.constant 0 : index
    %88 = vector.load %arg10[%c0_34, %c0_35, %c0_36, %c0_37] : memref<8x4x8x8xf32, #tpu.memory_space<vmem>>, vector<8x4x8x8xf32>
    tpu.vector_store %arg10[%c0_34, %c0_35, %c0_36, %c0_37], %87 {strides = array<i32>} : memref<8x4x8x8xf32, #tpu.memory_space<vmem>>, vector<8x4x8x8xf32>,
    %89 = tpu.concatenate %34, %50, %66, %82 in 2 : vector<8x8x8xf32>, vector<8x8x8xf32>, vector<8x8x8xf32>, vector<8x8x8xf32> -> vector<8x8x32xf32>
    %90 = vector.shape_cast %89 : vector<8x8x32xf32> to vector<64x32xf32>
    %c0_38 = arith.constant 0 : index
    %c0_39 = arith.constant 0 : index
    %91 = vector.load %arg7[%c0_38, %c0_39] : memref<32x16xf32, #tpu.memory_space<vmem>>, vector<32x16xf32>
    %cst_40 = arith.constant dense<0.000000e+00> : vector<64x16xf32>
    %92 = tpu.matmul %90, %91, %cst_40 {dimension_numbers = #tpu.dot_dimension_numbers<[1], [0], [0], [1], [0, 0, 1, 1], [], []>} : vector<64x32xf32>, vector<32x16xf32>, vector<64x16xf32> -> vector<64x16xf32>
    %c0_41 = arith.constant 0 : index
    %c0_42 = arith.constant 0 : index
    %93 = vector.load %arg8[%c0_41, %c0_42] : memref<1x16xf32, #tpu.memory_space<vmem>>, vector<1x16xf32>
    %94 = vector.broadcast %93 : vector<1x16xf32> to vector<64x16xf32>
    %95 = arith.addf %92, %94 : vector<64x16xf32>
    %96 = vector.shape_cast %95 : vector<64x16xf32> to vector<8x8x16xf32>
    %c0_43 = arith.constant 0 : index
    %c0_44 = arith.constant 0 : index
    %c0_45 = arith.constant 0 : index
    %97 = vector.load %arg9[%c0_43, %c0_44, %c0_45] : memref<8x8x16xf32, #tpu.memory_space<vmem>>, vector<8x8x16xf32>
    tpu.vector_store %arg9[%c0_43, %c0_44, %c0_45], %96 {strides = array<i32>} : memref<8x8x16xf32, #tpu.memory_space<vmem>>, vector<8x8x16xf32>,
    return
  }
  func.func @transform_0(%arg0: i32) -> (i32, i32, i32) {
    %c0_i32 = arith.constant 0 : i32
    %c0_i32_0 = arith.constant 0 : i32
    %c0_i32_1 = arith.constant 0 : i32
    return %arg0, %c0_i32, %c0_i32_0 : i32, i32, i32
  }
  func.func @transform_1(%arg0: i32) -> (i32, i32, i32) {
    %c0_i32 = arith.constant 0 : i32
    %c0_i32_0 = arith.constant 0 : i32
    %c0_i32_1 = arith.constant 0 : i32
    return %arg0, %c0_i32, %c0_i32_0 : i32, i32, i32
  }
  func.func @transform_2(%arg0: i32) -> (i32, i32) {
    %c0_i32 = arith.constant 0 : i32
    %c0_i32_0 = arith.constant 0 : i32
    %c0_i32_1 = arith.constant 0 : i32
    return %c0_i32, %c0_i32_0 : i32, i32
  }
  func.func @transform_3(%arg0: i32) -> (i32, i32) {
    %c0_i32 = arith.constant 0 : i32
    %c0_i32_0 = arith.constant 0 : i32
    %c0_i32_1 = arith.constant 0 : i32
    return %c0_i32, %c0_i32_0 : i32, i32
  }
  func.func @transform_4(%arg0: i32) -> (i32, i32) {
    %c0_i32 = arith.constant 0 : i32
    %c0_i32_0 = arith.constant 0 : i32
    %c0_i32_1 = arith.constant 0 : i32
    return %c0_i32, %c0_i32_0 : i32, i32
  }
  func.func @transform_5(%arg0: i32) -> (i32, i32) {
    %c0_i32 = arith.constant 0 : i32
    %c0_i32_0 = arith.constant 0 : i32
    %c0_i32_1 = arith.constant 0 : i32
    return %c0_i32, %c0_i32_0 : i32, i32
  }
  func.func @transform_6(%arg0: i32) -> (i32, i32) {
    %c0_i32 = arith.constant 0 : i32
    %c0_i32_0 = arith.constant 0 : i32
    %c0_i32_1 = arith.constant 0 : i32
    return %c0_i32, %c0_i32_0 : i32, i32
  }
  func.func @transform_7(%arg0: i32) -> (i32, i32) {
    %c0_i32 = arith.constant 0 : i32
    %c0_i32_0 = arith.constant 0 : i32
    %c0_i32_1 = arith.constant 0 : i32
    return %c0_i32, %c0_i32_0 : i32, i32
  }
  func.func @transform_8(%arg0: i32) -> (i32, i32, i32) {
    %c0_i32 = arith.constant 0 : i32
    %c0_i32_0 = arith.constant 0 : i32
    %c0_i32_1 = arith.constant 0 : i32
    return %arg0, %c0_i32, %c0_i32_0 : i32, i32, i32
  }
  func.func @transform_9(%arg0: i32) -> (i32, i32, i32, i32) {
    %c0_i32 = arith.constant 0 : i32
    %c0_i32_0 = arith.constant 0 : i32
    %c0_i32_1 = arith.constant 0 : i32
    %c0_i32_2 = arith.constant 0 : i32
    return %arg0, %c0_i32, %c0_i32_0, %c0_i32_1 : i32, i32, i32, i32
  }
}

</mosaic_0001>

<llo_original>
// kernel: tpu_custom_call.1
$region0: #{tpu_custom_call.1}
  #allocation0 [shape = 'u32[]', space=smem, size = 0x4, offset = 0x4, fixed_abs, tag = 'smem constant byte address 0x4 - core index']
  #allocation1 [shape = 'u32[144,128]{1,0:T(1,128)}', space=vmem, size = 0x12000, scoped, tag = 'internal scratch']
  %s0 = inlined_call_operand.hbm [shape: f32[8,8,32], index: 0, kind: input, shape index: {}]
  %s1 = inlined_call_operand.hbm [shape: f32[8,8,32], index: 1, kind: input, shape index: {}]
  %s2 = inlined_call_operand.vmem [shape: f32[32,32], index: 2, kind: input, shape index: {}]
  %s3 = inlined_call_operand.vmem [shape: f32[1,32], index: 3, kind: input, shape index: {}]
  %s4 = inlined_call_operand.hbm [shape: f32[32,64], index: 4, kind: input, shape index: {}]
  %s5 = inlined_call_operand.vmem [shape: f32[1,64], index: 5, kind: input, shape index: {}]
  %s6 = inlined_call_operand.vmem [shape: f32[32,16], index: 6, kind: input, shape index: {}]
  %s7 = inlined_call_operand.vmem [shape: f32[1,16], index: 7, kind: input, shape index: {}]
  %s8 = inlined_call_operand.hbm [shape: f32[8,8,16], index: 8, kind: output, shape index: {0}]
  %s9 = inlined_call_operand.hbm [shape: f32[8,4,8,8], index: 9, kind: output, shape index: {1}]
  %10 = xla_tuple %s8, %s9
  %s11 = sld [smem:[#allocation0]]
  $region62: #{tpu_custom_call.1} parent=0
    _
  %s13 = ssub.s32 1, %s11
  %s14 = scalar_select 0, %s13, %s11
  $region1: #{tpu_custom_call.1} parent=0
    #allocation2 [shape = 'u8[32768]{0}', space=vmem, size = 0x8000, scoped, tag = 'input window, operand 0, single buffered']
    #allocation3 [shape = 's32[1]{0}', space=sflag, size = 0x4, scoped, tag = 'scoped memory for tpu_custom_call.1']
    #allocation4 [shape = 's32[1]{0}', space=sflag, size = 0x4, scoped, tag = 'scoped memory for tpu_custom_call.1']
    #allocation5 [shape = 'u8[32768]{0}', space=vmem, size = 0x8000, scoped, tag = 'input window, operand 1, single buffered']
    #allocation6 [shape = 's32[1]{0}', space=sflag, size = 0x4, scoped, tag = 'scoped memory for tpu_custom_call.1']
    #allocation7 [shape = 'u8[16384]{0}', space=vmem, size = 0x4000, scoped, tag = 'input window, operand 4, single buffered']
    #allocation8 [shape = 'u8[32768]{0}', space=vmem, size = 0x8000, scoped, tag = 'output window, operand 0, single buffered']
    #allocation9 [shape = 'u8[131072]{0}', space=vmem, size = 0x20000, scoped, tag = 'output window, operand 1, single buffered']
    #allocation10 [shape = 's32[1]{0}', space=sflag, size = 0x4, scoped, tag = 'scoped memory for tpu_custom_call.1']
    %15 = vsyncpa [#allocation3], 0
    %16 = vsyncpa [#allocation6], 0
    %17 = vsyncpa [#allocation4], 0
    %18 = vsyncpa [#allocation10], 0
    // Predicated region
    $region2: #{tpu_custom_call.1} parent=1 // pred_check
      _
    $region3: #{tpu_custom_call.1} parent=1 // pred_check_branch
      %20 = sbr.rel (0) target = $region5
    $region4: #{tpu_custom_call.1} parent=1 // pred_region
      %s22 = ssub.s32 1024, 1024
      %23 = vsyncadd [#allocation3], %s22
      %s24 = sshll.u32 [#allocation2], 4
      %s25 = int_to_ptr.vmem [resolvable:$true] %s24
      %30 = dma.hbm_to_vmem [thread:$0]  %s0, 1024, %s25, [#allocation3], 128, 128, 8
    $region5: #{tpu_custom_call.1} parent=1 // pred_fallthru
      _
    // Predicated region
    $region6: #{tpu_custom_call.1} parent=1 // pred_check
      _
    $region7: #{tpu_custom_call.1} parent=1 // pred_check_branch
      %32 = sbr.rel (0) target = $region9
    $region8: #{tpu_custom_call.1} parent=1 // pred_region
      %s34 = ssub.s32 1024, 1024
      %35 = vsyncadd [#allocation6], %s34
      %s36 = sshll.u32 [#allocation5], 4
      %s37 = int_to_ptr.vmem [resolvable:$true] %s36
      %42 = dma.hbm_to_vmem [thread:$0]  %s1, 1024, %s37, [#allocation6], 128, 128, 8
    $region9: #{tpu_custom_call.1} parent=1 // pred_fallthru
      _
    // Predicated region
    $region10: #{tpu_custom_call.1} parent=1 // pred_check
      _
    $region11: #{tpu_custom_call.1} parent=1 // pred_check_branch
      %44 = sbr.rel (0) target = $region13
    $region12: #{tpu_custom_call.1} parent=1 // pred_region
      _
    $region13: #{tpu_custom_call.1} parent=1 // pred_fallthru
      _
    // Predicated region
    $region14: #{tpu_custom_call.1} parent=1 // pred_check
      _
    $region15: #{tpu_custom_call.1} parent=1 // pred_check_branch
      %46 = sbr.rel (0) target = $region17
    $region16: #{tpu_custom_call.1} parent=1 // pred_region
      _
    $region17: #{tpu_custom_call.1} parent=1 // pred_fallthru
      _
    // Predicated region
    $region18: #{tpu_custom_call.1} parent=1 // pred_check
      _
    $region19: #{tpu_custom_call.1} parent=1 // pred_check_branch
      %48 = sbr.rel (0) target = $region21
    $region20: #{tpu_custom_call.1} parent=1 // pred_region
      %s50 = ssub.s32 512, 512
      %51 = vsyncadd [#allocation6], %s50
      %s52 = sshll.u32 [#allocation7], 4
      %s53 = int_to_ptr.vmem [resolvable:$true] %s52
      %58 = dma.hbm_to_vmem [thread:$0]  %s4, 512, %s53, [#allocation6], 128, 128, 8
    $region21: #{tpu_custom_call.1} parent=1 // pred_fallthru
      _
    // Predicated region
    $region22: #{tpu_custom_call.1} parent=1 // pred_check
      _
    $region23: #{tpu_custom_call.1} parent=1 // pred_check_branch
      %60 = sbr.rel (0) target = $region25
    $region24: #{tpu_custom_call.1} parent=1 // pred_region
      _
    $region25: #{tpu_custom_call.1} parent=1 // pred_fallthru
      _
    // Predicated region
    $region26: #{tpu_custom_call.1} parent=1 // pred_check
      _
    $region27: #{tpu_custom_call.1} parent=1 // pred_check_branch
      %62 = sbr.rel (0) target = $region29
    $region28: #{tpu_custom_call.1} parent=1 // pred_region
      _
    $region29: #{tpu_custom_call.1} parent=1 // pred_fallthru
      _
    // Predicated region
    $region30: #{tpu_custom_call.1} parent=1 // pred_check
      _
    $region31: #{tpu_custom_call.1} parent=1 // pred_check_branch
      %64 = sbr.rel (0) target = $region33
    $region32: #{tpu_custom_call.1} parent=1 // pred_region
      _
    $region33: #{tpu_custom_call.1} parent=1 // pred_fallthru
      _
    // Predicated region
    $region34: #{tpu_custom_call.1} parent=1 // pred_check
      _
    $region35: #{tpu_custom_call.1} parent=1 // pred_check_branch
      %66 = sbr.rel (0) target = $region37
    $region36: #{tpu_custom_call.1} parent=1 // pred_region
      %67 = dma.done [#allocation3], 1024
    $region37: #{tpu_custom_call.1} parent=1 // pred_fallthru
      _
    // Predicated region
    $region38: #{tpu_custom_call.1} parent=1 // pred_check
      _
    $region39: #{tpu_custom_call.1} parent=1 // pred_check_branch
      %69 = sbr.rel (0) target = $region41
    $region40: #{tpu_custom_call.1} parent=1 // pred_region
      %70 = dma.done [#allocation6], 1024
    $region41: #{tpu_custom_call.1} parent=1 // pred_fallthru
      _
    // Predicated region
    $region42: #{tpu_custom_call.1} parent=1 // pred_check
      _
    $region43: #{tpu_custom_call.1} parent=1 // pred_check_branch
      %72 = sbr.rel (0) target = $region45
    $region44: #{tpu_custom_call.1} parent=1 // pred_region
      %73 = dma.done [#allocation6], 512
    $region45: #{tpu_custom_call.1} parent=1 // pred_fallthru
      _
    %v74 = vld [vmem:[#allocation2] sm:$0xff]
    %v75 = vld [vmem:[#allocation2 + $0x8] sm:$0xff]
    %v76 = vld [vmem:[#allocation2 + $0x10] sm:$0xff]
    %v77 = vld [vmem:[#allocation2 + $0x18] sm:$0xff]
    %v78 = vld [vmem:[#allocation2 + $0x20] sm:$0xff]
    %v79 = vld [vmem:[#allocation2 + $0x28] sm:$0xff]
    %v80 = vld [vmem:[#allocation2 + $0x30] sm:$0xff]
    %v81 = vld [vmem:[#allocation2 + $0x38] sm:$0xff]
    %v82 = vld [vmem:[#allocation5] sm:$0xff]
    %v83 = vld [vmem:[#allocation5 + $0x8] sm:$0xff]
    %v84 = vld [vmem:[#allocation5 + $0x10] sm:$0xff]
    %v85 = vld [vmem:[#allocation5 + $0x18] sm:$0xff]
    %v86 = vld [vmem:[#allocation5 + $0x20] sm:$0xff]
    %v87 = vld [vmem:[#allocation5 + $0x28] sm:$0xff]
    %v88 = vld [vmem:[#allocation5 + $0x30] sm:$0xff]
    %v89 = vld [vmem:[#allocation5 + $0x38] sm:$0xff]
    %v90 = vld [vmem:[%s2] sm:$0xff]
    %v91 = vld [vmem:[%s2 + $0x8] sm:$0xff]
    %v92 = vld [vmem:[%s2 + $0x10] sm:$0xff]
    %v93 = vld [vmem:[%s2 + $0x18] sm:$0xff]
    %v94 = vld [vmem:[%s3] sm:$0x1]
    %v96 = vlaneseq
    %v97 = vshrl.u32 %v96, 7
    %v98 = vsub.s32 0, %v97
    %v99 = vrot.slane %v94, %v98
    %vm101 = vcmask 261120
    %v103 = vsel %vm101, %v74, 0
    %v106 = vsel %vm101, %v75, 0
    %v109 = vsel %vm101, %v76, 0
    %v112 = vsel %vm101, %v77, 0
    %v115 = vsel %vm101, %v78, 0
    %v118 = vsel %vm101, %v79, 0
    %v121 = vsel %vm101, %v80, 0
    %v124 = vsel %vm101, %v81, 0
    %126 = vmatprep.subr.mxu0 0.0
    %127 = vmatpush1.msra.mxu0 0.0
    %128 = vmatprep.subr.mxu0 0.0
    %129 = vmatpush1.msra.mxu0 0.0
    %130 = vmatprep.subr.mxu0 0.0
    %131 = vmatpush1.msra.mxu0 0.0
    %132 = vmatprep.subr.mxu0 0.0
    %133 = vmatpush1.msra.mxu0 0.0
    %134 = vmatprep.subr.mxu0 0.0
    %135 = vmatpush1.msra.mxu0 0.0
    %136 = vmatprep.subr.mxu0 0.0
    %137 = vmatpush1.msra.mxu0 0.0
    %138 = vmatprep.subr.mxu0 0.0
    %139 = vmatpush1.msra.mxu0 0.0
    %140 = vmatprep.subr.mxu0 0.0
    %141 = vmatpush1.msra.mxu0 0.0
    %142 = vmatprep.subr.mxu0 0.0
    %143 = vmatpush1.msra.mxu0 0.0
    %144 = vmatprep.subr.mxu0 0.0
    %145 = vmatpush1.msra.mxu0 0.0
    %146 = vmatprep.subr.mxu0 0.0
    %147 = vmatpush1.msra.mxu0 0.0
    %148 = vmatprep.subr.mxu0 0.0
    %149 = vmatpush1.msra.mxu0 0.0
    %150 = vmatprep.subr.mxu0 0.0
    %151 = vmatpush1.msra.mxu0 %v93
    %152 = vmatprep.subr.mxu0 0.0
    %153 = vmatpush1.msra.mxu0 %v92
    %154 = vmatprep.subr.mxu0 0.0
    %155 = vmatpush1.msra.mxu0 %v91
    %156 = vmatprep.subr.mxu0 0.0
    %157 = vmatpush1.msra.mxu0 %v90
    %158 = vmatprep.subr.mxu0 0.0
    %159 = vmatpush2.msra.mxu0 0.0
    %160 = vmatprep.subr.mxu0 0.0
    %161 = vmatpush2.msra.mxu0 0.0
    %162 = vmatprep.subr.mxu0 0.0
    %163 = vmatpush2.msra.mxu0 0.0
    %164 = vmatprep.subr.mxu0 0.0
    %165 = vmatpush2.msra.mxu0 0.0
    %166 = vmatprep.subr.mxu0 0.0
    %167 = vmatpush2.msra.mxu0 0.0
    %168 = vmatprep.subr.mxu0 0.0
    %169 = vmatpush2.msra.mxu0 0.0
    %170 = vmatprep.subr.mxu0 0.0
    %171 = vmatpush2.msra.mxu0 0.0
    %172 = vmatprep.subr.mxu0 0.0
    %173 = vmatpush2.msra.mxu0 0.0
    %174 = vmatprep.subr.mxu0 0.0
    %175 = vmatpush2.msra.mxu0 0.0
    %176 = vmatprep.subr.mxu0 0.0
    %177 = vmatpush2.msra.mxu0 0.0
    %178 = vmatprep.subr.mxu0 0.0
    %179 = vmatpush2.msra.mxu0 0.0
    %180 = vmatprep.subr.mxu0 0.0
    %181 = vmatpush2.msra.mxu0 0.0
    %182 = vmatprep.subr.mxu0 0.0
    %183 = vmatpush2.msra.mxu0 0.0
    %184 = vmatprep.subr.mxu0 0.0
    %185 = vmatpush2.msra.mxu0 0.0
    %186 = vmatprep.subr.mxu0 0.0
    %187 = vmatpush2.msra.mxu0 0.0
    %188 = vmatprep.subr.mxu0 0.0
    %189 = vmatpush2.msra.mxu0 0.0
    %190 = vmatprep.mubr.f32.mxu0 0.0
    %191 = vmatmul.mubr.f32.gmra.mxu0 %v103
    %v192 = vpop.f32.mrf.mxu0
    %v193 = vadd.f32 %v99, %v192
    %v194 = vpop.f32.mrf.mxu0
    %195 = vmatprep.mubr.f32.mxu0 0.0
    %196 = vmatmul.mubr.f32.gmra.mxu0 %v106
    %v197 = vpop.f32.mrf.mxu0
    %v198 = vadd.f32 %v99, %v197
    %v199 = vpop.f32.mrf.mxu0
    %200 = vmatprep.mubr.f32.mxu0 0.0
    %201 = vmatmul.mubr.f32.gmra.mxu0 %v109
    %v202 = vpop.f32.mrf.mxu0
    %v203 = vadd.f32 %v99, %v202
    %v204 = vpop.f32.mrf.mxu0
    %205 = vmatprep.mubr.f32.mxu0 0.0
    %206 = vmatmul.mubr.f32.gmra.mxu0 %v112
    %v207 = vpop.f32.mrf.mxu0
    %v208 = vadd.f32 %v99, %v207
    %v209 = vpop.f32.mrf.mxu0
    %210 = vmatprep.mubr.f32.mxu0 0.0
    %211 = vmatmul.mubr.f32.gmra.mxu0 %v115
    %v212 = vpop.f32.mrf.mxu0
    %v213 = vadd.f32 %v99, %v212
    %v214 = vpop.f32.mrf.mxu0
    %215 = vmatprep.mubr.f32.mxu0 0.0
    %216 = vmatmul.mubr.f32.gmra.mxu0 %v118
    %v217 = vpop.f32.mrf.mxu0
    %v218 = vadd.f32 %v99, %v217
    %v219 = vpop.f32.mrf.mxu0
    %220 = vmatprep.mubr.f32.mxu0 0.0
    %221 = vmatmul.mubr.f32.gmra.mxu0 %v121
    %v222 = vpop.f32.mrf.mxu0
    %v223 = vadd.f32 %v99, %v222
    %v224 = vpop.f32.mrf.mxu0
    %225 = vmatprep.mubr.f32.mxu0 0.0
    %226 = vmatmul.mubr.f32.gmra.mxu0 %v124
    %v227 = vpop.f32.mrf.mxu0
    %v228 = vadd.f32 %v99, %v227
    %v229 = vpop.f32.mrf.mxu0
    %230 = vdwg.mxu0
    %v231 = vld [vmem:[#allocation7] sm:$0xff]
    %v232 = vld [vmem:[#allocation7 + $0x8] sm:$0xff]
    %v233 = vld [vmem:[#allocation7 + $0x10] sm:$0xff]
    %v234 = vld [vmem:[#allocation7 + $0x18] sm:$0xff]
    %v235 = vld [vmem:[%s5] sm:$0x1]
    %v237 = vlaneseq
    %v238 = vshrl.u32 %v237, 7
    %v239 = vsub.s32 0, %v238
    %v240 = vrot.slane %v235, %v239
    %v243 = vsel %vm101, %v82, 0
    %v246 = vsel %vm101, %v83, 0
    %v249 = vsel %vm101, %v84, 0
    %v252 = vsel %vm101, %v85, 0
    %v255 = vsel %vm101, %v86, 0
    %v258 = vsel %vm101, %v87, 0
    %v261 = vsel %vm101, %v88, 0
    %v264 = vsel %vm101, %v89, 0
    %266 = vmatprep.subr.mxu0 0.0
    %267 = vmatpush1.msra.mxu0 0.0
    %268 = vmatprep.subr.mxu0 0.0
    %269 = vmatpush1.msra.mxu0 0.0
    %270 = vmatprep.subr.mxu0 0.0
    %271 = vmatpush1.msra.mxu0 0.0
    %272 = vmatprep.subr.mxu0 0.0
    %273 = vmatpush1.msra.mxu0 0.0
    %274 = vmatprep.subr.mxu0 0.0
    %275 = vmatpush1.msra.mxu0 0.0
    %276 = vmatprep.subr.mxu0 0.0
    %277 = vmatpush1.msra.mxu0 0.0
    %278 = vmatprep.subr.mxu0 0.0
    %279 = vmatpush1.msra.mxu0 0.0
    %280 = vmatprep.subr.mxu0 0.0
    %281 = vmatpush1.msra.mxu0 0.0
    %282 = vmatprep.subr.mxu0 0.0
    %283 = vmatpush1.msra.mxu0 0.0
    %284 = vmatprep.subr.mxu0 0.0
    %285 = vmatpush1.msra.mxu0 0.0
    %286 = vmatprep.subr.mxu0 0.0
    %287 = vmatpush1.msra.mxu0 0.0
    %288 = vmatprep.subr.mxu0 0.0
    %289 = vmatpush1.msra.mxu0 0.0
    %290 = vmatprep.subr.mxu0 0.0
    %291 = vmatpush1.msra.mxu0 %v234
    %292 = vmatprep.subr.mxu0 0.0
    %293 = vmatpush1.msra.mxu0 %v233
    %294 = vmatprep.subr.mxu0 0.0
    %295 = vmatpush1.msra.mxu0 %v232
    %296 = vmatprep.subr.mxu0 0.0
    %297 = vmatpush1.msra.mxu0 %v231
    %298 = vmatprep.subr.mxu0 0.0
    %299 = vmatpush2.msra.mxu0 0.0
    %300 = vmatprep.subr.mxu0 0.0
    %301 = vmatpush2.msra.mxu0 0.0
    %302 = vmatprep.subr.mxu0 0.0
    %303 = vmatpush2.msra.mxu0 0.0
    %304 = vmatprep.subr.mxu0 0.0
    %305 = vmatpush2.msra.mxu0 0.0
    %306 = vmatprep.subr.mxu0 0.0
    %307 = vmatpush2.msra.mxu0 0.0
    %308 = vmatprep.subr.mxu0 0.0
    %309 = vmatpush2.msra.mxu0 0.0
    %310 = vmatprep.subr.mxu0 0.0
    %311 = vmatpush2.msra.mxu0 0.0
    %312 = vmatprep.subr.mxu0 0.0
    %313 = vmatpush2.msra.mxu0 0.0
    %314 = vmatprep.subr.mxu0 0.0
    %315 = vmatpush2.msra.mxu0 0.0
    %316 = vmatprep.subr.mxu0 0.0
    %317 = vmatpush2.msra.mxu0 0.0
    %318 = vmatprep.subr.mxu0 0.0
    %319 = vmatpush2.msra.mxu0 0.0
    %320 = vmatprep.subr.mxu0 0.0
    %321 = vmatpush2.msra.mxu0 0.0
    %322 = vmatprep.subr.mxu0 0.0
    %323 = vmatpush2.msra.mxu0 0.0
    %324 = vmatprep.subr.mxu0 0.0
    %325 = vmatpush2.msra.mxu0 0.0
    %326 = vmatprep.subr.mxu0 0.0
    %327 = vmatpush2.msra.mxu0 0.0
    %328 = vmatprep.subr.mxu0 0.0
    %329 = vmatpush2.msra.mxu0 0.0
    %330 = vmatprep.mubr.f32.mxu0 0.0
    %331 = vmatmul.mubr.f32.gmra.mxu0 %v243
    %v332 = vpop.f32.mrf.mxu0
    %v333 = vadd.f32 %v240, %v332
    %v334 = vpop.f32.mrf.mxu0
    %335 = vmatprep.mubr.f32.mxu0 0.0
    %336 = vmatmul.mubr.f32.gmra.mxu0 %v246
    %v337 = vpop.f32.mrf.mxu0
    %v338 = vadd.f32 %v240, %v337
    %v339 = vpop.f32.mrf.mxu0
    %340 = vmatprep.mubr.f32.mxu0 0.0
    %341 = vmatmul.mubr.f32.gmra.mxu0 %v249
    %v342 = vpop.f32.mrf.mxu0
    %v343 = vadd.f32 %v240, %v342
    %v344 = vpop.f32.mrf.mxu0
    %345 = vmatprep.mubr.f32.mxu0 0.0
    %346 = vmatmul.mubr.f32.gmra.mxu0 %v252
    %v347 = vpop.f32.mrf.mxu0
    %v348 = vadd.f32 %v240, %v347
    %v349 = vpop.f32.mrf.mxu0
    %350 = vmatprep.mubr.f32.mxu0 0.0
    %351 = vmatmul.mubr.f32.gmra.mxu0 %v255
    %v352 = vpop.f32.mrf.mxu0
    %v353 = vadd.f32 %v240, %v352
    %v354 = vpop.f32.mrf.mxu0
    %355 = vmatprep.mubr.f32.mxu0 0.0
    %356 = vmatmul.mubr.f32.gmra.mxu0 %v258
    %v357 = vpop.f32.mrf.mxu0
    %v358 = vadd.f32 %v240, %v357
    %v359 = vpop.f32.mrf.mxu0
    %360 = vmatprep.mubr.f32.mxu0 0.0
    %361 = vmatmul.mubr.f32.gmra.mxu0 %v261
    %v362 = vpop.f32.mrf.mxu0
    %v363 = vadd.f32 %v240, %v362
    %v364 = vpop.f32.mrf.mxu0
    %365 = vmatprep.mubr.f32.mxu0 0.0
    %366 = vmatmul.mubr.f32.gmra.mxu0 %v264
    %v367 = vpop.f32.mrf.mxu0
    %v368 = vadd.f32 %v240, %v367
    %v369 = vpop.f32.mrf.mxu0
    %370 = vdwg.mxu0
    %vm371 = vcmask 64512
    %v373 = vsel %vm371, %v193, 0
    %v376 = vsel %vm371, %v333, 0
    %378 = vmatprep.subr.mxu0 0.0
    %379 = vmatpush1.xpose.msra.mxu0 0.0
    %380 = vmatprep.subr.mxu0 0.0
    %381 = vmatpush1.xpose.msra.mxu0 0.0
    %382 = vmatprep.subr.mxu0 0.0
    %383 = vmatpush1.xpose.msra.mxu0 0.0
    %384 = vmatprep.subr.mxu0 0.0
    %385 = vmatpush1.xpose.msra.mxu0 0.0
    %386 = vmatprep.subr.mxu0 0.0
    %387 = vmatpush1.xpose.msra.mxu0 0.0
    %388 = vmatprep.subr.mxu0 0.0
    %389 = vmatpush1.xpose.msra.mxu0 0.0
    %390 = vmatprep.subr.mxu0 0.0
    %391 = vmatpush1.xpose.msra.mxu0 0.0
    %392 = vmatprep.subr.mxu0 0.0
    %393 = vmatpush1.xpose.msra.mxu0 0.0
    %394 = vmatprep.subr.mxu0 0.0
    %395 = vmatpush1.xpose.msra.mxu0 0.0
    %396 = vmatprep.subr.mxu0 0.0
    %397 = vmatpush1.xpose.msra.mxu0 0.0
    %398 = vmatprep.subr.mxu0 0.0
    %399 = vmatpush1.xpose.msra.mxu0 0.0
    %400 = vmatprep.subr.mxu0 0.0
    %401 = vmatpush1.xpose.msra.mxu0 0.0
    %402 = vmatprep.subr.mxu0 0.0
    %403 = vmatpush1.xpose.msra.mxu0 0.0
    %404 = vmatprep.subr.mxu0 0.0
    %405 = vmatpush1.xpose.msra.mxu0 0.0
    %406 = vmatprep.subr.mxu0 0.0
    %407 = vmatpush1.xpose.msra.mxu0 0.0
    %408 = vmatprep.subr.mxu0 0.0
    %409 = vmatpush1.xpose.msra.mxu0 %v376
    %410 = vmatprep.subr.mxu0 0.0
    %411 = vmatpush2.xpose.msra.mxu0 0.0
    %412 = vmatprep.subr.mxu0 0.0
    %413 = vmatpush2.xpose.msra.mxu0 0.0
    %414 = vmatprep.subr.mxu0 0.0
    %415 = vmatpush2.xpose.msra.mxu0 0.0
    %416 = vmatprep.subr.mxu0 0.0
    %417 = vmatpush2.xpose.msra.mxu0 0.0
    %418 = vmatprep.subr.mxu0 0.0
    %419 = vmatpush2.xpose.msra.mxu0 0.0
    %420 = vmatprep.subr.mxu0 0.0
    %421 = vmatpush2.xpose.msra.mxu0 0.0
    %422 = vmatprep.subr.mxu0 0.0
    %423 = vmatpush2.xpose.msra.mxu0 0.0
    %424 = vmatprep.subr.mxu0 0.0
    %425 = vmatpush2.xpose.msra.mxu0 0.0
    %426 = vmatprep.subr.mxu0 0.0
    %427 = vmatpush2.xpose.msra.mxu0 0.0
    %428 = vmatprep.subr.mxu0 0.0
    %429 = vmatpush2.xpose.msra.mxu0 0.0
    %430 = vmatprep.subr.mxu0 0.0
    %431 = vmatpush2.xpose.msra.mxu0 0.0
    %432 = vmatprep.subr.mxu0 0.0
    %433 = vmatpush2.xpose.msra.mxu0 0.0
    %434 = vmatprep.subr.mxu0 0.0
    %435 = vmatpush2.xpose.msra.mxu0 0.0
    %436 = vmatprep.subr.mxu0 0.0
    %437 = vmatpush2.xpose.msra.mxu0 0.0
    %438 = vmatprep.subr.mxu0 0.0
    %439 = vmatpush2.xpose.msra.mxu0 0.0
    %440 = vmatprep.subr.mxu0 0.0
    %441 = vmatpush2.xpose.msra.mxu0 0.0
    %442 = vmatprep.mubr.f32.mxu0 0.0
    %443 = vmatmul.mubr.f32.gmra.mxu0 %v373
    %v444 = vpop.f32.mrf.mxu0
    %v445 = vadd.f32 0.0, %v444
    %v446 = vpop.f32.mrf.mxu0
    %447 = vdwg.mxu0
    %v449 = vsel %vm371, %v198, 0
    %v452 = vsel %vm371, %v338, 0
    %454 = vmatprep.subr.mxu0 0.0
    %455 = vmatpush1.xpose.msra.mxu0 0.0
    %456 = vmatprep.subr.mxu0 0.0
    %457 = vmatpush1.xpose.msra.mxu0 0.0
    %458 = vmatprep.subr.mxu0 0.0
    %459 = vmatpush1.xpose.msra.mxu0 0.0
    %460 = vmatprep.subr.mxu0 0.0
    %461 = vmatpush1.xpose.msra.mxu0 0.0
    %462 = vmatprep.subr.mxu0 0.0
    %463 = vmatpush1.xpose.msra.mxu0 0.0
    %464 = vmatprep.subr.mxu0 0.0
    %465 = vmatpush1.xpose.msra.mxu0 0.0
    %466 = vmatprep.subr.mxu0 0.0
    %467 = vmatpush1.xpose.msra.mxu0 0.0
    %468 = vmatprep.subr.mxu0 0.0
    %469 = vmatpush1.xpose.msra.mxu0 0.0
    %470 = vmatprep.subr.mxu0 0.0
    %471 = vmatpush1.xpose.msra.mxu0 0.0
    %472 = vmatprep.subr.mxu0 0.0
    %473 = vmatpush1.xpose.msra.mxu0 0.0
    %474 = vmatprep.subr.mxu0 0.0
    %475 = vmatpush1.xpose.msra.mxu0 0.0
    %476 = vmatprep.subr.mxu0 0.0
    %477 = vmatpush1.xpose.msra.mxu0 0.0
    %478 = vmatprep.subr.mxu0 0.0
    %479 = vmatpush1.xpose.msra.mxu0 0.0
    %480 = vmatprep.subr.mxu0 0.0
    %481 = vmatpush1.xpose.msra.mxu0 0.0
    %482 = vmatprep.subr.mxu0 0.0
    %483 = vmatpush1.xpose.msra.mxu0 0.0
    %484 = vmatprep.subr.mxu0 0.0
    %485 = vmatpush1.xpose.msra.mxu0 %v452
    %486 = vmatprep.subr.mxu0 0.0
    %487 = vmatpush2.xpose.msra.mxu0 0.0
    %488 = vmatprep.subr.mxu0 0.0
    %489 = vmatpush2.xpose.msra.mxu0 0.0
    %490 = vmatprep.subr.mxu0 0.0
    %491 = vmatpush2.xpose.msra.mxu0 0.0
    %492 = vmatprep.subr.mxu0 0.0
    %493 = vmatpush2.xpose.msra.mxu0 0.0
    %494 = vmatprep.subr.mxu0 0.0
    %495 = vmatpush2.xpose.msra.mxu0 0.0
    %496 = vmatprep.subr.mxu0 0.0
    %497 = vmatpush2.xpose.msra.mxu0 0.0
    %498 = vmatprep.subr.mxu0 0.0
    %499 = vmatpush2.xpose.msra.mxu0 0.0
    %500 = vmatprep.subr.mxu0 0.0
    %501 = vmatpush2.xpose.msra.mxu0 0.0
    %502 = vmatprep.subr.mxu0 0.0
    %503 = vmatpush2.xpose.msra.mxu0 0.0
    %504 = vmatprep.subr.mxu0 0.0
    %505 = vmatpush2.xpose.msra.mxu0 0.0
    %506 = vmatprep.subr.mxu0 0.0
    %507 = vmatpush2.xpose.msra.mxu0 0.0
    %508 = vmatprep.subr.mxu0 0.0
    %509 = vmatpush2.xpose.msra.mxu0 0.0
    %510 = vmatprep.subr.mxu0 0.0
    %511 = vmatpush2.xpose.msra.mxu0 0.0
    %512 = vmatprep.subr.mxu0 0.0
    %513 = vmatpush2.xpose.msra.mxu0 0.0
    %514 = vmatprep.subr.mxu0 0.0
    %515 = vmatpush2.xpose.msra.mxu0 0.0
    %516 = vmatprep.subr.mxu0 0.0
    %517 = vmatpush2.xpose.msra.mxu0 0.0
    %518 = vmatprep.mubr.f32.mxu0 0.0
    %519 = vmatmul.mubr.f32.gmra.mxu0 %v449
    %v520 = vpop.f32.mrf.mxu0
    %v521 = vadd.f32 0.0, %v520
    %v522 = vpop.f32.mrf.mxu0
    %523 = vdwg.mxu0
    %v525 = vsel %vm371, %v203, 0
    %v528 = vsel %vm371, %v343, 0
    %530 = vmatprep.subr.mxu0 0.0
    %531 = vmatpush1.xpose.msra.mxu0 0.0
    %532 = vmatprep.subr.mxu0 0.0
    %533 = vmatpush1.xpose.msra.mxu0 0.0
    %534 = vmatprep.subr.mxu0 0.0
    %535 = vmatpush1.xpose.msra.mxu0 0.0
    %536 = vmatprep.subr.mxu0 0.0
    %537 = vmatpush1.xpose.msra.mxu0 0.0
    %538 = vmatprep.subr.mxu0 0.0
    %539 = vmatpush1.xpose.msra.mxu0 0.0
    %540 = vmatprep.subr.mxu0 0.0
    %541 = vmatpush1.xpose.msra.mxu0 0.0
    %542 = vmatprep.subr.mxu0 0.0
    %543 = vmatpush1.xpose.msra.mxu0 0.0
    %544 = vmatprep.subr.mxu0 0.0
    %545 = vmatpush1.xpose.msra.mxu0 0.0
    %546 = vmatprep.subr.mxu0 0.0
    %547 = vmatpush1.xpose.msra.mxu0 0.0
    %548 = vmatprep.subr.mxu0 0.0
    %549 = vmatpush1.xpose.msra.mxu0 0.0
    %550 = vmatprep.subr.mxu0 0.0
    %551 = vmatpush1.xpose.msra.mxu0 0.0
    %552 = vmatprep.subr.mxu0 0.0
    %553 = vmatpush1.xpose.msra.mxu0 0.0
    %554 = vmatprep.subr.mxu0 0.0
    %555 = vmatpush1.xpose.msra.mxu0 0.0
    %556 = vmatprep.subr.mxu0 0.0
    %557 = vmatpush1.xpose.msra.mxu0 0.0
    %558 = vmatprep.subr.mxu0 0.0
    %559 = vmatpush1.xpose.msra.mxu0 0.0
    %560 = vmatprep.subr.mxu0 0.0
    %561 = vmatpush1.xpose.msra.mxu0 %v528
    %562 = vmatprep.subr.mxu0 0.0
    %563 = vmatpush2.xpose.msra.mxu0 0.0
    %564 = vmatprep.subr.mxu0 0.0
    %565 = vmatpush2.xpose.msra.mxu0 0.0
    %566 = vmatprep.subr.mxu0 0.0
    %567 = vmatpush2.xpose.msra.mxu0 0.0
    %568 = vmatprep.subr.mxu0 0.0
    %569 = vmatpush2.xpose.msra.mxu0 0.0
    %570 = vmatprep.subr.mxu0 0.0
    %571 = vmatpush2.xpose.msra.mxu0 0.0
    %572 = vmatprep.subr.mxu0 0.0
    %573 = vmatpush2.xpose.msra.mxu0 0.0
    %574 = vmatprep.subr.mxu0 0.0
    %575 = vmatpush2.xpose.msra.mxu0 0.0
    %576 = vmatprep.subr.mxu0 0.0
    %577 = vmatpush2.xpose.msra.mxu0 0.0
    %578 = vmatprep.subr.mxu0 0.0
    %579 = vmatpush2.xpose.msra.mxu0 0.0
    %580 = vmatprep.subr.mxu0 0.0
    %581 = vmatpush2.xpose.msra.mxu0 0.0
    %582 = vmatprep.subr.mxu0 0.0
    %583 = vmatpush2.xpose.msra.mxu0 0.0
    %584 = vmatprep.subr.mxu0 0.0
    %585 = vmatpush2.xpose.msra.mxu0 0.0
    %586 = vmatprep.subr.mxu0 0.0
    %587 = vmatpush2.xpose.msra.mxu0 0.0
    %588 = vmatprep.subr.mxu0 0.0
    %589 = vmatpush2.xpose.msra.mxu0 0.0
    %590 = vmatprep.subr.mxu0 0.0
    %591 = vmatpush2.xpose.msra.mxu0 0.0
    %592 = vmatprep.subr.mxu0 0.0
    %593 = vmatpush2.xpose.msra.mxu0 0.0
    %594 = vmatprep.mubr.f32.mxu0 0.0
    %595 = vmatmul.mubr.f32.gmra.mxu0 %v525
    %v596 = vpop.f32.mrf.mxu0
    %v597 = vadd.f32 0.0, %v596
    %v598 = vpop.f32.mrf.mxu0
    %599 = vdwg.mxu0
    %v601 = vsel %vm371, %v208, 0
    %v604 = vsel %vm371, %v348, 0
    %606 = vmatprep.subr.mxu0 0.0
    %607 = vmatpush1.xpose.msra.mxu0 0.0
    %608 = vmatprep.subr.mxu0 0.0
    %609 = vmatpush1.xpose.msra.mxu0 0.0
    %610 = vmatprep.subr.mxu0 0.0
    %611 = vmatpush1.xpose.msra.mxu0 0.0
    %612 = vmatprep.subr.mxu0 0.0
    %613 = vmatpush1.xpose.msra.mxu0 0.0
    %614 = vmatprep.subr.mxu0 0.0
    %615 = vmatpush1.xpose.msra.mxu0 0.0
    %616 = vmatprep.subr.mxu0 0.0
    %617 = vmatpush1.xpose.msra.mxu0 0.0
    %618 = vmatprep.subr.mxu0 0.0
    %619 = vmatpush1.xpose.msra.mxu0 0.0
    %620 = vmatprep.subr.mxu0 0.0
    %621 = vmatpush1.xpose.msra.mxu0 0.0
    %622 = vmatprep.subr.mxu0 0.0
    %623 = vmatpush1.xpose.msra.mxu0 0.0
    %624 = vmatprep.subr.mxu0 0.0
    %625 = vmatpush1.xpose.msra.mxu0 0.0
    %626 = vmatprep.subr.mxu0 0.0
    %627 = vmatpush1.xpose.msra.mxu0 0.0
    %628 = vmatprep.subr.mxu0 0.0
    %629 = vmatpush1.xpose.msra.mxu0 0.0
    %630 = vmatprep.subr.mxu0 0.0
    %631 = vmatpush1.xpose.msra.mxu0 0.0
    %632 = vmatprep.subr.mxu0 0.0
    %633 = vmatpush1.xpose.msra.mxu0 0.0
    %634 = vmatprep.subr.mxu0 0.0
    %635 = vmatpush1.xpose.msra.mxu0 0.0
    %636 = vmatprep.subr.mxu0 0.0
    %637 = vmatpush1.xpose.msra.mxu0 %v604
    %638 = vmatprep.subr.mxu0 0.0
    %639 = vmatpush2.xpose.msra.mxu0 0.0
    %640 = vmatprep.subr.mxu0 0.0
    %641 = vmatpush2.xpose.msra.mxu0 0.0
    %642 = vmatprep.subr.mxu0 0.0
    %643 = vmatpush2.xpose.msra.mxu0 0.0
    %644 = vmatprep.subr.mxu0 0.0
    %645 = vmatpush2.xpose.msra.mxu0 0.0
    %646 = vmatprep.subr.mxu0 0.0
    %647 = vmatpush2.xpose.msra.mxu0 0.0
    %648 = vmatprep.subr.mxu0 0.0
    %649 = vmatpush2.xpose.msra.mxu0 0.0
    %650 = vmatprep.subr.mxu0 0.0
    %651 = vmatpush2.xpose.msra.mxu0 0.0
    %652 = vmatprep.subr.mxu0 0.0
    %653 = vmatpush2.xpose.msra.mxu0 0.0
    %654 = vmatprep.subr.mxu0 0.0
    %655 = vmatpush2.xpose.msra.mxu0 0.0
    %656 = vmatprep.subr.mxu0 0.0
    %657 = vmatpush2.xpose.msra.mxu0 0.0
    %658 = vmatprep.subr.mxu0 0.0
    %659 = vmatpush2.xpose.msra.mxu0 0.0
    %660 = vmatprep.subr.mxu0 0.0
    %661 = vmatpush2.xpose.msra.mxu0 0.0
    %662 = vmatprep.subr.mxu0 0.0
    %663 = vmatpush2.xpose.msra.mxu0 0.0
    %664 = vmatprep.subr.mxu0 0.0
    %665 = vmatpush2.xpose.msra.mxu0 0.0
    %666 = vmatprep.subr.mxu0 0.0
    %667 = vmatpush2.xpose.msra.mxu0 0.0
    %668 = vmatprep.subr.mxu0 0.0
    %669 = vmatpush2.xpose.msra.mxu0 0.0
    %670 = vmatprep.mubr.f32.mxu0 0.0
    %671 = vmatmul.mubr.f32.gmra.mxu0 %v601
    %v672 = vpop.f32.mrf.mxu0
    %v673 = vadd.f32 0.0, %v672
    %v674 = vpop.f32.mrf.mxu0
    %675 = vdwg.mxu0
    %v677 = vsel %vm371, %v213, 0
    %v680 = vsel %vm371, %v353, 0
    %682 = vmatprep.subr.mxu0 0.0
    %683 = vmatpush1.xpose.msra.mxu0 0.0
    %684 = vmatprep.subr.mxu0 0.0
    %685 = vmatpush1.xpose.msra.mxu0 0.0
    %686 = vmatprep.subr.mxu0 0.0
    %687 = vmatpush1.xpose.msra.mxu0 0.0
    %688 = vmatprep.subr.mxu0 0.0
    %689 = vmatpush1.xpose.msra.mxu0 0.0
    %690 = vmatprep.subr.mxu0 0.0
    %691 = vmatpush1.xpose.msra.mxu0 0.0
    %692 = vmatprep.subr.mxu0 0.0
    %693 = vmatpush1.xpose.msra.mxu0 0.0
    %694 = vmatprep.subr.mxu0 0.0
    %695 = vmatpush1.xpose.msra.mxu0 0.0
    %696 = vmatprep.subr.mxu0 0.0
    %697 = vmatpush1.xpose.msra.mxu0 0.0
    %698 = vmatprep.subr.mxu0 0.0
    %699 = vmatpush1.xpose.msra.mxu0 0.0
    %700 = vmatprep.subr.mxu0 0.0
    %701 = vmatpush1.xpose.msra.mxu0 0.0
    %702 = vmatprep.subr.mxu0 0.0
    %703 = vmatpush1.xpose.msra.mxu0 0.0
    %704 = vmatprep.subr.mxu0 0.0
    %705 = vmatpush1.xpose.msra.mxu0 0.0
    %706 = vmatprep.subr.mxu0 0.0
    %707 = vmatpush1.xpose.msra.mxu0 0.0
    %708 = vmatprep.subr.mxu0 0.0
    %709 = vmatpush1.xpose.msra.mxu0 0.0
    %710 = vmatprep.subr.mxu0 0.0
    %711 = vmatpush1.xpose.msra.mxu0 0.0
    %712 = vmatprep.subr.mxu0 0.0
    %713 = vmatpush1.xpose.msra.mxu0 %v680
    %714 = vmatprep.subr.mxu0 0.0
    %715 = vmatpush2.xpose.msra.mxu0 0.0
    %716 = vmatprep.subr.mxu0 0.0
    %717 = vmatpush2.xpose.msra.mxu0 0.0
    %718 = vmatprep.subr.mxu0 0.0
    %719 = vmatpush2.xpose.msra.mxu0 0.0
    %720 = vmatprep.subr.mxu0 0.0
    %721 = vmatpush2.xpose.msra.mxu0 0.0
    %722 = vmatprep.subr.mxu0 0.0
    %723 = vmatpush2.xpose.msra.mxu0 0.0
    %724 = vmatprep.subr.mxu0 0.0
    %725 = vmatpush2.xpose.msra.mxu0 0.0
    %726 = vmatprep.subr.mxu0 0.0
    %727 = vmatpush2.xpose.msra.mxu0 0.0
    %728 = vmatprep.subr.mxu0 0.0
    %729 = vmatpush2.xpose.msra.mxu0 0.0
    %730 = vmatprep.subr.mxu0 0.0
    %731 = vmatpush2.xpose.msra.mxu0 0.0
    %732 = vmatprep.subr.mxu0 0.0
    %733 = vmatpush2.xpose.msra.mxu0 0.0
    %734 = vmatprep.subr.mxu0 0.0
    %735 = vmatpush2.xpose.msra.mxu0 0.0
    %736 = vmatprep.subr.mxu0 0.0
    %737 = vmatpush2.xpose.msra.mxu0 0.0
    %738 = vmatprep.subr.mxu0 0.0
    %739 = vmatpush2.xpose.msra.mxu0 0.0
    %740 = vmatprep.subr.mxu0 0.0
    %741 = vmatpush2.xpose.msra.mxu0 0.0
    %742 = vmatprep.subr.mxu0 0.0
    %743 = vmatpush2.xpose.msra.mxu0 0.0
    %744 = vmatprep.subr.mxu0 0.0
    %745 = vmatpush2.xpose.msra.mxu0 0.0
    %746 = vmatprep.mubr.f32.mxu0 0.0
    %747 = vmatmul.mubr.f32.gmra.mxu0 %v677
    %v748 = vpop.f32.mrf.mxu0
    %v749 = vadd.f32 0.0, %v748
    %v750 = vpop.f32.mrf.mxu0
    %751 = vdwg.mxu0
    %v753 = vsel %vm371, %v218, 0
    %v756 = vsel %vm371, %v358, 0
    %758 = vmatprep.subr.mxu0 0.0
    %759 = vmatpush1.xpose.msra.mxu0 0.0
    %760 = vmatprep.subr.mxu0 0.0
    %761 = vmatpush1.xpose.msra.mxu0 0.0
    %762 = vmatprep.subr.mxu0 0.0
    %763 = vmatpush1.xpose.msra.mxu0 0.0
    %764 = vmatprep.subr.mxu0 0.0
    %765 = vmatpush1.xpose.msra.mxu0 0.0
    %766 = vmatprep.subr.mxu0 0.0
    %767 = vmatpush1.xpose.msra.mxu0 0.0
    %768 = vmatprep.subr.mxu0 0.0
    %769 = vmatpush1.xpose.msra.mxu0 0.0
    %770 = vmatprep.subr.mxu0 0.0
    %771 = vmatpush1.xpose.msra.mxu0 0.0
    %772 = vmatprep.subr.mxu0 0.0
    %773 = vmatpush1.xpose.msra.mxu0 0.0
    %774 = vmatprep.subr.mxu0 0.0
    %775 = vmatpush1.xpose.msra.mxu0 0.0
    %776 = vmatprep.subr.mxu0 0.0
    %777 = vmatpush1.xpose.msra.mxu0 0.0
    %778 = vmatprep.subr.mxu0 0.0
    %779 = vmatpush1.xpose.msra.mxu0 0.0
    %780 = vmatprep.subr.mxu0 0.0
    %781 = vmatpush1.xpose.msra.mxu0 0.0
    %782 = vmatprep.subr.mxu0 0.0
    %783 = vmatpush1.xpose.msra.mxu0 0.0
    %784 = vmatprep.subr.mxu0 0.0
    %785 = vmatpush1.xpose.msra.mxu0 0.0
    %786 = vmatprep.subr.mxu0 0.0
    %787 = vmatpush1.xpose.msra.mxu0 0.0
    %788 = vmatprep.subr.mxu0 0.0
    %789 = vmatpush1.xpose.msra.mxu0 %v756
    %790 = vmatprep.subr.mxu0 0.0
    %791 = vmatpush2.xpose.msra.mxu0 0.0
    %792 = vmatprep.subr.mxu0 0.0
    %793 = vmatpush2.xpose.msra.mxu0 0.0
    %794 = vmatprep.subr.mxu0 0.0
    %795 = vmatpush2.xpose.msra.mxu0 0.0
    %796 = vmatprep.subr.mxu0 0.0
    %797 = vmatpush2.xpose.msra.mxu0 0.0
    %798 = vmatprep.subr.mxu0 0.0
    %799 = vmatpush2.xpose.msra.mxu0 0.0
    %800 = vmatprep.subr.mxu0 0.0
    %801 = vmatpush2.xpose.msra.mxu0 0.0
    %802 = vmatprep.subr.mxu0 0.0
    %803 = vmatpush2.xpose.msra.mxu0 0.0
    %804 = vmatprep.subr.mxu0 0.0
    %805 = vmatpush2.xpose.msra.mxu0 0.0
    %806 = vmatprep.subr.mxu0 0.0
    %807 = vmatpush2.xpose.msra.mxu0 0.0
    %808 = vmatprep.subr.mxu0 0.0
    %809 = vmatpush2.xpose.msra.mxu0 0.0
    %810 = vmatprep.subr.mxu0 0.0
    %811 = vmatpush2.xpose.msra.mxu0 0.0
    %812 = vmatprep.subr.mxu0 0.0
    %813 = vmatpush2.xpose.msra.mxu0 0.0
    %814 = vmatprep.subr.mxu0 0.0
    %815 = vmatpush2.xpose.msra.mxu0 0.0
    %816 = vmatprep.subr.mxu0 0.0
    %817 = vmatpush2.xpose.msra.mxu0 0.0
    %818 = vmatprep.subr.mxu0 0.0
    %819 = vmatpush2.xpose.msra.mxu0 0.0
    %820 = vmatprep.subr.mxu0 0.0
    %821 = vmatpush2.xpose.msra.mxu0 0.0
    %822 = vmatprep.mubr.f32.mxu0 0.0
    %823 = vmatmul.mubr.f32.gmra.mxu0 %v753
    %v824 = vpop.f32.mrf.mxu0
    %v825 = vadd.f32 0.0, %v824
    %v826 = vpop.f32.mrf.mxu0
    %827 = vdwg.mxu0
    %v829 = vsel %vm371, %v223, 0
    %v832 = vsel %vm371, %v363, 0
    %834 = vmatprep.subr.mxu0 0.0
    %835 = vmatpush1.xpose.msra.mxu0 0.0
    %836 = vmatprep.subr.mxu0 0.0
    %837 = vmatpush1.xpose.msra.mxu0 0.0
    %838 = vmatprep.subr.mxu0 0.0
    %839 = vmatpush1.xpose.msra.mxu0 0.0
    %840 = vmatprep.subr.mxu0 0.0
    %841 = vmatpush1.xpose.msra.mxu0 0.0
    %842 = vmatprep.subr.mxu0 0.0
    %843 = vmatpush1.xpose.msra.mxu0 0.0
    %844 = vmatprep.subr.mxu0 0.0
    %845 = vmatpush1.xpose.msra.mxu0 0.0
    %846 = vmatprep.subr.mxu0 0.0
    %847 = vmatpush1.xpose.msra.mxu0 0.0
    %848 = vmatprep.subr.mxu0 0.0
    %849 = vmatpush1.xpose.msra.mxu0 0.0
    %850 = vmatprep.subr.mxu0 0.0
    %851 = vmatpush1.xpose.msra.mxu0 0.0
    %852 = vmatprep.subr.mxu0 0.0
    %853 = vmatpush1.xpose.msra.mxu0 0.0
    %854 = vmatprep.subr.mxu0 0.0
    %855 = vmatpush1.xpose.msra.mxu0 0.0
    %856 = vmatprep.subr.mxu0 0.0
    %857 = vmatpush1.xpose.msra.mxu0 0.0
    %858 = vmatprep.subr.mxu0 0.0
    %859 = vmatpush1.xpose.msra.mxu0 0.0
    %860 = vmatprep.subr.mxu0 0.0
    %861 = vmatpush1.xpose.msra.mxu0 0.0
    %862 = vmatprep.subr.mxu0 0.0
    %863 = vmatpush1.xpose.msra.mxu0 0.0
    %864 = vmatprep.subr.mxu0 0.0
    %865 = vmatpush1.xpose.msra.mxu0 %v832
    %866 = vmatprep.subr.mxu0 0.0
    %867 = vmatpush2.xpose.msra.mxu0 0.0
    %868 = vmatprep.subr.mxu0 0.0
    %869 = vmatpush2.xpose.msra.mxu0 0.0
    %870 = vmatprep.subr.mxu0 0.0
    %871 = vmatpush2.xpose.msra.mxu0 0.0
    %872 = vmatprep.subr.mxu0 0.0
    %873 = vmatpush2.xpose.msra.mxu0 0.0
    %874 = vmatprep.subr.mxu0 0.0
    %875 = vmatpush2.xpose.msra.mxu0 0.0
    %876 = vmatprep.subr.mxu0 0.0
    %877 = vmatpush2.xpose.msra.mxu0 0.0
    %878 = vmatprep.subr.mxu0 0.0
    %879 = vmatpush2.xpose.msra.mxu0 0.0
    %880 = vmatprep.subr.mxu0 0.0
    %881 = vmatpush2.xpose.msra.mxu0 0.0
    %882 = vmatprep.subr.mxu0 0.0
    %883 = vmatpush2.xpose.msra.mxu0 0.0
    %884 = vmatprep.subr.mxu0 0.0
    %885 = vmatpush2.xpose.msra.mxu0 0.0
    %886 = vmatprep.subr.mxu0 0.0
    %887 = vmatpush2.xpose.msra.mxu0 0.0
    %888 = vmatprep.subr.mxu0 0.0
    %889 = vmatpush2.xpose.msra.mxu0 0.0
    %890 = vmatprep.subr.mxu0 0.0
    %891 = vmatpush2.xpose.msra.mxu0 0.0
    %892 = vmatprep.subr.mxu0 0.0
    %893 = vmatpush2.xpose.msra.mxu0 0.0
    %894 = vmatprep.subr.mxu0 0.0
    %895 = vmatpush2.xpose.msra.mxu0 0.0
    %896 = vmatprep.subr.mxu0 0.0
    %897 = vmatpush2.xpose.msra.mxu0 0.0
    %898 = vmatprep.mubr.f32.mxu0 0.0
    %899 = vmatmul.mubr.f32.gmra.mxu0 %v829
    %v900 = vpop.f32.mrf.mxu0
    %v901 = vadd.f32 0.0, %v900
    %v902 = vpop.f32.mrf.mxu0
    %903 = vdwg.mxu0
    %v905 = vsel %vm371, %v228, 0
    %v908 = vsel %vm371, %v368, 0
    %910 = vmatprep.subr.mxu0 0.0
    %911 = vmatpush1.xpose.msra.mxu0 0.0
    %912 = vmatprep.subr.mxu0 0.0
    %913 = vmatpush1.xpose.msra.mxu0 0.0
    %914 = vmatprep.subr.mxu0 0.0
    %915 = vmatpush1.xpose.msra.mxu0 0.0
    %916 = vmatprep.subr.mxu0 0.0
    %917 = vmatpush1.xpose.msra.mxu0 0.0
    %918 = vmatprep.subr.mxu0 0.0
    %919 = vmatpush1.xpose.msra.mxu0 0.0
    %920 = vmatprep.subr.mxu0 0.0
    %921 = vmatpush1.xpose.msra.mxu0 0.0
    %922 = vmatprep.subr.mxu0 0.0
    %923 = vmatpush1.xpose.msra.mxu0 0.0
    %924 = vmatprep.subr.mxu0 0.0
    %925 = vmatpush1.xpose.msra.mxu0 0.0
    %926 = vmatprep.subr.mxu0 0.0
    %927 = vmatpush1.xpose.msra.mxu0 0.0
    %928 = vmatprep.subr.mxu0 0.0
    %929 = vmatpush1.xpose.msra.mxu0 0.0
    %930 = vmatprep.subr.mxu0 0.0
    %931 = vmatpush1.xpose.msra.mxu0 0.0
    %932 = vmatprep.subr.mxu0 0.0
    %933 = vmatpush1.xpose.msra.mxu0 0.0
    %934 = vmatprep.subr.mxu0 0.0
    %935 = vmatpush1.xpose.msra.mxu0 0.0
    %936 = vmatprep.subr.mxu0 0.0
    %937 = vmatpush1.xpose.msra.mxu0 0.0
    %938 = vmatprep.subr.mxu0 0.0
    %939 = vmatpush1.xpose.msra.mxu0 0.0
    %940 = vmatprep.subr.mxu0 0.0
    %941 = vmatpush1.xpose.msra.mxu0 %v908
    %942 = vmatprep.subr.mxu0 0.0
    %943 = vmatpush2.xpose.msra.mxu0 0.0
    %944 = vmatprep.subr.mxu0 0.0
    %945 = vmatpush2.xpose.msra.mxu0 0.0
    %946 = vmatprep.subr.mxu0 0.0
    %947 = vmatpush2.xpose.msra.mxu0 0.0
    %948 = vmatprep.subr.mxu0 0.0
    %949 = vmatpush2.xpose.msra.mxu0 0.0
    %950 = vmatprep.subr.mxu0 0.0
    %951 = vmatpush2.xpose.msra.mxu0 0.0
    %952 = vmatprep.subr.mxu0 0.0
    %953 = vmatpush2.xpose.msra.mxu0 0.0
    %954 = vmatprep.subr.mxu0 0.0
    %955 = vmatpush2.xpose.msra.mxu0 0.0
    %956 = vmatprep.subr.mxu0 0.0
    %957 = vmatpush2.xpose.msra.mxu0 0.0
    %958 = vmatprep.subr.mxu0 0.0
    %959 = vmatpush2.xpose.msra.mxu0 0.0
    %960 = vmatprep.subr.mxu0 0.0
    %961 = vmatpush2.xpose.msra.mxu0 0.0
    %962 = vmatprep.subr.mxu0 0.0
    %963 = vmatpush2.xpose.msra.mxu0 0.0
    %964 = vmatprep.subr.mxu0 0.0
    %965 = vmatpush2.xpose.msra.mxu0 0.0
    %966 = vmatprep.subr.mxu0 0.0
    %967 = vmatpush2.xpose.msra.mxu0 0.0
    %968 = vmatprep.subr.mxu0 0.0
    %969 = vmatpush2.xpose.msra.mxu0 0.0
    %970 = vmatprep.subr.mxu0 0.0
    %971 = vmatpush2.xpose.msra.mxu0 0.0
    %972 = vmatprep.subr.mxu0 0.0
    %973 = vmatpush2.xpose.msra.mxu0 0.0
    %974 = vmatprep.mubr.f32.mxu0 0.0
    %975 = vmatmul.mubr.f32.gmra.mxu0 %v905
    %v976 = vpop.f32.mrf.mxu0
    %v977 = vadd.f32 0.0, %v976
    %v978 = vpop.f32.mrf.mxu0
    %979 = vdwg.mxu0
    %v980 = vmul.f32 %v445, 0.35355338
    %v981 = vmul.f32 %v521, 0.35355338
    %v982 = vmul.f32 %v597, 0.35355338
    %v983 = vmul.f32 %v673, 0.35355338
    %v984 = vmul.f32 %v749, 0.35355338
    %v985 = vmul.f32 %v825, 0.35355338
    %v986 = vmul.f32 %v901, 0.35355338
    %v987 = vmul.f32 %v977, 0.35355338
    %v988 = vsel %vm371, %v980, -inf
    %989 = vmax.xlane.f32.xlu0 %v988
    %v990 = vpop.xlane.xlu0 %989
    %v991 = vsel %vm371, %v981, -inf
    %992 = vmax.xlane.f32.xlu0 %v991
    %v993 = vpop.xlane.xlu0 %992
    %v994 = vsel %vm371, %v982, -inf
    %995 = vmax.xlane.f32.xlu0 %v994
    %v996 = vpop.xlane.xlu0 %995
    %v997 = vsel %vm371, %v983, -inf
    %998 = vmax.xlane.f32.xlu0 %v997
    %v999 = vpop.xlane.xlu0 %998
    %v1000 = vsel %vm371, %v984, -inf
    %1001 = vmax.xlane.f32.xlu0 %v1000
    %v1002 = vpop.xlane.xlu0 %1001
    %v1003 = vsel %vm371, %v985, -inf
    %1004 = vmax.xlane.f32.xlu0 %v1003
    %v1005 = vpop.xlane.xlu0 %1004
    %v1006 = vsel %vm371, %v986, -inf
    %1007 = vmax.xlane.f32.xlu0 %v1006
    %v1008 = vpop.xlane.xlu0 %1007
    %v1009 = vsel %vm371, %v987, -inf
    %1010 = vmax.xlane.f32.xlu0 %v1009
    %v1011 = vpop.xlane.xlu0 %1010
    %v1012 = vsub.f32 %v980, %v990
    %v1013 = vsub.f32 %v981, %v993
    %v1014 = vsub.f32 %v982, %v996
    %v1015 = vsub.f32 %v983, %v999
    %v1016 = vsub.f32 %v984, %v1002
    %v1017 = vsub.f32 %v985, %v1005
    %v1018 = vsub.f32 %v986, %v1008
    %v1019 = vsub.f32 %v987, %v1011
    %v1020 = vmul.f32 %v1012, 1.442695
    %v1021 = vpow.pop %v1020
    %v1022 = vmul.f32 %v1013, 1.442695
    %v1023 = vpow.pop %v1022
    %v1024 = vmul.f32 %v1014, 1.442695
    %v1025 = vpow.pop %v1024
    %v1026 = vmul.f32 %v1015, 1.442695
    %v1027 = vpow.pop %v1026
    %v1028 = vmul.f32 %v1016, 1.442695
    %v1029 = vpow.pop %v1028
    %v1030 = vmul.f32 %v1017, 1.442695
    %v1031 = vpow.pop %v1030
    %v1032 = vmul.f32 %v1018, 1.442695
    %v1033 = vpow.pop %v1032
    %v1034 = vmul.f32 %v1019, 1.442695
    %v1035 = vpow.pop %v1034
    %v1036 = vsel %vm371, %v1021, 0.0
    %1037 = vadd.xlane.f32.xlu0 %v1036
    %v1038 = vpop.xlane.xlu0 %1037
    %v1039 = vsel %vm371, %v1023, 0.0
    %1040 = vadd.xlane.f32.xlu0 %v1039
    %v1041 = vpop.xlane.xlu0 %1040
    %v1042 = vsel %vm371, %v1025, 0.0
    %1043 = vadd.xlane.f32.xlu0 %v1042
    %v1044 = vpop.xlane.xlu0 %1043
    %v1045 = vsel %vm371, %v1027, 0.0
    %1046 = vadd.xlane.f32.xlu0 %v1045
    %v1047 = vpop.xlane.xlu0 %1046
    %v1048 = vsel %vm371, %v1029, 0.0
    %1049 = vadd.xlane.f32.xlu0 %v1048
    %v1050 = vpop.xlane.xlu0 %1049
    %v1051 = vsel %vm371, %v1031, 0.0
    %1052 = vadd.xlane.f32.xlu0 %v1051
    %v1053 = vpop.xlane.xlu0 %1052
    %v1054 = vsel %vm371, %v1033, 0.0
    %1055 = vadd.xlane.f32.xlu0 %v1054
    %v1056 = vpop.xlane.xlu0 %1055
    %v1057 = vsel %vm371, %v1035, 0.0
    %1058 = vadd.xlane.f32.xlu0 %v1057
    %v1059 = vpop.xlane.xlu0 %1058
    %v1060 = vrcp.pop %v1038
    %v1061 = vmul.f32 %v1021, %v1060
    %v1062 = vrcp.pop %v1041
    %v1063 = vmul.f32 %v1023, %v1062
    %v1064 = vrcp.pop %v1044
    %v1065 = vmul.f32 %v1025, %v1064
    %v1066 = vrcp.pop %v1047
    %v1067 = vmul.f32 %v1027, %v1066
    %v1068 = vrcp.pop %v1050
    %v1069 = vmul.f32 %v1029, %v1068
    %v1070 = vrcp.pop %v1053
    %v1071 = vmul.f32 %v1031, %v1070
    %v1072 = vrcp.pop %v1056
    %v1073 = vmul.f32 %v1033, %v1072
    %v1074 = vrcp.pop %v1059
    %v1075 = vmul.f32 %v1035, %v1074
    %1076 = vrot.lane.b32.xlu0 %v333, 96
    %v1077 = vpop.permute.xlu0 %1076
    %v1080 = vsel %vm371, %v1061, 0
    %1082 = vmatprep.subr.mxu0 0.0
    %1083 = vmatpush1.msra.mxu0 0.0
    %1084 = vmatprep.subr.mxu0 0.0
    %1085 = vmatpush1.msra.mxu0 0.0
    %1086 = vmatprep.subr.mxu0 0.0
    %1087 = vmatpush1.msra.mxu0 0.0
    %1088 = vmatprep.subr.mxu0 0.0
    %1089 = vmatpush1.msra.mxu0 0.0
    %1090 = vmatprep.subr.mxu0 0.0
    %1091 = vmatpush1.msra.mxu0 0.0
    %1092 = vmatprep.subr.mxu0 0.0
    %1093 = vmatpush1.msra.mxu0 0.0
    %1094 = vmatprep.subr.mxu0 0.0
    %1095 = vmatpush1.msra.mxu0 0.0
    %1096 = vmatprep.subr.mxu0 0.0
    %1097 = vmatpush1.msra.mxu0 0.0
    %1098 = vmatprep.subr.mxu0 0.0
    %1099 = vmatpush1.msra.mxu0 0.0
    %1100 = vmatprep.subr.mxu0 0.0
    %1101 = vmatpush1.msra.mxu0 0.0
    %1102 = vmatprep.subr.mxu0 0.0
    %1103 = vmatpush1.msra.mxu0 0.0
    %1104 = vmatprep.subr.mxu0 0.0
    %1105 = vmatpush1.msra.mxu0 0.0
    %1106 = vmatprep.subr.mxu0 0.0
    %1107 = vmatpush1.msra.mxu0 0.0
    %1108 = vmatprep.subr.mxu0 0.0
    %1109 = vmatpush1.msra.mxu0 0.0
    %1110 = vmatprep.subr.mxu0 0.0
    %1111 = vmatpush1.msra.mxu0 0.0
    %1112 = vmatprep.subr.mxu0 0.0
    %1113 = vmatpush1.msra.mxu0 %v1077
    %1114 = vmatprep.subr.mxu0 0.0
    %1115 = vmatpush2.msra.mxu0 0.0
    %1116 = vmatprep.subr.mxu0 0.0
    %1117 = vmatpush2.msra.mxu0 0.0
    %1118 = vmatprep.subr.mxu0 0.0
    %1119 = vmatpush2.msra.mxu0 0.0
    %1120 = vmatprep.subr.mxu0 0.0
    %1121 = vmatpush2.msra.mxu0 0.0
    %1122 = vmatprep.subr.mxu0 0.0
    %1123 = vmatpush2.msra.mxu0 0.0
    %1124 = vmatprep.subr.mxu0 0.0
    %1125 = vmatpush2.msra.mxu0 0.0
    %1126 = vmatprep.subr.mxu0 0.0
    %1127 = vmatpush2.msra.mxu0 0.0
    %1128 = vmatprep.subr.mxu0 0.0
    %1129 = vmatpush2.msra.mxu0 0.0
    %1130 = vmatprep.subr.mxu0 0.0
    %1131 = vmatpush2.msra.mxu0 0.0
    %1132 = vmatprep.subr.mxu0 0.0
    %1133 = vmatpush2.msra.mxu0 0.0
    %1134 = vmatprep.subr.mxu0 0.0
    %1135 = vmatpush2.msra.mxu0 0.0
    %1136 = vmatprep.subr.mxu0 0.0
    %1137 = vmatpush2.msra.mxu0 0.0
    %1138 = vmatprep.subr.mxu0 0.0
    %1139 = vmatpush2.msra.mxu0 0.0
    %1140 = vmatprep.subr.mxu0 0.0
    %1141 = vmatpush2.msra.mxu0 0.0
    %1142 = vmatprep.subr.mxu0 0.0
    %1143 = vmatpush2.msra.mxu0 0.0
    %1144 = vmatprep.subr.mxu0 0.0
    %1145 = vmatpush2.msra.mxu0 0.0
    %1146 = vmatprep.mubr.f32.mxu0 0.0
    %1147 = vmatmul.mubr.f32.gmra.mxu0 %v1080
    %v1148 = vpop.f32.mrf.mxu0
    %v1149 = vadd.f32 0.0, %v1148
    %v1150 = vpop.f32.mrf.mxu0
    %1151 = vdwg.mxu0
    %1152 = vrot.lane.b32.xlu0 %v338, 96
    %v1153 = vpop.permute.xlu0 %1152
    %v1156 = vsel %vm371, %v1063, 0
    %1158 = vmatprep.subr.mxu0 0.0
    %1159 = vmatpush1.msra.mxu0 0.0
    %1160 = vmatprep.subr.mxu0 0.0
    %1161 = vmatpush1.msra.mxu0 0.0
    %1162 = vmatprep.subr.mxu0 0.0
    %1163 = vmatpush1.msra.mxu0 0.0
    %1164 = vmatprep.subr.mxu0 0.0
    %1165 = vmatpush1.msra.mxu0 0.0
    %1166 = vmatprep.subr.mxu0 0.0
    %1167 = vmatpush1.msra.mxu0 0.0
    %1168 = vmatprep.subr.mxu0 0.0
    %1169 = vmatpush1.msra.mxu0 0.0
    %1170 = vmatprep.subr.mxu0 0.0
    %1171 = vmatpush1.msra.mxu0 0.0
    %1172 = vmatprep.subr.mxu0 0.0
    %1173 = vmatpush1.msra.mxu0 0.0
    %1174 = vmatprep.subr.mxu0 0.0
    %1175 = vmatpush1.msra.mxu0 0.0
    %1176 = vmatprep.subr.mxu0 0.0
    %1177 = vmatpush1.msra.mxu0 0.0
    %1178 = vmatprep.subr.mxu0 0.0
    %1179 = vmatpush1.msra.mxu0 0.0
    %1180 = vmatprep.subr.mxu0 0.0
    %1181 = vmatpush1.msra.mxu0 0.0
    %1182 = vmatprep.subr.mxu0 0.0
    %1183 = vmatpush1.msra.mxu0 0.0
    %1184 = vmatprep.subr.mxu0 0.0
    %1185 = vmatpush1.msra.mxu0 0.0
    %1186 = vmatprep.subr.mxu0 0.0
    %1187 = vmatpush1.msra.mxu0 0.0
    %1188 = vmatprep.subr.mxu0 0.0
    %1189 = vmatpush1.msra.mxu0 %v1153
    %1190 = vmatprep.subr.mxu0 0.0
    %1191 = vmatpush2.msra.mxu0 0.0
    %1192 = vmatprep.subr.mxu0 0.0
    %1193 = vmatpush2.msra.mxu0 0.0
    %1194 = vmatprep.subr.mxu0 0.0
    %1195 = vmatpush2.msra.mxu0 0.0
    %1196 = vmatprep.subr.mxu0 0.0
    %1197 = vmatpush2.msra.mxu0 0.0
    %1198 = vmatprep.subr.mxu0 0.0
    %1199 = vmatpush2.msra.mxu0 0.0
    %1200 = vmatprep.subr.mxu0 0.0
    %1201 = vmatpush2.msra.mxu0 0.0
    %1202 = vmatprep.subr.mxu0 0.0
    %1203 = vmatpush2.msra.mxu0 0.0
    %1204 = vmatprep.subr.mxu0 0.0
    %1205 = vmatpush2.msra.mxu0 0.0
    %1206 = vmatprep.subr.mxu0 0.0
    %1207 = vmatpush2.msra.mxu0 0.0
    %1208 = vmatprep.subr.mxu0 0.0
    %1209 = vmatpush2.msra.mxu0 0.0
    %1210 = vmatprep.subr.mxu0 0.0
    %1211 = vmatpush2.msra.mxu0 0.0
    %1212 = vmatprep.subr.mxu0 0.0
    %1213 = vmatpush2.msra.mxu0 0.0
    %1214 = vmatprep.subr.mxu0 0.0
    %1215 = vmatpush2.msra.mxu0 0.0
    %1216 = vmatprep.subr.mxu0 0.0
    %1217 = vmatpush2.msra.mxu0 0.0
    %1218 = vmatprep.subr.mxu0 0.0
    %1219 = vmatpush2.msra.mxu0 0.0
    %1220 = vmatprep.subr.mxu0 0.0
    %1221 = vmatpush2.msra.mxu0 0.0
    %1222 = vmatprep.mubr.f32.mxu0 0.0
    %1223 = vmatmul.mubr.f32.gmra.mxu0 %v1156
    %v1224 = vpop.f32.mrf.mxu0
    %v1225 = vadd.f32 0.0, %v1224
    %v1226 = vpop.f32.mrf.mxu0
    %1227 = vdwg.mxu0
    %1228 = vrot.lane.b32.xlu0 %v343, 96
    %v1229 = vpop.permute.xlu0 %1228
    %v1232 = vsel %vm371, %v1065, 0
    %1234 = vmatprep.subr.mxu0 0.0
    %1235 = vmatpush1.msra.mxu0 0.0
    %1236 = vmatprep.subr.mxu0 0.0
    %1237 = vmatpush1.msra.mxu0 0.0
    %1238 = vmatprep.subr.mxu0 0.0
    %1239 = vmatpush1.msra.mxu0 0.0
    %1240 = vmatprep.subr.mxu0 0.0
    %1241 = vmatpush1.msra.mxu0 0.0
    %1242 = vmatprep.subr.mxu0 0.0
    %1243 = vmatpush1.msra.mxu0 0.0
    %1244 = vmatprep.subr.mxu0 0.0
    %1245 = vmatpush1.msra.mxu0 0.0
    %1246 = vmatprep.subr.mxu0 0.0
    %1247 = vmatpush1.msra.mxu0 0.0
    %1248 = vmatprep.subr.mxu0 0.0
    %1249 = vmatpush1.msra.mxu0 0.0
    %1250 = vmatprep.subr.mxu0 0.0
    %1251 = vmatpush1.msra.mxu0 0.0
    %1252 = vmatprep.subr.mxu0 0.0
    %1253 = vmatpush1.msra.mxu0 0.0
    %1254 = vmatprep.subr.mxu0 0.0
    %1255 = vmatpush1.msra.mxu0 0.0
    %1256 = vmatprep.subr.mxu0 0.0
    %1257 = vmatpush1.msra.mxu0 0.0
    %1258 = vmatprep.subr.mxu0 0.0
    %1259 = vmatpush1.msra.mxu0 0.0
    %1260 = vmatprep.subr.mxu0 0.0
    %1261 = vmatpush1.msra.mxu0 0.0
    %1262 = vmatprep.subr.mxu0 0.0
    %1263 = vmatpush1.msra.mxu0 0.0
    %1264 = vmatprep.subr.mxu0 0.0
    %1265 = vmatpush1.msra.mxu0 %v1229
    %1266 = vmatprep.subr.mxu0 0.0
    %1267 = vmatpush2.msra.mxu0 0.0
    %1268 = vmatprep.subr.mxu0 0.0
    %1269 = vmatpush2.msra.mxu0 0.0
    %1270 = vmatprep.subr.mxu0 0.0
    %1271 = vmatpush2.msra.mxu0 0.0
    %1272 = vmatprep.subr.mxu0 0.0
    %1273 = vmatpush2.msra.mxu0 0.0
    %1274 = vmatprep.subr.mxu0 0.0
    %1275 = vmatpush2.msra.mxu0 0.0
    %1276 = vmatprep.subr.mxu0 0.0
    %1277 = vmatpush2.msra.mxu0 0.0
    %1278 = vmatprep.subr.mxu0 0.0
    %1279 = vmatpush2.msra.mxu0 0.0
    %1280 = vmatprep.subr.mxu0 0.0
    %1281 = vmatpush2.msra.mxu0 0.0
    %1282 = vmatprep.subr.mxu0 0.0
    %1283 = vmatpush2.msra.mxu0 0.0
    %1284 = vmatprep.subr.mxu0 0.0
    %1285 = vmatpush2.msra.mxu0 0.0
    %1286 = vmatprep.subr.mxu0 0.0
    %1287 = vmatpush2.msra.mxu0 0.0
    %1288 = vmatprep.subr.mxu0 0.0
    %1289 = vmatpush2.msra.mxu0 0.0
    %1290 = vmatprep.subr.mxu0 0.0
    %1291 = vmatpush2.msra.mxu0 0.0
    %1292 = vmatprep.subr.mxu0 0.0
    %1293 = vmatpush2.msra.mxu0 0.0
    %1294 = vmatprep.subr.mxu0 0.0
    %1295 = vmatpush2.msra.mxu0 0.0
    %1296 = vmatprep.subr.mxu0 0.0
    %1297 = vmatpush2.msra.mxu0 0.0
    %1298 = vmatprep.mubr.f32.mxu0 0.0
    %1299 = vmatmul.mubr.f32.gmra.mxu0 %v1232
    %v1300 = vpop.f32.mrf.mxu0
    %v1301 = vadd.f32 0.0, %v1300
    %v1302 = vpop.f32.mrf.mxu0
    %1303 = vdwg.mxu0
    %1304 = vrot.lane.b32.xlu0 %v348, 96
    %v1305 = vpop.permute.xlu0 %1304
    %v1308 = vsel %vm371, %v1067, 0
    %1310 = vmatprep.subr.mxu0 0.0
    %1311 = vmatpush1.msra.mxu0 0.0
    %1312 = vmatprep.subr.mxu0 0.0
    %1313 = vmatpush1.msra.mxu0 0.0
    %1314 = vmatprep.subr.mxu0 0.0
    %1315 = vmatpush1.msra.mxu0 0.0
    %1316 = vmatprep.subr.mxu0 0.0
    %1317 = vmatpush1.msra.mxu0 0.0
    %1318 = vmatprep.subr.mxu0 0.0
    %1319 = vmatpush1.msra.mxu0 0.0
    %1320 = vmatprep.subr.mxu0 0.0
    %1321 = vmatpush1.msra.mxu0 0.0
    %1322 = vmatprep.subr.mxu0 0.0
    %1323 = vmatpush1.msra.mxu0 0.0
    %1324 = vmatprep.subr.mxu0 0.0
    %1325 = vmatpush1.msra.mxu0 0.0
    %1326 = vmatprep.subr.mxu0 0.0
    %1327 = vmatpush1.msra.mxu0 0.0
    %1328 = vmatprep.subr.mxu0 0.0
    %1329 = vmatpush1.msra.mxu0 0.0
    %1330 = vmatprep.subr.mxu0 0.0
    %1331 = vmatpush1.msra.mxu0 0.0
    %1332 = vmatprep.subr.mxu0 0.0
    %1333 = vmatpush1.msra.mxu0 0.0
    %1334 = vmatprep.subr.mxu0 0.0
    %1335 = vmatpush1.msra.mxu0 0.0
    %1336 = vmatprep.subr.mxu0 0.0
    %1337 = vmatpush1.msra.mxu0 0.0
    %1338 = vmatprep.subr.mxu0 0.0
    %1339 = vmatpush1.msra.mxu0 0.0
    %1340 = vmatprep.subr.mxu0 0.0
    %1341 = vmatpush1.msra.mxu0 %v1305
    %1342 = vmatprep.subr.mxu0 0.0
    %1343 = vmatpush2.msra.mxu0 0.0
    %1344 = vmatprep.subr.mxu0 0.0
    %1345 = vmatpush2.msra.mxu0 0.0
    %1346 = vmatprep.subr.mxu0 0.0
    %1347 = vmatpush2.msra.mxu0 0.0
    %1348 = vmatprep.subr.mxu0 0.0
    %1349 = vmatpush2.msra.mxu0 0.0
    %1350 = vmatprep.subr.mxu0 0.0
    %1351 = vmatpush2.msra.mxu0 0.0
    %1352 = vmatprep.subr.mxu0 0.0
    %1353 = vmatpush2.msra.mxu0 0.0
    %1354 = vmatprep.subr.mxu0 0.0
    %1355 = vmatpush2.msra.mxu0 0.0
    %1356 = vmatprep.subr.mxu0 0.0
    %1357 = vmatpush2.msra.mxu0 0.0
    %1358 = vmatprep.subr.mxu0 0.0
    %1359 = vmatpush2.msra.mxu0 0.0
    %1360 = vmatprep.subr.mxu0 0.0
    %1361 = vmatpush2.msra.mxu0 0.0
    %1362 = vmatprep.subr.mxu0 0.0
    %1363 = vmatpush2.msra.mxu0 0.0
    %1364 = vmatprep.subr.mxu0 0.0
    %1365 = vmatpush2.msra.mxu0 0.0
    %1366 = vmatprep.subr.mxu0 0.0
    %1367 = vmatpush2.msra.mxu0 0.0
    %1368 = vmatprep.subr.mxu0 0.0
    %1369 = vmatpush2.msra.mxu0 0.0
    %1370 = vmatprep.subr.mxu0 0.0
    %1371 = vmatpush2.msra.mxu0 0.0
    %1372 = vmatprep.subr.mxu0 0.0
    %1373 = vmatpush2.msra.mxu0 0.0
    %1374 = vmatprep.mubr.f32.mxu0 0.0
    %1375 = vmatmul.mubr.f32.gmra.mxu0 %v1308
    %v1376 = vpop.f32.mrf.mxu0
    %v1377 = vadd.f32 0.0, %v1376
    %v1378 = vpop.f32.mrf.mxu0
    %1379 = vdwg.mxu0
    %1380 = vrot.lane.b32.xlu0 %v353, 96
    %v1381 = vpop.permute.xlu0 %1380
    %v1384 = vsel %vm371, %v1069, 0
    %1386 = vmatprep.subr.mxu0 0.0
    %1387 = vmatpush1.msra.mxu0 0.0
    %1388 = vmatprep.subr.mxu0 0.0
    %1389 = vmatpush1.msra.mxu0 0.0
    %1390 = vmatprep.subr.mxu0 0.0
    %1391 = vmatpush1.msra.mxu0 0.0
    %1392 = vmatprep.subr.mxu0 0.0
    %1393 = vmatpush1.msra.mxu0 0.0
    %1394 = vmatprep.subr.mxu0 0.0
    %1395 = vmatpush1.msra.mxu0 0.0
    %1396 = vmatprep.subr.mxu0 0.0
    %1397 = vmatpush1.msra.mxu0 0.0
    %1398 = vmatprep.subr.mxu0 0.0
    %1399 = vmatpush1.msra.mxu0 0.0
    %1400 = vmatprep.subr.mxu0 0.0
    %1401 = vmatpush1.msra.mxu0 0.0
    %1402 = vmatprep.subr.mxu0 0.0
    %1403 = vmatpush1.msra.mxu0 0.0
    %1404 = vmatprep.subr.mxu0 0.0
    %1405 = vmatpush1.msra.mxu0 0.0
    %1406 = vmatprep.subr.mxu0 0.0
    %1407 = vmatpush1.msra.mxu0 0.0
    %1408 = vmatprep.subr.mxu0 0.0
    %1409 = vmatpush1.msra.mxu0 0.0
    %1410 = vmatprep.subr.mxu0 0.0
    %1411 = vmatpush1.msra.mxu0 0.0
    %1412 = vmatprep.subr.mxu0 0.0
    %1413 = vmatpush1.msra.mxu0 0.0
    %1414 = vmatprep.subr.mxu0 0.0
    %1415 = vmatpush1.msra.mxu0 0.0
    %1416 = vmatprep.subr.mxu0 0.0
    %1417 = vmatpush1.msra.mxu0 %v1381
    %1418 = vmatprep.subr.mxu0 0.0
    %1419 = vmatpush2.msra.mxu0 0.0
    %1420 = vmatprep.subr.mxu0 0.0
    %1421 = vmatpush2.msra.mxu0 0.0
    %1422 = vmatprep.subr.mxu0 0.0
    %1423 = vmatpush2.msra.mxu0 0.0
    %1424 = vmatprep.subr.mxu0 0.0
    %1425 = vmatpush2.msra.mxu0 0.0
    %1426 = vmatprep.subr.mxu0 0.0
    %1427 = vmatpush2.msra.mxu0 0.0
    %1428 = vmatprep.subr.mxu0 0.0
    %1429 = vmatpush2.msra.mxu0 0.0
    %1430 = vmatprep.subr.mxu0 0.0
    %1431 = vmatpush2.msra.mxu0 0.0
    %1432 = vmatprep.subr.mxu0 0.0
    %1433 = vmatpush2.msra.mxu0 0.0
    %1434 = vmatprep.subr.mxu0 0.0
    %1435 = vmatpush2.msra.mxu0 0.0
    %1436 = vmatprep.subr.mxu0 0.0
    %1437 = vmatpush2.msra.mxu0 0.0
    %1438 = vmatprep.subr.mxu0 0.0
    %1439 = vmatpush2.msra.mxu0 0.0
    %1440 = vmatprep.subr.mxu0 0.0
    %1441 = vmatpush2.msra.mxu0 0.0
    %1442 = vmatprep.subr.mxu0 0.0
    %1443 = vmatpush2.msra.mxu0 0.0
    %1444 = vmatprep.subr.mxu0 0.0
    %1445 = vmatpush2.msra.mxu0 0.0
    %1446 = vmatprep.subr.mxu0 0.0
    %1447 = vmatpush2.msra.mxu0 0.0
    %1448 = vmatprep.subr.mxu0 0.0
    %1449 = vmatpush2.msra.mxu0 0.0
    %1450 = vmatprep.mubr.f32.mxu0 0.0
    %1451 = vmatmul.mubr.f32.gmra.mxu0 %v1384
    %v1452 = vpop.f32.mrf.mxu0
    %v1453 = vadd.f32 0.0, %v1452
    %v1454 = vpop.f32.mrf.mxu0
    %1455 = vdwg.mxu0
    %1456 = vrot.lane.b32.xlu0 %v358, 96
    %v1457 = vpop.permute.xlu0 %1456
    %v1460 = vsel %vm371, %v1071, 0
    %1462 = vmatprep.subr.mxu0 0.0
    %1463 = vmatpush1.msra.mxu0 0.0
    %1464 = vmatprep.subr.mxu0 0.0
    %1465 = vmatpush1.msra.mxu0 0.0
    %1466 = vmatprep.subr.mxu0 0.0
    %1467 = vmatpush1.msra.mxu0 0.0
    %1468 = vmatprep.subr.mxu0 0.0
    %1469 = vmatpush1.msra.mxu0 0.0
    %1470 = vmatprep.subr.mxu0 0.0
    %1471 = vmatpush1.msra.mxu0 0.0
    %1472 = vmatprep.subr.mxu0 0.0
    %1473 = vmatpush1.msra.mxu0 0.0
    %1474 = vmatprep.subr.mxu0 0.0
    %1475 = vmatpush1.msra.mxu0 0.0
    %1476 = vmatprep.subr.mxu0 0.0
    %1477 = vmatpush1.msra.mxu0 0.0
    %1478 = vmatprep.subr.mxu0 0.0
    %1479 = vmatpush1.msra.mxu0 0.0
    %1480 = vmatprep.subr.mxu0 0.0
    %1481 = vmatpush1.msra.mxu0 0.0
    %1482 = vmatprep.subr.mxu0 0.0
    %1483 = vmatpush1.msra.mxu0 0.0
    %1484 = vmatprep.subr.mxu0 0.0
    %1485 = vmatpush1.msra.mxu0 0.0
    %1486 = vmatprep.subr.mxu0 0.0
    %1487 = vmatpush1.msra.mxu0 0.0
    %1488 = vmatprep.subr.mxu0 0.0
    %1489 = vmatpush1.msra.mxu0 0.0
    %1490 = vmatprep.subr.mxu0 0.0
    %1491 = vmatpush1.msra.mxu0 0.0
    %1492 = vmatprep.subr.mxu0 0.0
    %1493 = vmatpush1.msra.mxu0 %v1457
    %1494 = vmatprep.subr.mxu0 0.0
    %1495 = vmatpush2.msra.mxu0 0.0
    %1496 = vmatprep.subr.mxu0 0.0
    %1497 = vmatpush2.msra.mxu0 0.0
    %1498 = vmatprep.subr.mxu0 0.0
    %1499 = vmatpush2.msra.mxu0 0.0
    %1500 = vmatprep.subr.mxu0 0.0
    %1501 = vmatpush2.msra.mxu0 0.0
    %1502 = vmatprep.subr.mxu0 0.0
    %1503 = vmatpush2.msra.mxu0 0.0
    %1504 = vmatprep.subr.mxu0 0.0
    %1505 = vmatpush2.msra.mxu0 0.0
    %1506 = vmatprep.subr.mxu0 0.0
    %1507 = vmatpush2.msra.mxu0 0.0
    %1508 = vmatprep.subr.mxu0 0.0
    %1509 = vmatpush2.msra.mxu0 0.0
    %1510 = vmatprep.subr.mxu0 0.0
    %1511 = vmatpush2.msra.mxu0 0.0
    %1512 = vmatprep.subr.mxu0 0.0
    %1513 = vmatpush2.msra.mxu0 0.0
    %1514 = vmatprep.subr.mxu0 0.0
    %1515 = vmatpush2.msra.mxu0 0.0
    %1516 = vmatprep.subr.mxu0 0.0
    %1517 = vmatpush2.msra.mxu0 0.0
    %1518 = vmatprep.subr.mxu0 0.0
    %1519 = vmatpush2.msra.mxu0 0.0
    %1520 = vmatprep.subr.mxu0 0.0
    %1521 = vmatpush2.msra.mxu0 0.0
    %1522 = vmatprep.subr.mxu0 0.0
    %1523 = vmatpush2.msra.mxu0 0.0
    %1524 = vmatprep.subr.mxu0 0.0
    %1525 = vmatpush2.msra.mxu0 0.0
    %1526 = vmatprep.mubr.f32.mxu0 0.0
    %1527 = vmatmul.mubr.f32.gmra.mxu0 %v1460
    %v1528 = vpop.f32.mrf.mxu0
    %v1529 = vadd.f32 0.0, %v1528
    %v1530 = vpop.f32.mrf.mxu0
    %1531 = vdwg.mxu0
    %1532 = vrot.lane.b32.xlu0 %v363, 96
    %v1533 = vpop.permute.xlu0 %1532
    %v1536 = vsel %vm371, %v1073, 0
    %1538 = vmatprep.subr.mxu0 0.0
    %1539 = vmatpush1.msra.mxu0 0.0
    %1540 = vmatprep.subr.mxu0 0.0
    %1541 = vmatpush1.msra.mxu0 0.0
    %1542 = vmatprep.subr.mxu0 0.0
    %1543 = vmatpush1.msra.mxu0 0.0
    %1544 = vmatprep.subr.mxu0 0.0
    %1545 = vmatpush1.msra.mxu0 0.0
    %1546 = vmatprep.subr.mxu0 0.0
    %1547 = vmatpush1.msra.mxu0 0.0
    %1548 = vmatprep.subr.mxu0 0.0
    %1549 = vmatpush1.msra.mxu0 0.0
    %1550 = vmatprep.subr.mxu0 0.0
    %1551 = vmatpush1.msra.mxu0 0.0
    %1552 = vmatprep.subr.mxu0 0.0
    %1553 = vmatpush1.msra.mxu0 0.0
    %1554 = vmatprep.subr.mxu0 0.0
    %1555 = vmatpush1.msra.mxu0 0.0
    %1556 = vmatprep.subr.mxu0 0.0
    %1557 = vmatpush1.msra.mxu0 0.0
    %1558 = vmatprep.subr.mxu0 0.0
    %1559 = vmatpush1.msra.mxu0 0.0
    %1560 = vmatprep.subr.mxu0 0.0
    %1561 = vmatpush1.msra.mxu0 0.0
    %1562 = vmatprep.subr.mxu0 0.0
    %1563 = vmatpush1.msra.mxu0 0.0
    %1564 = vmatprep.subr.mxu0 0.0
    %1565 = vmatpush1.msra.mxu0 0.0
    %1566 = vmatprep.subr.mxu0 0.0
    %1567 = vmatpush1.msra.mxu0 0.0
    %1568 = vmatprep.subr.mxu0 0.0
    %1569 = vmatpush1.msra.mxu0 %v1533
    %1570 = vmatprep.subr.mxu0 0.0
    %1571 = vmatpush2.msra.mxu0 0.0
    %1572 = vmatprep.subr.mxu0 0.0
    %1573 = vmatpush2.msra.mxu0 0.0
    %1574 = vmatprep.subr.mxu0 0.0
    %1575 = vmatpush2.msra.mxu0 0.0
    %1576 = vmatprep.subr.mxu0 0.0
    %1577 = vmatpush2.msra.mxu0 0.0
    %1578 = vmatprep.subr.mxu0 0.0
    %1579 = vmatpush2.msra.mxu0 0.0
    %1580 = vmatprep.subr.mxu0 0.0
    %1581 = vmatpush2.msra.mxu0 0.0
    %1582 = vmatprep.subr.mxu0 0.0
    %1583 = vmatpush2.msra.mxu0 0.0
    %1584 = vmatprep.subr.mxu0 0.0
    %1585 = vmatpush2.msra.mxu0 0.0
    %1586 = vmatprep.subr.mxu0 0.0
    %1587 = vmatpush2.msra.mxu0 0.0
    %1588 = vmatprep.subr.mxu0 0.0
    %1589 = vmatpush2.msra.mxu0 0.0
    %1590 = vmatprep.subr.mxu0 0.0
    %1591 = vmatpush2.msra.mxu0 0.0
    %1592 = vmatprep.subr.mxu0 0.0
    %1593 = vmatpush2.msra.mxu0 0.0
    %1594 = vmatprep.subr.mxu0 0.0
    %1595 = vmatpush2.msra.mxu0 0.0
    %1596 = vmatprep.subr.mxu0 0.0
    %1597 = vmatpush2.msra.mxu0 0.0
    %1598 = vmatprep.subr.mxu0 0.0
    %1599 = vmatpush2.msra.mxu0 0.0
    %1600 = vmatprep.subr.mxu0 0.0
    %1601 = vmatpush2.msra.mxu0 0.0
    %1602 = vmatprep.mubr.f32.mxu0 0.0
    %1603 = vmatmul.mubr.f32.gmra.mxu0 %v1536
    %v1604 = vpop.f32.mrf.mxu0
    %v1605 = vadd.f32 0.0, %v1604
    %v1606 = vpop.f32.mrf.mxu0
    %1607 = vdwg.mxu0
    %1608 = vrot.lane.b32.xlu0 %v368, 96
    %v1609 = vpop.permute.xlu0 %1608
    %v1612 = vsel %vm371, %v1075, 0
    %1614 = vmatprep.subr.mxu0 0.0
    %1615 = vmatpush1.msra.mxu0 0.0
    %1616 = vmatprep.subr.mxu0 0.0
    %1617 = vmatpush1.msra.mxu0 0.0
    %1618 = vmatprep.subr.mxu0 0.0
    %1619 = vmatpush1.msra.mxu0 0.0
    %1620 = vmatprep.subr.mxu0 0.0
    %1621 = vmatpush1.msra.mxu0 0.0
    %1622 = vmatprep.subr.mxu0 0.0
    %1623 = vmatpush1.msra.mxu0 0.0
    %1624 = vmatprep.subr.mxu0 0.0
    %1625 = vmatpush1.msra.mxu0 0.0
    %1626 = vmatprep.subr.mxu0 0.0
    %1627 = vmatpush1.msra.mxu0 0.0
    %1628 = vmatprep.subr.mxu0 0.0
    %1629 = vmatpush1.msra.mxu0 0.0
    %1630 = vmatprep.subr.mxu0 0.0
    %1631 = vmatpush1.msra.mxu0 0.0
    %1632 = vmatprep.subr.mxu0 0.0
    %1633 = vmatpush1.msra.mxu0 0.0
    %1634 = vmatprep.subr.mxu0 0.0
    %1635 = vmatpush1.msra.mxu0 0.0
    %1636 = vmatprep.subr.mxu0 0.0
    %1637 = vmatpush1.msra.mxu0 0.0
    %1638 = vmatprep.subr.mxu0 0.0
    %1639 = vmatpush1.msra.mxu0 0.0
    %1640 = vmatprep.subr.mxu0 0.0
    %1641 = vmatpush1.msra.mxu0 0.0
    %1642 = vmatprep.subr.mxu0 0.0
    %1643 = vmatpush1.msra.mxu0 0.0
    %1644 = vmatprep.subr.mxu0 0.0
    %1645 = vmatpush1.msra.mxu0 %v1609
    %1646 = vmatprep.subr.mxu0 0.0
    %1647 = vmatpush2.msra.mxu0 0.0
    %1648 = vmatprep.subr.mxu0 0.0
    %1649 = vmatpush2.msra.mxu0 0.0
    %1650 = vmatprep.subr.mxu0 0.0
    %1651 = vmatpush2.msra.mxu0 0.0
    %1652 = vmatprep.subr.mxu0 0.0
    %1653 = vmatpush2.msra.mxu0 0.0
    %1654 = vmatprep.subr.mxu0 0.0
    %1655 = vmatpush2.msra.mxu0 0.0
    %1656 = vmatprep.subr.mxu0 0.0
    %1657 = vmatpush2.msra.mxu0 0.0
    %1658 = vmatprep.subr.mxu0 0.0
    %1659 = vmatpush2.msra.mxu0 0.0
    %1660 = vmatprep.subr.mxu0 0.0
    %1661 = vmatpush2.msra.mxu0 0.0
    %1662 = vmatprep.subr.mxu0 0.0
    %1663 = vmatpush2.msra.mxu0 0.0
    %1664 = vmatprep.subr.mxu0 0.0
    %1665 = vmatpush2.msra.mxu0 0.0
    %1666 = vmatprep.subr.mxu0 0.0
    %1667 = vmatpush2.msra.mxu0 0.0
    %1668 = vmatprep.subr.mxu0 0.0
    %1669 = vmatpush2.msra.mxu0 0.0
    %1670 = vmatprep.subr.mxu0 0.0
    %1671 = vmatpush2.msra.mxu0 0.0
    %1672 = vmatprep.subr.mxu0 0.0
    %1673 = vmatpush2.msra.mxu0 0.0
    %1674 = vmatprep.subr.mxu0 0.0
    %1675 = vmatpush2.msra.mxu0 0.0
    %1676 = vmatprep.subr.mxu0 0.0
    %1677 = vmatpush2.msra.mxu0 0.0
    %1678 = vmatprep.mubr.f32.mxu0 0.0
    %1679 = vmatmul.mubr.f32.gmra.mxu0 %v1612
    %v1680 = vpop.f32.mrf.mxu0
    %v1681 = vadd.f32 0.0, %v1680
    %v1682 = vpop.f32.mrf.mxu0
    %1683 = vdwg.mxu0
    %1684 = vrot.lane.b32.xlu0 %v193, 120
    %v1685 = vpop.permute.xlu0 %1684
    %1686 = vrot.lane.b32.xlu0 %v333, 120
    %v1687 = vpop.permute.xlu0 %1686
    %v1688 = vsel %vm371, %v1685, 0
    %v1690 = vsel %vm371, %v1687, 0
    %1692 = vmatprep.subr.mxu0 0.0
    %1693 = vmatpush1.xpose.msra.mxu0 0.0
    %1694 = vmatprep.subr.mxu0 0.0
    %1695 = vmatpush1.xpose.msra.mxu0 0.0
    %1696 = vmatprep.subr.mxu0 0.0
    %1697 = vmatpush1.xpose.msra.mxu0 0.0
    %1698 = vmatprep.subr.mxu0 0.0
    %1699 = vmatpush1.xpose.msra.mxu0 0.0
    %1700 = vmatprep.subr.mxu0 0.0
    %1701 = vmatpush1.xpose.msra.mxu0 0.0
    %1702 = vmatprep.subr.mxu0 0.0
    %1703 = vmatpush1.xpose.msra.mxu0 0.0
    %1704 = vmatprep.subr.mxu0 0.0
    %1705 = vmatpush1.xpose.msra.mxu0 0.0
    %1706 = vmatprep.subr.mxu0 0.0
    %1707 = vmatpush1.xpose.msra.mxu0 0.0
    %1708 = vmatprep.subr.mxu0 0.0
    %1709 = vmatpush1.xpose.msra.mxu0 0.0
    %1710 = vmatprep.subr.mxu0 0.0
    %1711 = vmatpush1.xpose.msra.mxu0 0.0
    %1712 = vmatprep.subr.mxu0 0.0
    %1713 = vmatpush1.xpose.msra.mxu0 0.0
    %1714 = vmatprep.subr.mxu0 0.0
    %1715 = vmatpush1.xpose.msra.mxu0 0.0
    %1716 = vmatprep.subr.mxu0 0.0
    %1717 = vmatpush1.xpose.msra.mxu0 0.0
    %1718 = vmatprep.subr.mxu0 0.0
    %1719 = vmatpush1.xpose.msra.mxu0 0.0
    %1720 = vmatprep.subr.mxu0 0.0
    %1721 = vmatpush1.xpose.msra.mxu0 0.0
    %1722 = vmatprep.subr.mxu0 0.0
    %1723 = vmatpush1.xpose.msra.mxu0 %v1690
    %1724 = vmatprep.subr.mxu0 0.0
    %1725 = vmatpush2.xpose.msra.mxu0 0.0
    %1726 = vmatprep.subr.mxu0 0.0
    %1727 = vmatpush2.xpose.msra.mxu0 0.0
    %1728 = vmatprep.subr.mxu0 0.0
    %1729 = vmatpush2.xpose.msra.mxu0 0.0
    %1730 = vmatprep.subr.mxu0 0.0
    %1731 = vmatpush2.xpose.msra.mxu0 0.0
    %1732 = vmatprep.subr.mxu0 0.0
    %1733 = vmatpush2.xpose.msra.mxu0 0.0
    %1734 = vmatprep.subr.mxu0 0.0
    %1735 = vmatpush2.xpose.msra.mxu0 0.0
    %1736 = vmatprep.subr.mxu0 0.0
    %1737 = vmatpush2.xpose.msra.mxu0 0.0
    %1738 = vmatprep.subr.mxu0 0.0
    %1739 = vmatpush2.xpose.msra.mxu0 0.0
    %1740 = vmatprep.subr.mxu0 0.0
    %1741 = vmatpush2.xpose.msra.mxu0 0.0
    %1742 = vmatprep.subr.mxu0 0.0
    %1743 = vmatpush2.xpose.msra.mxu0 0.0
    %1744 = vmatprep.subr.mxu0 0.0
    %1745 = vmatpush2.xpose.msra.mxu0 0.0
    %1746 = vmatprep.subr.mxu0 0.0
    %1747 = vmatpush2.xpose.msra.mxu0 0.0
    %1748 = vmatprep.subr.mxu0 0.0
    %1749 = vmatpush2.xpose.msra.mxu0 0.0
    %1750 = vmatprep.subr.mxu0 0.0
    %1751 = vmatpush2.xpose.msra.mxu0 0.0
    %1752 = vmatprep.subr.mxu0 0.0
    %1753 = vmatpush2.xpose.msra.mxu0 0.0
    %1754 = vmatprep.subr.mxu0 0.0
    %1755 = vmatpush2.xpose.msra.mxu0 0.0
    %1756 = vmatprep.mubr.f32.mxu0 0.0
    %1757 = vmatmul.mubr.f32.gmra.mxu0 %v1688
    %v1758 = vpop.f32.mrf.mxu0
    %v1759 = vadd.f32 0.0, %v1758
    %v1760 = vpop.f32.mrf.mxu0
    %1761 = vdwg.mxu0
    %1762 = vrot.lane.b32.xlu0 %v198, 120
    %v1763 = vpop.permute.xlu0 %1762
    %1764 = vrot.lane.b32.xlu0 %v338, 120
    %v1765 = vpop.permute.xlu0 %1764
    %v1766 = vsel %vm371, %v1763, 0
    %v1768 = vsel %vm371, %v1765, 0
    %1770 = vmatprep.subr.mxu0 0.0
    %1771 = vmatpush1.xpose.msra.mxu0 0.0
    %1772 = vmatprep.subr.mxu0 0.0
    %1773 = vmatpush1.xpose.msra.mxu0 0.0
    %1774 = vmatprep.subr.mxu0 0.0
    %1775 = vmatpush1.xpose.msra.mxu0 0.0
    %1776 = vmatprep.subr.mxu0 0.0
    %1777 = vmatpush1.xpose.msra.mxu0 0.0
    %1778 = vmatprep.subr.mxu0 0.0
    %1779 = vmatpush1.xpose.msra.mxu0 0.0
    %1780 = vmatprep.subr.mxu0 0.0
    %1781 = vmatpush1.xpose.msra.mxu0 0.0
    %1782 = vmatprep.subr.mxu0 0.0
    %1783 = vmatpush1.xpose.msra.mxu0 0.0
    %1784 = vmatprep.subr.mxu0 0.0
    %1785 = vmatpush1.xpose.msra.mxu0 0.0
    %1786 = vmatprep.subr.mxu0 0.0
    %1787 = vmatpush1.xpose.msra.mxu0 0.0
    %1788 = vmatprep.subr.mxu0 0.0
    %1789 = vmatpush1.xpose.msra.mxu0 0.0
    %1790 = vmatprep.subr.mxu0 0.0
    %1791 = vmatpush1.xpose.msra.mxu0 0.0
    %1792 = vmatprep.subr.mxu0 0.0
    %1793 = vmatpush1.xpose.msra.mxu0 0.0
    %1794 = vmatprep.subr.mxu0 0.0
    %1795 = vmatpush1.xpose.msra.mxu0 0.0
    %1796 = vmatprep.subr.mxu0 0.0
    %1797 = vmatpush1.xpose.msra.mxu0 0.0
    %1798 = vmatprep.subr.mxu0 0.0
    %1799 = vmatpush1.xpose.msra.mxu0 0.0
    %1800 = vmatprep.subr.mxu0 0.0
    %1801 = vmatpush1.xpose.msra.mxu0 %v1768
    %1802 = vmatprep.subr.mxu0 0.0
    %1803 = vmatpush2.xpose.msra.mxu0 0.0
    %1804 = vmatprep.subr.mxu0 0.0
    %1805 = vmatpush2.xpose.msra.mxu0 0.0
    %1806 = vmatprep.subr.mxu0 0.0
    %1807 = vmatpush2.xpose.msra.mxu0 0.0
    %1808 = vmatprep.subr.mxu0 0.0
    %1809 = vmatpush2.xpose.msra.mxu0 0.0
    %1810 = vmatprep.subr.mxu0 0.0
    %1811 = vmatpush2.xpose.msra.mxu0 0.0
    %1812 = vmatprep.subr.mxu0 0.0
    %1813 = vmatpush2.xpose.msra.mxu0 0.0
    %1814 = vmatprep.subr.mxu0 0.0
    %1815 = vmatpush2.xpose.msra.mxu0 0.0
    %1816 = vmatprep.subr.mxu0 0.0
    %1817 = vmatpush2.xpose.msra.mxu0 0.0
    %1818 = vmatprep.subr.mxu0 0.0
    %1819 = vmatpush2.xpose.msra.mxu0 0.0
    %1820 = vmatprep.subr.mxu0 0.0
    %1821 = vmatpush2.xpose.msra.mxu0 0.0
    %1822 = vmatprep.subr.mxu0 0.0
    %1823 = vmatpush2.xpose.msra.mxu0 0.0
    %1824 = vmatprep.subr.mxu0 0.0
    %1825 = vmatpush2.xpose.msra.mxu0 0.0
    %1826 = vmatprep.subr.mxu0 0.0
    %1827 = vmatpush2.xpose.msra.mxu0 0.0
    %1828 = vmatprep.subr.mxu0 0.0
    %1829 = vmatpush2.xpose.msra.mxu0 0.0
    %1830 = vmatprep.subr.mxu0 0.0
    %1831 = vmatpush2.xpose.msra.mxu0 0.0
    %1832 = vmatprep.subr.mxu0 0.0
    %1833 = vmatpush2.xpose.msra.mxu0 0.0
    %1834 = vmatprep.mubr.f32.mxu0 0.0
    %1835 = vmatmul.mubr.f32.gmra.mxu0 %v1766
    %v1836 = vpop.f32.mrf.mxu0
    %v1837 = vadd.f32 0.0, %v1836
    %v1838 = vpop.f32.mrf.mxu0
    %1839 = vdwg.mxu0
    %1840 = vrot.lane.b32.xlu0 %v203, 120
    %v1841 = vpop.permute.xlu0 %1840
    %1842 = vrot.lane.b32.xlu0 %v343, 120
    %v1843 = vpop.permute.xlu0 %1842
    %v1844 = vsel %vm371, %v1841, 0
    %v1846 = vsel %vm371, %v1843, 0
    %1848 = vmatprep.subr.mxu0 0.0
    %1849 = vmatpush1.xpose.msra.mxu0 0.0
    %1850 = vmatprep.subr.mxu0 0.0
    %1851 = vmatpush1.xpose.msra.mxu0 0.0
    %1852 = vmatprep.subr.mxu0 0.0
    %1853 = vmatpush1.xpose.msra.mxu0 0.0
    %1854 = vmatprep.subr.mxu0 0.0
    %1855 = vmatpush1.xpose.msra.mxu0 0.0
    %1856 = vmatprep.subr.mxu0 0.0
    %1857 = vmatpush1.xpose.msra.mxu0 0.0
    %1858 = vmatprep.subr.mxu0 0.0
    %1859 = vmatpush1.xpose.msra.mxu0 0.0
    %1860 = vmatprep.subr.mxu0 0.0
    %1861 = vmatpush1.xpose.msra.mxu0 0.0
    %1862 = vmatprep.subr.mxu0 0.0
    %1863 = vmatpush1.xpose.msra.mxu0 0.0
    %1864 = vmatprep.subr.mxu0 0.0
    %1865 = vmatpush1.xpose.msra.mxu0 0.0
    %1866 = vmatprep.subr.mxu0 0.0
    %1867 = vmatpush1.xpose.msra.mxu0 0.0
    %1868 = vmatprep.subr.mxu0 0.0
    %1869 = vmatpush1.xpose.msra.mxu0 0.0
    %1870 = vmatprep.subr.mxu0 0.0
    %1871 = vmatpush1.xpose.msra.mxu0 0.0
    %1872 = vmatprep.subr.mxu0 0.0
    %1873 = vmatpush1.xpose.msra.mxu0 0.0
    %1874 = vmatprep.subr.mxu0 0.0
    %1875 = vmatpush1.xpose.msra.mxu0 0.0
    %1876 = vmatprep.subr.mxu0 0.0
    %1877 = vmatpush1.xpose.msra.mxu0 0.0
    %1878 = vmatprep.subr.mxu0 0.0
    %1879 = vmatpush1.xpose.msra.mxu0 %v1846
    %1880 = vmatprep.subr.mxu0 0.0
    %1881 = vmatpush2.xpose.msra.mxu0 0.0
    %1882 = vmatprep.subr.mxu0 0.0
    %1883 = vmatpush2.xpose.msra.mxu0 0.0
    %1884 = vmatprep.subr.mxu0 0.0
    %1885 = vmatpush2.xpose.msra.mxu0 0.0
    %1886 = vmatprep.subr.mxu0 0.0
    %1887 = vmatpush2.xpose.msra.mxu0 0.0
    %1888 = vmatprep.subr.mxu0 0.0
    %1889 = vmatpush2.xpose.msra.mxu0 0.0
    %1890 = vmatprep.subr.mxu0 0.0
    %1891 = vmatpush2.xpose.msra.mxu0 0.0
    %1892 = vmatprep.subr.mxu0 0.0
    %1893 = vmatpush2.xpose.msra.mxu0 0.0
    %1894 = vmatprep.subr.mxu0 0.0
    %1895 = vmatpush2.xpose.msra.mxu0 0.0
    %1896 = vmatprep.subr.mxu0 0.0
    %1897 = vmatpush2.xpose.msra.mxu0 0.0
    %1898 = vmatprep.subr.mxu0 0.0
    %1899 = vmatpush2.xpose.msra.mxu0 0.0
    %1900 = vmatprep.subr.mxu0 0.0
    %1901 = vmatpush2.xpose.msra.mxu0 0.0
    %1902 = vmatprep.subr.mxu0 0.0
    %1903 = vmatpush2.xpose.msra.mxu0 0.0
    %1904 = vmatprep.subr.mxu0 0.0
    %1905 = vmatpush2.xpose.msra.mxu0 0.0
    %1906 = vmatprep.subr.mxu0 0.0
    %1907 = vmatpush2.xpose.msra.mxu0 0.0
    %1908 = vmatprep.subr.mxu0 0.0
    %1909 = vmatpush2.xpose.msra.mxu0 0.0
    %1910 = vmatprep.subr.mxu0 0.0
    %1911 = vmatpush2.xpose.msra.mxu0 0.0
    %1912 = vmatprep.mubr.f32.mxu0 0.0
    %1913 = vmatmul.mubr.f32.gmra.mxu0 %v1844
    %v1914 = vpop.f32.mrf.mxu0
    %v1915 = vadd.f32 0.0, %v1914
    %v1916 = vpop.f32.mrf.mxu0
    %1917 = vdwg.mxu0
    %1918 = vrot.lane.b32.xlu0 %v208, 120
    %v1919 = vpop.permute.xlu0 %1918
    %1920 = vrot.lane.b32.xlu0 %v348, 120
    %v1921 = vpop.permute.xlu0 %1920
    %v1922 = vsel %vm371, %v1919, 0
    %v1924 = vsel %vm371, %v1921, 0
    %1926 = vmatprep.subr.mxu0 0.0
    %1927 = vmatpush1.xpose.msra.mxu0 0.0
    %1928 = vmatprep.subr.mxu0 0.0
    %1929 = vmatpush1.xpose.msra.mxu0 0.0
    %1930 = vmatprep.subr.mxu0 0.0
    %1931 = vmatpush1.xpose.msra.mxu0 0.0
    %1932 = vmatprep.subr.mxu0 0.0
    %1933 = vmatpush1.xpose.msra.mxu0 0.0
    %1934 = vmatprep.subr.mxu0 0.0
    %1935 = vmatpush1.xpose.msra.mxu0 0.0
    %1936 = vmatprep.subr.mxu0 0.0
    %1937 = vmatpush1.xpose.msra.mxu0 0.0
    %1938 = vmatprep.subr.mxu0 0.0
    %1939 = vmatpush1.xpose.msra.mxu0 0.0
    %1940 = vmatprep.subr.mxu0 0.0
    %1941 = vmatpush1.xpose.msra.mxu0 0.0
    %1942 = vmatprep.subr.mxu0 0.0
    %1943 = vmatpush1.xpose.msra.mxu0 0.0
    %1944 = vmatprep.subr.mxu0 0.0
    %1945 = vmatpush1.xpose.msra.mxu0 0.0
    %1946 = vmatprep.subr.mxu0 0.0
    %1947 = vmatpush1.xpose.msra.mxu0 0.0
    %1948 = vmatprep.subr.mxu0 0.0
    %1949 = vmatpush1.xpose.msra.mxu0 0.0
    %1950 = vmatprep.subr.mxu0 0.0
    %1951 = vmatpush1.xpose.msra.mxu0 0.0
    %1952 = vmatprep.subr.mxu0 0.0
    %1953 = vmatpush1.xpose.msra.mxu0 0.0
    %1954 = vmatprep.subr.mxu0 0.0
    %1955 = vmatpush1.xpose.msra.mxu0 0.0
    %1956 = vmatprep.subr.mxu0 0.0
    %1957 = vmatpush1.xpose.msra.mxu0 %v1924
    %1958 = vmatprep.subr.mxu0 0.0
    %1959 = vmatpush2.xpose.msra.mxu0 0.0
    %1960 = vmatprep.subr.mxu0 0.0
    %1961 = vmatpush2.xpose.msra.mxu0 0.0
    %1962 = vmatprep.subr.mxu0 0.0
    %1963 = vmatpush2.xpose.msra.mxu0 0.0
    %1964 = vmatprep.subr.mxu0 0.0
    %1965 = vmatpush2.xpose.msra.mxu0 0.0
    %1966 = vmatprep.subr.mxu0 0.0
    %1967 = vmatpush2.xpose.msra.mxu0 0.0
    %1968 = vmatprep.subr.mxu0 0.0
    %1969 = vmatpush2.xpose.msra.mxu0 0.0
    %1970 = vmatprep.subr.mxu0 0.0
    %1971 = vmatpush2.xpose.msra.mxu0 0.0
    %1972 = vmatprep.subr.mxu0 0.0
    %1973 = vmatpush2.xpose.msra.mxu0 0.0
    %1974 = vmatprep.subr.mxu0 0.0
    %1975 = vmatpush2.xpose.msra.mxu0 0.0
    %1976 = vmatprep.subr.mxu0 0.0
    %1977 = vmatpush2.xpose.msra.mxu0 0.0
    %1978 = vmatprep.subr.mxu0 0.0
    %1979 = vmatpush2.xpose.msra.mxu0 0.0
    %1980 = vmatprep.subr.mxu0 0.0
    %1981 = vmatpush2.xpose.msra.mxu0 0.0
    %1982 = vmatprep.subr.mxu0 0.0
    %1983 = vmatpush2.xpose.msra.mxu0 0.0
    %1984 = vmatprep.subr.mxu0 0.0
    %1985 = vmatpush2.xpose.msra.mxu0 0.0
    %1986 = vmatprep.subr.mxu0 0.0
    %1987 = vmatpush2.xpose.msra.mxu0 0.0
    %1988 = vmatprep.subr.mxu0 0.0
    %1989 = vmatpush2.xpose.msra.mxu0 0.0
    %1990 = vmatprep.mubr.f32.mxu0 0.0
    %1991 = vmatmul.mubr.f32.gmra.mxu0 %v1922
    %v1992 = vpop.f32.mrf.mxu0
    %v1993 = vadd.f32 0.0, %v1992
    %v1994 = vpop.f32.mrf.mxu0
    %1995 = vdwg.mxu0
    %1996 = vrot.lane.b32.xlu0 %v213, 120
    %v1997 = vpop.permute.xlu0 %1996
    %1998 = vrot.lane.b32.xlu0 %v353, 120
    %v1999 = vpop.permute.xlu0 %1998
    %v2000 = vsel %vm371, %v1997, 0
    %v2002 = vsel %vm371, %v1999, 0
    %2004 = vmatprep.subr.mxu0 0.0
    %2005 = vmatpush1.xpose.msra.mxu0 0.0
    %2006 = vmatprep.subr.mxu0 0.0
    %2007 = vmatpush1.xpose.msra.mxu0 0.0
    %2008 = vmatprep.subr.mxu0 0.0
    %2009 = vmatpush1.xpose.msra.mxu0 0.0
    %2010 = vmatprep.subr.mxu0 0.0
    %2011 = vmatpush1.xpose.msra.mxu0 0.0
    %2012 = vmatprep.subr.mxu0 0.0
    %2013 = vmatpush1.xpose.msra.mxu0 0.0
    %2014 = vmatprep.subr.mxu0 0.0
    %2015 = vmatpush1.xpose.msra.mxu0 0.0
    %2016 = vmatprep.subr.mxu0 0.0
    %2017 = vmatpush1.xpose.msra.mxu0 0.0
    %2018 = vmatprep.subr.mxu0 0.0
    %2019 = vmatpush1.xpose.msra.mxu0 0.0
    %2020 = vmatprep.subr.mxu0 0.0
    %2021 = vmatpush1.xpose.msra.mxu0 0.0
    %2022 = vmatprep.subr.mxu0 0.0
    %2023 = vmatpush1.xpose.msra.mxu0 0.0
    %2024 = vmatprep.subr.mxu0 0.0
    %2025 = vmatpush1.xpose.msra.mxu0 0.0
    %2026 = vmatprep.subr.mxu0 0.0
    %2027 = vmatpush1.xpose.msra.mxu0 0.0
    %2028 = vmatprep.subr.mxu0 0.0
    %2029 = vmatpush1.xpose.msra.mxu0 0.0
    %2030 = vmatprep.subr.mxu0 0.0
    %2031 = vmatpush1.xpose.msra.mxu0 0.0
    %2032 = vmatprep.subr.mxu0 0.0
    %2033 = vmatpush1.xpose.msra.mxu0 0.0
    %2034 = vmatprep.subr.mxu0 0.0
    %2035 = vmatpush1.xpose.msra.mxu0 %v2002
    %2036 = vmatprep.subr.mxu0 0.0
    %2037 = vmatpush2.xpose.msra.mxu0 0.0
    %2038 = vmatprep.subr.mxu0 0.0
    %2039 = vmatpush2.xpose.msra.mxu0 0.0
    %2040 = vmatprep.subr.mxu0 0.0
    %2041 = vmatpush2.xpose.msra.mxu0 0.0
    %2042 = vmatprep.subr.mxu0 0.0
    %2043 = vmatpush2.xpose.msra.mxu0 0.0
    %2044 = vmatprep.subr.mxu0 0.0
    %2045 = vmatpush2.xpose.msra.mxu0 0.0
    %2046 = vmatprep.subr.mxu0 0.0
    %2047 = vmatpush2.xpose.msra.mxu0 0.0
    %2048 = vmatprep.subr.mxu0 0.0
    %2049 = vmatpush2.xpose.msra.mxu0 0.0
    %2050 = vmatprep.subr.mxu0 0.0
    %2051 = vmatpush2.xpose.msra.mxu0 0.0
    %2052 = vmatprep.subr.mxu0 0.0
    %2053 = vmatpush2.xpose.msra.mxu0 0.0
    %2054 = vmatprep.subr.mxu0 0.0
    %2055 = vmatpush2.xpose.msra.mxu0 0.0
    %2056 = vmatprep.subr.mxu0 0.0
    %2057 = vmatpush2.xpose.msra.mxu0 0.0
    %2058 = vmatprep.subr.mxu0 0.0
    %2059 = vmatpush2.xpose.msra.mxu0 0.0
    %2060 = vmatprep.subr.mxu0 0.0
    %2061 = vmatpush2.xpose.msra.mxu0 0.0
    %2062 = vmatprep.subr.mxu0 0.0
    %2063 = vmatpush2.xpose.msra.mxu0 0.0
    %2064 = vmatprep.subr.mxu0 0.0
    %2065 = vmatpush2.xpose.msra.mxu0 0.0
    %2066 = vmatprep.subr.mxu0 0.0
    %2067 = vmatpush2.xpose.msra.mxu0 0.0
    %2068 = vmatprep.mubr.f32.mxu0 0.0
    %2069 = vmatmul.mubr.f32.gmra.mxu0 %v2000
    %v2070 = vpop.f32.mrf.mxu0
    %v2071 = vadd.f32 0.0, %v2070
    %v2072 = vpop.f32.mrf.mxu0
    %2073 = vdwg.mxu0
    %2074 = vrot.lane.b32.xlu0 %v218, 120
    %v2075 = vpop.permute.xlu0 %2074
    %2076 = vrot.lane.b32.xlu0 %v358, 120
    %v2077 = vpop.permute.xlu0 %2076
    %v2078 = vsel %vm371, %v2075, 0
    %v2080 = vsel %vm371, %v2077, 0
    %2082 = vmatprep.subr.mxu0 0.0
    %2083 = vmatpush1.xpose.msra.mxu0 0.0
    %2084 = vmatprep.subr.mxu0 0.0
    %2085 = vmatpush1.xpose.msra.mxu0 0.0
    %2086 = vmatprep.subr.mxu0 0.0
    %2087 = vmatpush1.xpose.msra.mxu0 0.0
    %2088 = vmatprep.subr.mxu0 0.0
    %2089 = vmatpush1.xpose.msra.mxu0 0.0
    %2090 = vmatprep.subr.mxu0 0.0
    %2091 = vmatpush1.xpose.msra.mxu0 0.0
    %2092 = vmatprep.subr.mxu0 0.0
    %2093 = vmatpush1.xpose.msra.mxu0 0.0
    %2094 = vmatprep.subr.mxu0 0.0
    %2095 = vmatpush1.xpose.msra.mxu0 0.0
    %2096 = vmatprep.subr.mxu0 0.0
    %2097 = vmatpush1.xpose.msra.mxu0 0.0
    %2098 = vmatprep.subr.mxu0 0.0
    %2099 = vmatpush1.xpose.msra.mxu0 0.0
    %2100 = vmatprep.subr.mxu0 0.0
    %2101 = vmatpush1.xpose.msra.mxu0 0.0
    %2102 = vmatprep.subr.mxu0 0.0
    %2103 = vmatpush1.xpose.msra.mxu0 0.0
    %2104 = vmatprep.subr.mxu0 0.0
    %2105 = vmatpush1.xpose.msra.mxu0 0.0
    %2106 = vmatprep.subr.mxu0 0.0
    %2107 = vmatpush1.xpose.msra.mxu0 0.0
    %2108 = vmatprep.subr.mxu0 0.0
    %2109 = vmatpush1.xpose.msra.mxu0 0.0
    %2110 = vmatprep.subr.mxu0 0.0
    %2111 = vmatpush1.xpose.msra.mxu0 0.0
    %2112 = vmatprep.subr.mxu0 0.0
    %2113 = vmatpush1.xpose.msra.mxu0 %v2080
    %2114 = vmatprep.subr.mxu0 0.0
    %2115 = vmatpush2.xpose.msra.mxu0 0.0
    %2116 = vmatprep.subr.mxu0 0.0
    %2117 = vmatpush2.xpose.msra.mxu0 0.0
    %2118 = vmatprep.subr.mxu0 0.0
    %2119 = vmatpush2.xpose.msra.mxu0 0.0
    %2120 = vmatprep.subr.mxu0 0.0
    %2121 = vmatpush2.xpose.msra.mxu0 0.0
    %2122 = vmatprep.subr.mxu0 0.0
    %2123 = vmatpush2.xpose.msra.mxu0 0.0
    %2124 = vmatprep.subr.mxu0 0.0
    %2125 = vmatpush2.xpose.msra.mxu0 0.0
    %2126 = vmatprep.subr.mxu0 0.0
    %2127 = vmatpush2.xpose.msra.mxu0 0.0
    %2128 = vmatprep.subr.mxu0 0.0
    %2129 = vmatpush2.xpose.msra.mxu0 0.0
    %2130 = vmatprep.subr.mxu0 0.0
    %2131 = vmatpush2.xpose.msra.mxu0 0.0
    %2132 = vmatprep.subr.mxu0 0.0
    %2133 = vmatpush2.xpose.msra.mxu0 0.0
    %2134 = vmatprep.subr.mxu0 0.0
    %2135 = vmatpush2.xpose.msra.mxu0 0.0
    %2136 = vmatprep.subr.mxu0 0.0
    %2137 = vmatpush2.xpose.msra.mxu0 0.0
    %2138 = vmatprep.subr.mxu0 0.0
    %2139 = vmatpush2.xpose.msra.mxu0 0.0
    %2140 = vmatprep.subr.mxu0 0.0
    %2141 = vmatpush2.xpose.msra.mxu0 0.0
    %2142 = vmatprep.subr.mxu0 0.0
    %2143 = vmatpush2.xpose.msra.mxu0 0.0
    %2144 = vmatprep.subr.mxu0 0.0
    %2145 = vmatpush2.xpose.msra.mxu0 0.0
    %2146 = vmatprep.mubr.f32.mxu0 0.0
    %2147 = vmatmul.mubr.f32.gmra.mxu0 %v2078
    %v2148 = vpop.f32.mrf.mxu0
    %v2149 = vadd.f32 0.0, %v2148
    %v2150 = vpop.f32.mrf.mxu0
    %2151 = vdwg.mxu0
    %2152 = vrot.lane.b32.xlu0 %v223, 120
    %v2153 = vpop.permute.xlu0 %2152
    %2154 = vrot.lane.b32.xlu0 %v363, 120
    %v2155 = vpop.permute.xlu0 %2154
    %v2156 = vsel %vm371, %v2153, 0
    %v2158 = vsel %vm371, %v2155, 0
    %2160 = vmatprep.subr.mxu0 0.0
    %2161 = vmatpush1.xpose.msra.mxu0 0.0
    %2162 = vmatprep.subr.mxu0 0.0
    %2163 = vmatpush1.xpose.msra.mxu0 0.0
    %2164 = vmatprep.subr.mxu0 0.0
    %2165 = vmatpush1.xpose.msra.mxu0 0.0
    %2166 = vmatprep.subr.mxu0 0.0
    %2167 = vmatpush1.xpose.msra.mxu0 0.0
    %2168 = vmatprep.subr.mxu0 0.0
    %2169 = vmatpush1.xpose.msra.mxu0 0.0
    %2170 = vmatprep.subr.mxu0 0.0
    %2171 = vmatpush1.xpose.msra.mxu0 0.0
    %2172 = vmatprep.subr.mxu0 0.0
    %2173 = vmatpush1.xpose.msra.mxu0 0.0
    %2174 = vmatprep.subr.mxu0 0.0
    %2175 = vmatpush1.xpose.msra.mxu0 0.0
    %2176 = vmatprep.subr.mxu0 0.0
    %2177 = vmatpush1.xpose.msra.mxu0 0.0
    %2178 = vmatprep.subr.mxu0 0.0
    %2179 = vmatpush1.xpose.msra.mxu0 0.0
    %2180 = vmatprep.subr.mxu0 0.0
    %2181 = vmatpush1.xpose.msra.mxu0 0.0
    %2182 = vmatprep.subr.mxu0 0.0
    %2183 = vmatpush1.xpose.msra.mxu0 0.0
    %2184 = vmatprep.subr.mxu0 0.0
    %2185 = vmatpush1.xpose.msra.mxu0 0.0
    %2186 = vmatprep.subr.mxu0 0.0
    %2187 = vmatpush1.xpose.msra.mxu0 0.0
    %2188 = vmatprep.subr.mxu0 0.0
    %2189 = vmatpush1.xpose.msra.mxu0 0.0
    %2190 = vmatprep.subr.mxu0 0.0
    %2191 = vmatpush1.xpose.msra.mxu0 %v2158
    %2192 = vmatprep.subr.mxu0 0.0
    %2193 = vmatpush2.xpose.msra.mxu0 0.0
    %2194 = vmatprep.subr.mxu0 0.0
    %2195 = vmatpush2.xpose.msra.mxu0 0.0
    %2196 = vmatprep.subr.mxu0 0.0
    %2197 = vmatpush2.xpose.msra.mxu0 0.0
    %2198 = vmatprep.subr.mxu0 0.0
    %2199 = vmatpush2.xpose.msra.mxu0 0.0
    %2200 = vmatprep.subr.mxu0 0.0
    %2201 = vmatpush2.xpose.msra.mxu0 0.0
    %2202 = vmatprep.subr.mxu0 0.0
    %2203 = vmatpush2.xpose.msra.mxu0 0.0
    %2204 = vmatprep.subr.mxu0 0.0
    %2205 = vmatpush2.xpose.msra.mxu0 0.0
    %2206 = vmatprep.subr.mxu0 0.0
    %2207 = vmatpush2.xpose.msra.mxu0 0.0
    %2208 = vmatprep.subr.mxu0 0.0
    %2209 = vmatpush2.xpose.msra.mxu0 0.0
    %2210 = vmatprep.subr.mxu0 0.0
    %2211 = vmatpush2.xpose.msra.mxu0 0.0
    %2212 = vmatprep.subr.mxu0 0.0
    %2213 = vmatpush2.xpose.msra.mxu0 0.0
    %2214 = vmatprep.subr.mxu0 0.0
    %2215 = vmatpush2.xpose.msra.mxu0 0.0
    %2216 = vmatprep.subr.mxu0 0.0
    %2217 = vmatpush2.xpose.msra.mxu0 0.0
    %2218 = vmatprep.subr.mxu0 0.0
    %2219 = vmatpush2.xpose.msra.mxu0 0.0
    %2220 = vmatprep.subr.mxu0 0.0
    %2221 = vmatpush2.xpose.msra.mxu0 0.0
    %2222 = vmatprep.subr.mxu0 0.0
    %2223 = vmatpush2.xpose.msra.mxu0 0.0
    %2224 = vmatprep.mubr.f32.mxu0 0.0
    %2225 = vmatmul.mubr.f32.gmra.mxu0 %v2156
    %v2226 = vpop.f32.mrf.mxu0
    %v2227 = vadd.f32 0.0, %v2226
    %v2228 = vpop.f32.mrf.mxu0
    %2229 = vdwg.mxu0
    %2230 = vrot.lane.b32.xlu0 %v228, 120
    %v2231 = vpop.permute.xlu0 %2230
    %2232 = vrot.lane.b32.xlu0 %v368, 120
    %v2233 = vpop.permute.xlu0 %2232
    %v2234 = vsel %vm371, %v2231, 0
    %v2236 = vsel %vm371, %v2233, 0
    %2238 = vmatprep.subr.mxu0 0.0
    %2239 = vmatpush1.xpose.msra.mxu0 0.0
    %2240 = vmatprep.subr.mxu0 0.0
    %2241 = vmatpush1.xpose.msra.mxu0 0.0
    %2242 = vmatprep.subr.mxu0 0.0
    %2243 = vmatpush1.xpose.msra.mxu0 0.0
    %2244 = vmatprep.subr.mxu0 0.0
    %2245 = vmatpush1.xpose.msra.mxu0 0.0
    %2246 = vmatprep.subr.mxu0 0.0
    %2247 = vmatpush1.xpose.msra.mxu0 0.0
    %2248 = vmatprep.subr.mxu0 0.0
    %2249 = vmatpush1.xpose.msra.mxu0 0.0
    %2250 = vmatprep.subr.mxu0 0.0
    %2251 = vmatpush1.xpose.msra.mxu0 0.0
    %2252 = vmatprep.subr.mxu0 0.0
    %2253 = vmatpush1.xpose.msra.mxu0 0.0
    %2254 = vmatprep.subr.mxu0 0.0
    %2255 = vmatpush1.xpose.msra.mxu0 0.0
    %2256 = vmatprep.subr.mxu0 0.0
    %2257 = vmatpush1.xpose.msra.mxu0 0.0
    %2258 = vmatprep.subr.mxu0 0.0
    %2259 = vmatpush1.xpose.msra.mxu0 0.0
    %2260 = vmatprep.subr.mxu0 0.0
    %2261 = vmatpush1.xpose.msra.mxu0 0.0
    %2262 = vmatprep.subr.mxu0 0.0
    %2263 = vmatpush1.xpose.msra.mxu0 0.0
    %2264 = vmatprep.subr.mxu0 0.0
    %2265 = vmatpush1.xpose.msra.mxu0 0.0
    %2266 = vmatprep.subr.mxu0 0.0
    %2267 = vmatpush1.xpose.msra.mxu0 0.0
    %2268 = vmatprep.subr.mxu0 0.0
    %2269 = vmatpush1.xpose.msra.mxu0 %v2236
    %2270 = vmatprep.subr.mxu0 0.0
    %2271 = vmatpush2.xpose.msra.mxu0 0.0
    %2272 = vmatprep.subr.mxu0 0.0
    %2273 = vmatpush2.xpose.msra.mxu0 0.0
    %2274 = vmatprep.subr.mxu0 0.0
    %2275 = vmatpush2.xpose.msra.mxu0 0.0
    %2276 = vmatprep.subr.mxu0 0.0
    %2277 = vmatpush2.xpose.msra.mxu0 0.0
    %2278 = vmatprep.subr.mxu0 0.0
    %2279 = vmatpush2.xpose.msra.mxu0 0.0
    %2280 = vmatprep.subr.mxu0 0.0
    %2281 = vmatpush2.xpose.msra.mxu0 0.0
    %2282 = vmatprep.subr.mxu0 0.0
    %2283 = vmatpush2.xpose.msra.mxu0 0.0
    %2284 = vmatprep.subr.mxu0 0.0
    %2285 = vmatpush2.xpose.msra.mxu0 0.0
    %2286 = vmatprep.subr.mxu0 0.0
    %2287 = vmatpush2.xpose.msra.mxu0 0.0
    %2288 = vmatprep.subr.mxu0 0.0
    %2289 = vmatpush2.xpose.msra.mxu0 0.0
    %2290 = vmatprep.subr.mxu0 0.0
    %2291 = vmatpush2.xpose.msra.mxu0 0.0
    %2292 = vmatprep.subr.mxu0 0.0
    %2293 = vmatpush2.xpose.msra.mxu0 0.0
    %2294 = vmatprep.subr.mxu0 0.0
    %2295 = vmatpush2.xpose.msra.mxu0 0.0
    %2296 = vmatprep.subr.mxu0 0.0
    %2297 = vmatpush2.xpose.msra.mxu0 0.0
    %2298 = vmatprep.subr.mxu0 0.0
    %2299 = vmatpush2.xpose.msra.mxu0 0.0
    %2300 = vmatprep.subr.mxu0 0.0
    %2301 = vmatpush2.xpose.msra.mxu0 0.0
    %2302 = vmatprep.mubr.f32.mxu0 0.0
    %2303 = vmatmul.mubr.f32.gmra.mxu0 %v2234
    %v2304 = vpop.f32.mrf.mxu0
    %v2305 = vadd.f32 0.0, %v2304
    %v2306 = vpop.f32.mrf.mxu0
    %2307 = vdwg.mxu0
    %v2308 = vmul.f32 %v1759, 0.35355338
    %v2309 = vmul.f32 %v1837, 0.35355338
    %v2310 = vmul.f32 %v1915, 0.35355338
    %v2311 = vmul.f32 %v1993, 0.35355338
    %v2312 = vmul.f32 %v2071, 0.35355338
    %v2313 = vmul.f32 %v2149, 0.35355338
    %v2314 = vmul.f32 %v2227, 0.35355338
    %v2315 = vmul.f32 %v2305, 0.35355338
    %v2316 = vsel %vm371, %v2308, -inf
    %2317 = vmax.xlane.f32.xlu0 %v2316
    %v2318 = vpop.xlane.xlu0 %2317
    %v2319 = vsel %vm371, %v2309, -inf
    %2320 = vmax.xlane.f32.xlu0 %v2319
    %v2321 = vpop.xlane.xlu0 %2320
    %v2322 = vsel %vm371, %v2310, -inf
    %2323 = vmax.xlane.f32.xlu0 %v2322
    %v2324 = vpop.xlane.xlu0 %2323
    %v2325 = vsel %vm371, %v2311, -inf
    %2326 = vmax.xlane.f32.xlu0 %v2325
    %v2327 = vpop.xlane.xlu0 %2326
    %v2328 = vsel %vm371, %v2312, -inf
    %2329 = vmax.xlane.f32.xlu0 %v2328
    %v2330 = vpop.xlane.xlu0 %2329
    %v2331 = vsel %vm371, %v2313, -inf
    %2332 = vmax.xlane.f32.xlu0 %v2331
    %v2333 = vpop.xlane.xlu0 %2332
    %v2334 = vsel %vm371, %v2314, -inf
    %2335 = vmax.xlane.f32.xlu0 %v2334
    %v2336 = vpop.xlane.xlu0 %2335
    %v2337 = vsel %vm371, %v2315, -inf
    %2338 = vmax.xlane.f32.xlu0 %v2337
    %v2339 = vpop.xlane.xlu0 %2338
    %v2340 = vsub.f32 %v2308, %v2318
    %v2341 = vsub.f32 %v2309, %v2321
    %v2342 = vsub.f32 %v2310, %v2324
    %v2343 = vsub.f32 %v2311, %v2327
    %v2344 = vsub.f32 %v2312, %v2330
    %v2345 = vsub.f32 %v2313, %v2333
    %v2346 = vsub.f32 %v2314, %v2336
    %v2347 = vsub.f32 %v2315, %v2339
    %v2348 = vmul.f32 %v2340, 1.442695
    %v2349 = vpow.pop %v2348
    %v2350 = vmul.f32 %v2341, 1.442695
    %v2351 = vpow.pop %v2350
    %v2352 = vmul.f32 %v2342, 1.442695
    %v2353 = vpow.pop %v2352
    %v2354 = vmul.f32 %v2343, 1.442695
    %v2355 = vpow.pop %v2354
    %v2356 = vmul.f32 %v2344, 1.442695
    %v2357 = vpow.pop %v2356
    %v2358 = vmul.f32 %v2345, 1.442695
    %v2359 = vpow.pop %v2358
    %v2360 = vmul.f32 %v2346, 1.442695
    %v2361 = vpow.pop %v2360
    %v2362 = vmul.f32 %v2347, 1.442695
    %v2363 = vpow.pop %v2362
    %v2364 = vsel %vm371, %v2349, 0.0
    %2365 = vadd.xlane.f32.xlu0 %v2364
    %v2366 = vpop.xlane.xlu0 %2365
    %v2367 = vsel %vm371, %v2351, 0.0
    %2368 = vadd.xlane.f32.xlu0 %v2367
    %v2369 = vpop.xlane.xlu0 %2368
    %v2370 = vsel %vm371, %v2353, 0.0
    %2371 = vadd.xlane.f32.xlu0 %v2370
    %v2372 = vpop.xlane.xlu0 %2371
    %v2373 = vsel %vm371, %v2355, 0.0
    %2374 = vadd.xlane.f32.xlu0 %v2373
    %v2375 = vpop.xlane.xlu0 %2374
    %v2376 = vsel %vm371, %v2357, 0.0
    %2377 = vadd.xlane.f32.xlu0 %v2376
    %v2378 = vpop.xlane.xlu0 %2377
    %v2379 = vsel %vm371, %v2359, 0.0
    %2380 = vadd.xlane.f32.xlu0 %v2379
    %v2381 = vpop.xlane.xlu0 %2380
    %v2382 = vsel %vm371, %v2361, 0.0
    %2383 = vadd.xlane.f32.xlu0 %v2382
    %v2384 = vpop.xlane.xlu0 %2383
    %v2385 = vsel %vm371, %v2363, 0.0
    %2386 = vadd.xlane.f32.xlu0 %v2385
    %v2387 = vpop.xlane.xlu0 %2386
    %v2388 = vrcp.pop %v2366
    %v2389 = vmul.f32 %v2349, %v2388
    %v2390 = vrcp.pop %v2369
    %v2391 = vmul.f32 %v2351, %v2390
    %v2392 = vrcp.pop %v2372
    %v2393 = vmul.f32 %v2353, %v2392
    %v2394 = vrcp.pop %v2375
    %v2395 = vmul.f32 %v2355, %v2394
    %v2396 = vrcp.pop %v2378
    %v2397 = vmul.f32 %v2357, %v2396
    %v2398 = vrcp.pop %v2381
    %v2399 = vmul.f32 %v2359, %v2398
    %v2400 = vrcp.pop %v2384
    %v2401 = vmul.f32 %v2361, %v2400
    %v2402 = vrcp.pop %v2387
    %v2403 = vmul.f32 %v2363, %v2402
    %2404 = vrot.lane.b32.xlu0 %v333, 88
    %v2405 = vpop.permute.xlu0 %2404
    %v2408 = vsel %vm371, %v2389, 0
    %2410 = vmatprep.subr.mxu0 0.0
    %2411 = vmatpush1.msra.mxu0 0.0
    %2412 = vmatprep.subr.mxu0 0.0
    %2413 = vmatpush1.msra.mxu0 0.0
    %2414 = vmatprep.subr.mxu0 0.0
    %2415 = vmatpush1.msra.mxu0 0.0
    %2416 = vmatprep.subr.mxu0 0.0
    %2417 = vmatpush1.msra.mxu0 0.0
    %2418 = vmatprep.subr.mxu0 0.0
    %2419 = vmatpush1.msra.mxu0 0.0
    %2420 = vmatprep.subr.mxu0 0.0
    %2421 = vmatpush1.msra.mxu0 0.0
    %2422 = vmatprep.subr.mxu0 0.0
    %2423 = vmatpush1.msra.mxu0 0.0
    %2424 = vmatprep.subr.mxu0 0.0
    %2425 = vmatpush1.msra.mxu0 0.0
    %2426 = vmatprep.subr.mxu0 0.0
    %2427 = vmatpush1.msra.mxu0 0.0
    %2428 = vmatprep.subr.mxu0 0.0
    %2429 = vmatpush1.msra.mxu0 0.0
    %2430 = vmatprep.subr.mxu0 0.0
    %2431 = vmatpush1.msra.mxu0 0.0
    %2432 = vmatprep.subr.mxu0 0.0
    %2433 = vmatpush1.msra.mxu0 0.0
    %2434 = vmatprep.subr.mxu0 0.0
    %2435 = vmatpush1.msra.mxu0 0.0
    %2436 = vmatprep.subr.mxu0 0.0
    %2437 = vmatpush1.msra.mxu0 0.0
    %2438 = vmatprep.subr.mxu0 0.0
    %2439 = vmatpush1.msra.mxu0 0.0
    %2440 = vmatprep.subr.mxu0 0.0
    %2441 = vmatpush1.msra.mxu0 %v2405
    %2442 = vmatprep.subr.mxu0 0.0
    %2443 = vmatpush2.msra.mxu0 0.0
    %2444 = vmatprep.subr.mxu0 0.0
    %2445 = vmatpush2.msra.mxu0 0.0
    %2446 = vmatprep.subr.mxu0 0.0
    %2447 = vmatpush2.msra.mxu0 0.0
    %2448 = vmatprep.subr.mxu0 0.0
    %2449 = vmatpush2.msra.mxu0 0.0
    %2450 = vmatprep.subr.mxu0 0.0
    %2451 = vmatpush2.msra.mxu0 0.0
    %2452 = vmatprep.subr.mxu0 0.0
    %2453 = vmatpush2.msra.mxu0 0.0
    %2454 = vmatprep.subr.mxu0 0.0
    %2455 = vmatpush2.msra.mxu0 0.0
    %2456 = vmatprep.subr.mxu0 0.0
    %2457 = vmatpush2.msra.mxu0 0.0
    %2458 = vmatprep.subr.mxu0 0.0
    %2459 = vmatpush2.msra.mxu0 0.0
    %2460 = vmatprep.subr.mxu0 0.0
    %2461 = vmatpush2.msra.mxu0 0.0
    %2462 = vmatprep.subr.mxu0 0.0
    %2463 = vmatpush2.msra.mxu0 0.0
    %2464 = vmatprep.subr.mxu0 0.0
    %2465 = vmatpush2.msra.mxu0 0.0
    %2466 = vmatprep.subr.mxu0 0.0
    %2467 = vmatpush2.msra.mxu0 0.0
    %2468 = vmatprep.subr.mxu0 0.0
    %2469 = vmatpush2.msra.mxu0 0.0
    %2470 = vmatprep.subr.mxu0 0.0
    %2471 = vmatpush2.msra.mxu0 0.0
    %2472 = vmatprep.subr.mxu0 0.0
    %2473 = vmatpush2.msra.mxu0 0.0
    %2474 = vmatprep.mubr.f32.mxu0 0.0
    %2475 = vmatmul.mubr.f32.gmra.mxu0 %v2408
    %v2476 = vpop.f32.mrf.mxu0
    %v2477 = vadd.f32 0.0, %v2476
    %v2478 = vpop.f32.mrf.mxu0
    %2479 = vdwg.mxu0
    %2480 = vrot.lane.b32.xlu0 %v338, 88
    %v2481 = vpop.permute.xlu0 %2480
    %v2484 = vsel %vm371, %v2391, 0
    %2486 = vmatprep.subr.mxu0 0.0
    %2487 = vmatpush1.msra.mxu0 0.0
    %2488 = vmatprep.subr.mxu0 0.0
    %2489 = vmatpush1.msra.mxu0 0.0
    %2490 = vmatprep.subr.mxu0 0.0
    %2491 = vmatpush1.msra.mxu0 0.0
    %2492 = vmatprep.subr.mxu0 0.0
    %2493 = vmatpush1.msra.mxu0 0.0
    %2494 = vmatprep.subr.mxu0 0.0
    %2495 = vmatpush1.msra.mxu0 0.0
    %2496 = vmatprep.subr.mxu0 0.0
    %2497 = vmatpush1.msra.mxu0 0.0
    %2498 = vmatprep.subr.mxu0 0.0
    %2499 = vmatpush1.msra.mxu0 0.0
    %2500 = vmatprep.subr.mxu0 0.0
    %2501 = vmatpush1.msra.mxu0 0.0
    %2502 = vmatprep.subr.mxu0 0.0
    %2503 = vmatpush1.msra.mxu0 0.0
    %2504 = vmatprep.subr.mxu0 0.0
    %2505 = vmatpush1.msra.mxu0 0.0
    %2506 = vmatprep.subr.mxu0 0.0
    %2507 = vmatpush1.msra.mxu0 0.0
    %2508 = vmatprep.subr.mxu0 0.0
    %2509 = vmatpush1.msra.mxu0 0.0
    %2510 = vmatprep.subr.mxu0 0.0
    %2511 = vmatpush1.msra.mxu0 0.0
    %2512 = vmatprep.subr.mxu0 0.0
    %2513 = vmatpush1.msra.mxu0 0.0
    %2514 = vmatprep.subr.mxu0 0.0
    %2515 = vmatpush1.msra.mxu0 0.0
    %2516 = vmatprep.subr.mxu0 0.0
    %2517 = vmatpush1.msra.mxu0 %v2481
    %2518 = vmatprep.subr.mxu0 0.0
    %2519 = vmatpush2.msra.mxu0 0.0
    %2520 = vmatprep.subr.mxu0 0.0
    %2521 = vmatpush2.msra.mxu0 0.0
    %2522 = vmatprep.subr.mxu0 0.0
    %2523 = vmatpush2.msra.mxu0 0.0
    %2524 = vmatprep.subr.mxu0 0.0
    %2525 = vmatpush2.msra.mxu0 0.0
    %2526 = vmatprep.subr.mxu0 0.0
    %2527 = vmatpush2.msra.mxu0 0.0
    %2528 = vmatprep.subr.mxu0 0.0
    %2529 = vmatpush2.msra.mxu0 0.0
    %2530 = vmatprep.subr.mxu0 0.0
    %2531 = vmatpush2.msra.mxu0 0.0
    %2532 = vmatprep.subr.mxu0 0.0
    %2533 = vmatpush2.msra.mxu0 0.0
    %2534 = vmatprep.subr.mxu0 0.0
    %2535 = vmatpush2.msra.mxu0 0.0
    %2536 = vmatprep.subr.mxu0 0.0
    %2537 = vmatpush2.msra.mxu0 0.0
    %2538 = vmatprep.subr.mxu0 0.0
    %2539 = vmatpush2.msra.mxu0 0.0
    %2540 = vmatprep.subr.mxu0 0.0
    %2541 = vmatpush2.msra.mxu0 0.0
    %2542 = vmatprep.subr.mxu0 0.0
    %2543 = vmatpush2.msra.mxu0 0.0
    %2544 = vmatprep.subr.mxu0 0.0
    %2545 = vmatpush2.msra.mxu0 0.0
    %2546 = vmatprep.subr.mxu0 0.0
    %2547 = vmatpush2.msra.mxu0 0.0
    %2548 = vmatprep.subr.mxu0 0.0
    %2549 = vmatpush2.msra.mxu0 0.0
    %2550 = vmatprep.mubr.f32.mxu0 0.0
    %2551 = vmatmul.mubr.f32.gmra.mxu0 %v2484
    %v2552 = vpop.f32.mrf.mxu0
    %v2553 = vadd.f32 0.0, %v2552
    %v2554 = vpop.f32.mrf.mxu0
    %2555 = vdwg.mxu0
    %2556 = vrot.lane.b32.xlu0 %v343, 88
    %v2557 = vpop.permute.xlu0 %2556
    %v2560 = vsel %vm371, %v2393, 0
    %2562 = vmatprep.subr.mxu0 0.0
    %2563 = vmatpush1.msra.mxu0 0.0
    %2564 = vmatprep.subr.mxu0 0.0
    %2565 = vmatpush1.msra.mxu0 0.0
    %2566 = vmatprep.subr.mxu0 0.0
    %2567 = vmatpush1.msra.mxu0 0.0
    %2568 = vmatprep.subr.mxu0 0.0
    %2569 = vmatpush1.msra.mxu0 0.0
    %2570 = vmatprep.subr.mxu0 0.0
    %2571 = vmatpush1.msra.mxu0 0.0
    %2572 = vmatprep.subr.mxu0 0.0
    %2573 = vmatpush1.msra.mxu0 0.0
    %2574 = vmatprep.subr.mxu0 0.0
    %2575 = vmatpush1.msra.mxu0 0.0
    %2576 = vmatprep.subr.mxu0 0.0
    %2577 = vmatpush1.msra.mxu0 0.0
    %2578 = vmatprep.subr.mxu0 0.0
    %2579 = vmatpush1.msra.mxu0 0.0
    %2580 = vmatprep.subr.mxu0 0.0
    %2581 = vmatpush1.msra.mxu0 0.0
    %2582 = vmatprep.subr.mxu0 0.0
    %2583 = vmatpush1.msra.mxu0 0.0
    %2584 = vmatprep.subr.mxu0 0.0
    %2585 = vmatpush1.msra.mxu0 0.0
    %2586 = vmatprep.subr.mxu0 0.0
    %2587 = vmatpush1.msra.mxu0 0.0
    %2588 = vmatprep.subr.mxu0 0.0
    %2589 = vmatpush1.msra.mxu0 0.0
    %2590 = vmatprep.subr.mxu0 0.0
    %2591 = vmatpush1.msra.mxu0 0.0
    %2592 = vmatprep.subr.mxu0 0.0
    %2593 = vmatpush1.msra.mxu0 %v2557
    %2594 = vmatprep.subr.mxu0 0.0
    %2595 = vmatpush2.msra.mxu0 0.0
    %2596 = vmatprep.subr.mxu0 0.0
    %2597 = vmatpush2.msra.mxu0 0.0
    %2598 = vmatprep.subr.mxu0 0.0
    %2599 = vmatpush2.msra.mxu0 0.0
    %2600 = vmatprep.subr.mxu0 0.0
    %2601 = vmatpush2.msra.mxu0 0.0
    %2602 = vmatprep.subr.mxu0 0.0
    %2603 = vmatpush2.msra.mxu0 0.0
    %2604 = vmatprep.subr.mxu0 0.0
    %2605 = vmatpush2.msra.mxu0 0.0
    %2606 = vmatprep.subr.mxu0 0.0
    %2607 = vmatpush2.msra.mxu0 0.0
    %2608 = vmatprep.subr.mxu0 0.0
    %2609 = vmatpush2.msra.mxu0 0.0
    %2610 = vmatprep.subr.mxu0 0.0
    %2611 = vmatpush2.msra.mxu0 0.0
    %2612 = vmatprep.subr.mxu0 0.0
    %2613 = vmatpush2.msra.mxu0 0.0
    %2614 = vmatprep.subr.mxu0 0.0
    %2615 = vmatpush2.msra.mxu0 0.0
    %2616 = vmatprep.subr.mxu0 0.0
    %2617 = vmatpush2.msra.mxu0 0.0
    %2618 = vmatprep.subr.mxu0 0.0
    %2619 = vmatpush2.msra.mxu0 0.0
    %2620 = vmatprep.subr.mxu0 0.0
    %2621 = vmatpush2.msra.mxu0 0.0
    %2622 = vmatprep.subr.mxu0 0.0
    %2623 = vmatpush2.msra.mxu0 0.0
    %2624 = vmatprep.subr.mxu0 0.0
    %2625 = vmatpush2.msra.mxu0 0.0
    %2626 = vmatprep.mubr.f32.mxu0 0.0
    %2627 = vmatmul.mubr.f32.gmra.mxu0 %v2560
    %v2628 = vpop.f32.mrf.mxu0
    %v2629 = vadd.f32 0.0, %v2628
    %v2630 = vpop.f32.mrf.mxu0
    %2631 = vdwg.mxu0
    %2632 = vrot.lane.b32.xlu0 %v348, 88
    %v2633 = vpop.permute.xlu0 %2632
    %v2636 = vsel %vm371, %v2395, 0
    %2638 = vmatprep.subr.mxu0 0.0
    %2639 = vmatpush1.msra.mxu0 0.0
    %2640 = vmatprep.subr.mxu0 0.0
    %2641 = vmatpush1.msra.mxu0 0.0
    %2642 = vmatprep.subr.mxu0 0.0
    %2643 = vmatpush1.msra.mxu0 0.0
    %2644 = vmatprep.subr.mxu0 0.0
    %2645 = vmatpush1.msra.mxu0 0.0
    %2646 = vmatprep.subr.mxu0 0.0
    %2647 = vmatpush1.msra.mxu0 0.0
    %2648 = vmatprep.subr.mxu0 0.0
    %2649 = vmatpush1.msra.mxu0 0.0
    %2650 = vmatprep.subr.mxu0 0.0
    %2651 = vmatpush1.msra.mxu0 0.0
    %2652 = vmatprep.subr.mxu0 0.0
    %2653 = vmatpush1.msra.mxu0 0.0
    %2654 = vmatprep.subr.mxu0 0.0
    %2655 = vmatpush1.msra.mxu0 0.0
    %2656 = vmatprep.subr.mxu0 0.0
    %2657 = vmatpush1.msra.mxu0 0.0
    %2658 = vmatprep.subr.mxu0 0.0
    %2659 = vmatpush1.msra.mxu0 0.0
    %2660 = vmatprep.subr.mxu0 0.0
    %2661 = vmatpush1.msra.mxu0 0.0
    %2662 = vmatprep.subr.mxu0 0.0
    %2663 = vmatpush1.msra.mxu0 0.0
    %2664 = vmatprep.subr.mxu0 0.0
    %2665 = vmatpush1.msra.mxu0 0.0
    %2666 = vmatprep.subr.mxu0 0.0
    %2667 = vmatpush1.msra.mxu0 0.0
    %2668 = vmatprep.subr.mxu0 0.0
    %2669 = vmatpush1.msra.mxu0 %v2633
    %2670 = vmatprep.subr.mxu0 0.0
    %2671 = vmatpush2.msra.mxu0 0.0
    %2672 = vmatprep.subr.mxu0 0.0
    %2673 = vmatpush2.msra.mxu0 0.0
    %2674 = vmatprep.subr.mxu0 0.0
    %2675 = vmatpush2.msra.mxu0 0.0
    %2676 = vmatprep.subr.mxu0 0.0
    %2677 = vmatpush2.msra.mxu0 0.0
    %2678 = vmatprep.subr.mxu0 0.0
    %2679 = vmatpush2.msra.mxu0 0.0
    %2680 = vmatprep.subr.mxu0 0.0
    %2681 = vmatpush2.msra.mxu0 0.0
    %2682 = vmatprep.subr.mxu0 0.0
    %2683 = vmatpush2.msra.mxu0 0.0
    %2684 = vmatprep.subr.mxu0 0.0
    %2685 = vmatpush2.msra.mxu0 0.0
    %2686 = vmatprep.subr.mxu0 0.0
    %2687 = vmatpush2.msra.mxu0 0.0
    %2688 = vmatprep.subr.mxu0 0.0
    %2689 = vmatpush2.msra.mxu0 0.0
    %2690 = vmatprep.subr.mxu0 0.0
    %2691 = vmatpush2.msra.mxu0 0.0
    %2692 = vmatprep.subr.mxu0 0.0
    %2693 = vmatpush2.msra.mxu0 0.0
    %2694 = vmatprep.subr.mxu0 0.0
    %2695 = vmatpush2.msra.mxu0 0.0
    %2696 = vmatprep.subr.mxu0 0.0
    %2697 = vmatpush2.msra.mxu0 0.0
    %2698 = vmatprep.subr.mxu0 0.0
    %2699 = vmatpush2.msra.mxu0 0.0
    %2700 = vmatprep.subr.mxu0 0.0
    %2701 = vmatpush2.msra.mxu0 0.0
    %2702 = vmatprep.mubr.f32.mxu0 0.0
    %2703 = vmatmul.mubr.f32.gmra.mxu0 %v2636
    %v2704 = vpop.f32.mrf.mxu0
    %v2705 = vadd.f32 0.0, %v2704
    %v2706 = vpop.f32.mrf.mxu0
    %2707 = vdwg.mxu0
    %2708 = vrot.lane.b32.xlu0 %v353, 88
    %v2709 = vpop.permute.xlu0 %2708
    %v2712 = vsel %vm371, %v2397, 0
    %2714 = vmatprep.subr.mxu0 0.0
    %2715 = vmatpush1.msra.mxu0 0.0
    %2716 = vmatprep.subr.mxu0 0.0
    %2717 = vmatpush1.msra.mxu0 0.0
    %2718 = vmatprep.subr.mxu0 0.0
    %2719 = vmatpush1.msra.mxu0 0.0
    %2720 = vmatprep.subr.mxu0 0.0
    %2721 = vmatpush1.msra.mxu0 0.0
    %2722 = vmatprep.subr.mxu0 0.0
    %2723 = vmatpush1.msra.mxu0 0.0
    %2724 = vmatprep.subr.mxu0 0.0
    %2725 = vmatpush1.msra.mxu0 0.0
    %2726 = vmatprep.subr.mxu0 0.0
    %2727 = vmatpush1.msra.mxu0 0.0
    %2728 = vmatprep.subr.mxu0 0.0
    %2729 = vmatpush1.msra.mxu0 0.0
    %2730 = vmatprep.subr.mxu0 0.0
    %2731 = vmatpush1.msra.mxu0 0.0
    %2732 = vmatprep.subr.mxu0 0.0
    %2733 = vmatpush1.msra.mxu0 0.0
    %2734 = vmatprep.subr.mxu0 0.0
    %2735 = vmatpush1.msra.mxu0 0.0
    %2736 = vmatprep.subr.mxu0 0.0
    %2737 = vmatpush1.msra.mxu0 0.0
    %2738 = vmatprep.subr.mxu0 0.0
    %2739 = vmatpush1.msra.mxu0 0.0
    %2740 = vmatprep.subr.mxu0 0.0
    %2741 = vmatpush1.msra.mxu0 0.0
    %2742 = vmatprep.subr.mxu0 0.0
    %2743 = vmatpush1.msra.mxu0 0.0
    %2744 = vmatprep.subr.mxu0 0.0
    %2745 = vmatpush1.msra.mxu0 %v2709
    %2746 = vmatprep.subr.mxu0 0.0
    %2747 = vmatpush2.msra.mxu0 0.0
    %2748 = vmatprep.subr.mxu0 0.0
    %2749 = vmatpush2.msra.mxu0 0.0
    %2750 = vmatprep.subr.mxu0 0.0
    %2751 = vmatpush2.msra.mxu0 0.0
    %2752 = vmatprep.subr.mxu0 0.0
    %2753 = vmatpush2.msra.mxu0 0.0
    %2754 = vmatprep.subr.mxu0 0.0
    %2755 = vmatpush2.msra.mxu0 0.0
    %2756 = vmatprep.subr.mxu0 0.0
    %2757 = vmatpush2.msra.mxu0 0.0
    %2758 = vmatprep.subr.mxu0 0.0
    %2759 = vmatpush2.msra.mxu0 0.0
    %2760 = vmatprep.subr.mxu0 0.0
    %2761 = vmatpush2.msra.mxu0 0.0
    %2762 = vmatprep.subr.mxu0 0.0
    %2763 = vmatpush2.msra.mxu0 0.0
    %2764 = vmatprep.subr.mxu0 0.0
    %2765 = vmatpush2.msra.mxu0 0.0
    %2766 = vmatprep.subr.mxu0 0.0
    %2767 = vmatpush2.msra.mxu0 0.0
    %2768 = vmatprep.subr.mxu0 0.0
    %2769 = vmatpush2.msra.mxu0 0.0
    %2770 = vmatprep.subr.mxu0 0.0
    %2771 = vmatpush2.msra.mxu0 0.0
    %2772 = vmatprep.subr.mxu0 0.0
    %2773 = vmatpush2.msra.mxu0 0.0
    %2774 = vmatprep.subr.mxu0 0.0
    %2775 = vmatpush2.msra.mxu0 0.0
    %2776 = vmatprep.subr.mxu0 0.0
    %2777 = vmatpush2.msra.mxu0 0.0
    %2778 = vmatprep.mubr.f32.mxu0 0.0
    %2779 = vmatmul.mubr.f32.gmra.mxu0 %v2712
    %v2780 = vpop.f32.mrf.mxu0
    %v2781 = vadd.f32 0.0, %v2780
    %v2782 = vpop.f32.mrf.mxu0
    %2783 = vdwg.mxu0
    %2784 = vrot.lane.b32.xlu0 %v358, 88
    %v2785 = vpop.permute.xlu0 %2784
    %v2788 = vsel %vm371, %v2399, 0
    %2790 = vmatprep.subr.mxu0 0.0
    %2791 = vmatpush1.msra.mxu0 0.0
    %2792 = vmatprep.subr.mxu0 0.0
    %2793 = vmatpush1.msra.mxu0 0.0
    %2794 = vmatprep.subr.mxu0 0.0
    %2795 = vmatpush1.msra.mxu0 0.0
    %2796 = vmatprep.subr.mxu0 0.0
    %2797 = vmatpush1.msra.mxu0 0.0
    %2798 = vmatprep.subr.mxu0 0.0
    %2799 = vmatpush1.msra.mxu0 0.0
    %2800 = vmatprep.subr.mxu0 0.0
    %2801 = vmatpush1.msra.mxu0 0.0
    %2802 = vmatprep.subr.mxu0 0.0
    %2803 = vmatpush1.msra.mxu0 0.0
    %2804 = vmatprep.subr.mxu0 0.0
    %2805 = vmatpush1.msra.mxu0 0.0
    %2806 = vmatprep.subr.mxu0 0.0
    %2807 = vmatpush1.msra.mxu0 0.0
    %2808 = vmatprep.subr.mxu0 0.0
    %2809 = vmatpush1.msra.mxu0 0.0
    %2810 = vmatprep.subr.mxu0 0.0
    %2811 = vmatpush1.msra.mxu0 0.0
    %2812 = vmatprep.subr.mxu0 0.0
    %2813 = vmatpush1.msra.mxu0 0.0
    %2814 = vmatprep.subr.mxu0 0.0
    %2815 = vmatpush1.msra.mxu0 0.0
    %2816 = vmatprep.subr.mxu0 0.0
    %2817 = vmatpush1.msra.mxu0 0.0
    %2818 = vmatprep.subr.mxu0 0.0
    %2819 = vmatpush1.msra.mxu0 0.0
    %2820 = vmatprep.subr.mxu0 0.0
    %2821 = vmatpush1.msra.mxu0 %v2785
    %2822 = vmatprep.subr.mxu0 0.0
    %2823 = vmatpush2.msra.mxu0 0.0
    %2824 = vmatprep.subr.mxu0 0.0
    %2825 = vmatpush2.msra.mxu0 0.0
    %2826 = vmatprep.subr.mxu0 0.0
    %2827 = vmatpush2.msra.mxu0 0.0
    %2828 = vmatprep.subr.mxu0 0.0
    %2829 = vmatpush2.msra.mxu0 0.0
    %2830 = vmatprep.subr.mxu0 0.0
    %2831 = vmatpush2.msra.mxu0 0.0
    %2832 = vmatprep.subr.mxu0 0.0
    %2833 = vmatpush2.msra.mxu0 0.0
    %2834 = vmatprep.subr.mxu0 0.0
    %2835 = vmatpush2.msra.mxu0 0.0
    %2836 = vmatprep.subr.mxu0 0.0
    %2837 = vmatpush2.msra.mxu0 0.0
    %2838 = vmatprep.subr.mxu0 0.0
    %2839 = vmatpush2.msra.mxu0 0.0
    %2840 = vmatprep.subr.mxu0 0.0
    %2841 = vmatpush2.msra.mxu0 0.0
    %2842 = vmatprep.subr.mxu0 0.0
    %2843 = vmatpush2.msra.mxu0 0.0
    %2844 = vmatprep.subr.mxu0 0.0
    %2845 = vmatpush2.msra.mxu0 0.0
    %2846 = vmatprep.subr.mxu0 0.0
    %2847 = vmatpush2.msra.mxu0 0.0
    %2848 = vmatprep.subr.mxu0 0.0
    %2849 = vmatpush2.msra.mxu0 0.0
    %2850 = vmatprep.subr.mxu0 0.0
    %2851 = vmatpush2.msra.mxu0 0.0
    %2852 = vmatprep.subr.mxu0 0.0
    %2853 = vmatpush2.msra.mxu0 0.0
    %2854 = vmatprep.mubr.f32.mxu0 0.0
    %2855 = vmatmul.mubr.f32.gmra.mxu0 %v2788
    %v2856 = vpop.f32.mrf.mxu0
    %v2857 = vadd.f32 0.0, %v2856
    %v2858 = vpop.f32.mrf.mxu0
    %2859 = vdwg.mxu0
    %2860 = vrot.lane.b32.xlu0 %v363, 88
    %v2861 = vpop.permute.xlu0 %2860
    %v2864 = vsel %vm371, %v2401, 0
    %2866 = vmatprep.subr.mxu0 0.0
    %2867 = vmatpush1.msra.mxu0 0.0
    %2868 = vmatprep.subr.mxu0 0.0
    %2869 = vmatpush1.msra.mxu0 0.0
    %2870 = vmatprep.subr.mxu0 0.0
    %2871 = vmatpush1.msra.mxu0 0.0
    %2872 = vmatprep.subr.mxu0 0.0
    %2873 = vmatpush1.msra.mxu0 0.0
    %2874 = vmatprep.subr.mxu0 0.0
    %2875 = vmatpush1.msra.mxu0 0.0
    %2876 = vmatprep.subr.mxu0 0.0
    %2877 = vmatpush1.msra.mxu0 0.0
    %2878 = vmatprep.subr.mxu0 0.0
    %2879 = vmatpush1.msra.mxu0 0.0
    %2880 = vmatprep.subr.mxu0 0.0
    %2881 = vmatpush1.msra.mxu0 0.0
    %2882 = vmatprep.subr.mxu0 0.0
    %2883 = vmatpush1.msra.mxu0 0.0
    %2884 = vmatprep.subr.mxu0 0.0
    %2885 = vmatpush1.msra.mxu0 0.0
    %2886 = vmatprep.subr.mxu0 0.0
    %2887 = vmatpush1.msra.mxu0 0.0
    %2888 = vmatprep.subr.mxu0 0.0
    %2889 = vmatpush1.msra.mxu0 0.0
    %2890 = vmatprep.subr.mxu0 0.0
    %2891 = vmatpush1.msra.mxu0 0.0
    %2892 = vmatprep.subr.mxu0 0.0
    %2893 = vmatpush1.msra.mxu0 0.0
    %2894 = vmatprep.subr.mxu0 0.0
    %2895 = vmatpush1.msra.mxu0 0.0
    %2896 = vmatprep.subr.mxu0 0.0
    %2897 = vmatpush1.msra.mxu0 %v2861
    %2898 = vmatprep.subr.mxu0 0.0
    %2899 = vmatpush2.msra.mxu0 0.0
    %2900 = vmatprep.subr.mxu0 0.0
    %2901 = vmatpush2.msra.mxu0 0.0
    %2902 = vmatprep.subr.mxu0 0.0
    %2903 = vmatpush2.msra.mxu0 0.0
    %2904 = vmatprep.subr.mxu0 0.0
    %2905 = vmatpush2.msra.mxu0 0.0
    %2906 = vmatprep.subr.mxu0 0.0
    %2907 = vmatpush2.msra.mxu0 0.0
    %2908 = vmatprep.subr.mxu0 0.0
    %2909 = vmatpush2.msra.mxu0 0.0
    %2910 = vmatprep.subr.mxu0 0.0
    %2911 = vmatpush2.msra.mxu0 0.0
    %2912 = vmatprep.subr.mxu0 0.0
    %2913 = vmatpush2.msra.mxu0 0.0
    %2914 = vmatprep.subr.mxu0 0.0
    %2915 = vmatpush2.msra.mxu0 0.0
    %2916 = vmatprep.subr.mxu0 0.0
    %2917 = vmatpush2.msra.mxu0 0.0
    %2918 = vmatprep.subr.mxu0 0.0
    %2919 = vmatpush2.msra.mxu0 0.0
    %2920 = vmatprep.subr.mxu0 0.0
    %2921 = vmatpush2.msra.mxu0 0.0
    %2922 = vmatprep.subr.mxu0 0.0
    %2923 = vmatpush2.msra.mxu0 0.0
    %2924 = vmatprep.subr.mxu0 0.0
    %2925 = vmatpush2.msra.mxu0 0.0
    %2926 = vmatprep.subr.mxu0 0.0
    %2927 = vmatpush2.msra.mxu0 0.0
    %2928 = vmatprep.subr.mxu0 0.0
    %2929 = vmatpush2.msra.mxu0 0.0
    %2930 = vmatprep.mubr.f32.mxu0 0.0
    %2931 = vmatmul.mubr.f32.gmra.mxu0 %v2864
    %v2932 = vpop.f32.mrf.mxu0
    %v2933 = vadd.f32 0.0, %v2932
    %v2934 = vpop.f32.mrf.mxu0
    %2935 = vdwg.mxu0
    %2936 = vrot.lane.b32.xlu0 %v368, 88
    %v2937 = vpop.permute.xlu0 %2936
    %v2940 = vsel %vm371, %v2403, 0
    %2942 = vmatprep.subr.mxu0 0.0
    %2943 = vmatpush1.msra.mxu0 0.0
    %2944 = vmatprep.subr.mxu0 0.0
    %2945 = vmatpush1.msra.mxu0 0.0
    %2946 = vmatprep.subr.mxu0 0.0
    %2947 = vmatpush1.msra.mxu0 0.0
    %2948 = vmatprep.subr.mxu0 0.0
    %2949 = vmatpush1.msra.mxu0 0.0
    %2950 = vmatprep.subr.mxu0 0.0
    %2951 = vmatpush1.msra.mxu0 0.0
    %2952 = vmatprep.subr.mxu0 0.0
    %2953 = vmatpush1.msra.mxu0 0.0
    %2954 = vmatprep.subr.mxu0 0.0
    %2955 = vmatpush1.msra.mxu0 0.0
    %2956 = vmatprep.subr.mxu0 0.0
    %2957 = vmatpush1.msra.mxu0 0.0
    %2958 = vmatprep.subr.mxu0 0.0
    %2959 = vmatpush1.msra.mxu0 0.0
    %2960 = vmatprep.subr.mxu0 0.0
    %2961 = vmatpush1.msra.mxu0 0.0
    %2962 = vmatprep.subr.mxu0 0.0
    %2963 = vmatpush1.msra.mxu0 0.0
    %2964 = vmatprep.subr.mxu0 0.0
    %2965 = vmatpush1.msra.mxu0 0.0
    %2966 = vmatprep.subr.mxu0 0.0
    %2967 = vmatpush1.msra.mxu0 0.0
    %2968 = vmatprep.subr.mxu0 0.0
    %2969 = vmatpush1.msra.mxu0 0.0
    %2970 = vmatprep.subr.mxu0 0.0
    %2971 = vmatpush1.msra.mxu0 0.0
    %2972 = vmatprep.subr.mxu0 0.0
    %2973 = vmatpush1.msra.mxu0 %v2937
    %2974 = vmatprep.subr.mxu0 0.0
    %2975 = vmatpush2.msra.mxu0 0.0
    %2976 = vmatprep.subr.mxu0 0.0
    %2977 = vmatpush2.msra.mxu0 0.0
    %2978 = vmatprep.subr.mxu0 0.0
    %2979 = vmatpush2.msra.mxu0 0.0
    %2980 = vmatprep.subr.mxu0 0.0
    %2981 = vmatpush2.msra.mxu0 0.0
    %2982 = vmatprep.subr.mxu0 0.0
    %2983 = vmatpush2.msra.mxu0 0.0
    %2984 = vmatprep.subr.mxu0 0.0
    %2985 = vmatpush2.msra.mxu0 0.0
    %2986 = vmatprep.subr.mxu0 0.0
    %2987 = vmatpush2.msra.mxu0 0.0
    %2988 = vmatprep.subr.mxu0 0.0
    %2989 = vmatpush2.msra.mxu0 0.0
    %2990 = vmatprep.subr.mxu0 0.0
    %2991 = vmatpush2.msra.mxu0 0.0
    %2992 = vmatprep.subr.mxu0 0.0
    %2993 = vmatpush2.msra.mxu0 0.0
    %2994 = vmatprep.subr.mxu0 0.0
    %2995 = vmatpush2.msra.mxu0 0.0
    %2996 = vmatprep.subr.mxu0 0.0
    %2997 = vmatpush2.msra.mxu0 0.0
    %2998 = vmatprep.subr.mxu0 0.0
    %2999 = vmatpush2.msra.mxu0 0.0
    %3000 = vmatprep.subr.mxu0 0.0
    %3001 = vmatpush2.msra.mxu0 0.0
    %3002 = vmatprep.subr.mxu0 0.0
    %3003 = vmatpush2.msra.mxu0 0.0
    %3004 = vmatprep.subr.mxu0 0.0
    %3005 = vmatpush2.msra.mxu0 0.0
    %3006 = vmatprep.mubr.f32.mxu0 0.0
    %3007 = vmatmul.mubr.f32.gmra.mxu0 %v2940
    %v3008 = vpop.f32.mrf.mxu0
    %v3009 = vadd.f32 0.0, %v3008
    %v3010 = vpop.f32.mrf.mxu0
    %3011 = vdwg.mxu0
    %3012 = vrot.lane.b32.xlu0 %v193, 112
    %v3013 = vpop.permute.xlu0 %3012
    %3014 = vrot.lane.b32.xlu0 %v333, 112
    %v3015 = vpop.permute.xlu0 %3014
    %v3016 = vsel %vm371, %v3013, 0
    %v3018 = vsel %vm371, %v3015, 0
    %3020 = vmatprep.subr.mxu0 0.0
    %3021 = vmatpush1.xpose.msra.mxu0 0.0
    %3022 = vmatprep.subr.mxu0 0.0
    %3023 = vmatpush1.xpose.msra.mxu0 0.0
    %3024 = vmatprep.subr.mxu0 0.0
    %3025 = vmatpush1.xpose.msra.mxu0 0.0
    %3026 = vmatprep.subr.mxu0 0.0
    %3027 = vmatpush1.xpose.msra.mxu0 0.0
    %3028 = vmatprep.subr.mxu0 0.0
    %3029 = vmatpush1.xpose.msra.mxu0 0.0
    %3030 = vmatprep.subr.mxu0 0.0
    %3031 = vmatpush1.xpose.msra.mxu0 0.0
    %3032 = vmatprep.subr.mxu0 0.0
    %3033 = vmatpush1.xpose.msra.mxu0 0.0
    %3034 = vmatprep.subr.mxu0 0.0
    %3035 = vmatpush1.xpose.msra.mxu0 0.0
    %3036 = vmatprep.subr.mxu0 0.0
    %3037 = vmatpush1.xpose.msra.mxu0 0.0
    %3038 = vmatprep.subr.mxu0 0.0
    %3039 = vmatpush1.xpose.msra.mxu0 0.0
    %3040 = vmatprep.subr.mxu0 0.0
    %3041 = vmatpush1.xpose.msra.mxu0 0.0
    %3042 = vmatprep.subr.mxu0 0.0
    %3043 = vmatpush1.xpose.msra.mxu0 0.0
    %3044 = vmatprep.subr.mxu0 0.0
    %3045 = vmatpush1.xpose.msra.mxu0 0.0
    %3046 = vmatprep.subr.mxu0 0.0
    %3047 = vmatpush1.xpose.msra.mxu0 0.0
    %3048 = vmatprep.subr.mxu0 0.0
    %3049 = vmatpush1.xpose.msra.mxu0 0.0
    %3050 = vmatprep.subr.mxu0 0.0
    %3051 = vmatpush1.xpose.msra.mxu0 %v3018
    %3052 = vmatprep.subr.mxu0 0.0
    %3053 = vmatpush2.xpose.msra.mxu0 0.0
    %3054 = vmatprep.subr.mxu0 0.0
    %3055 = vmatpush2.xpose.msra.mxu0 0.0
    %3056 = vmatprep.subr.mxu0 0.0
    %3057 = vmatpush2.xpose.msra.mxu0 0.0
    %3058 = vmatprep.subr.mxu0 0.0
    %3059 = vmatpush2.xpose.msra.mxu0 0.0
    %3060 = vmatprep.subr.mxu0 0.0
    %3061 = vmatpush2.xpose.msra.mxu0 0.0
    %3062 = vmatprep.subr.mxu0 0.0
    %3063 = vmatpush2.xpose.msra.mxu0 0.0
    %3064 = vmatprep.subr.mxu0 0.0
    %3065 = vmatpush2.xpose.msra.mxu0 0.0
    %3066 = vmatprep.subr.mxu0 0.0
    %3067 = vmatpush2.xpose.msra.mxu0 0.0
    %3068 = vmatprep.subr.mxu0 0.0
    %3069 = vmatpush2.xpose.msra.mxu0 0.0
    %3070 = vmatprep.subr.mxu0 0.0
    %3071 = vmatpush2.xpose.msra.mxu0 0.0
    %3072 = vmatprep.subr.mxu0 0.0
    %3073 = vmatpush2.xpose.msra.mxu0 0.0
    %3074 = vmatprep.subr.mxu0 0.0
    %3075 = vmatpush2.xpose.msra.mxu0 0.0
    %3076 = vmatprep.subr.mxu0 0.0
    %3077 = vmatpush2.xpose.msra.mxu0 0.0
    %3078 = vmatprep.subr.mxu0 0.0
    %3079 = vmatpush2.xpose.msra.mxu0 0.0
    %3080 = vmatprep.subr.mxu0 0.0
    %3081 = vmatpush2.xpose.msra.mxu0 0.0
    %3082 = vmatprep.subr.mxu0 0.0
    %3083 = vmatpush2.xpose.msra.mxu0 0.0
    %3084 = vmatprep.mubr.f32.mxu0 0.0
    %3085 = vmatmul.mubr.f32.gmra.mxu0 %v3016
    %v3086 = vpop.f32.mrf.mxu0
    %v3087 = vadd.f32 0.0, %v3086
    %v3088 = vpop.f32.mrf.mxu0
    %3089 = vdwg.mxu0
    %3090 = vrot.lane.b32.xlu0 %v198, 112
    %v3091 = vpop.permute.xlu0 %3090
    %3092 = vrot.lane.b32.xlu0 %v338, 112
    %v3093 = vpop.permute.xlu0 %3092
    %v3094 = vsel %vm371, %v3091, 0
    %v3096 = vsel %vm371, %v3093, 0
    %3098 = vmatprep.subr.mxu0 0.0
    %3099 = vmatpush1.xpose.msra.mxu0 0.0
    %3100 = vmatprep.subr.mxu0 0.0
    %3101 = vmatpush1.xpose.msra.mxu0 0.0
    %3102 = vmatprep.subr.mxu0 0.0
    %3103 = vmatpush1.xpose.msra.mxu0 0.0
    %3104 = vmatprep.subr.mxu0 0.0
    %3105 = vmatpush1.xpose.msra.mxu0 0.0
    %3106 = vmatprep.subr.mxu0 0.0
    %3107 = vmatpush1.xpose.msra.mxu0 0.0
    %3108 = vmatprep.subr.mxu0 0.0
    %3109 = vmatpush1.xpose.msra.mxu0 0.0
    %3110 = vmatprep.subr.mxu0 0.0
    %3111 = vmatpush1.xpose.msra.mxu0 0.0
    %3112 = vmatprep.subr.mxu0 0.0
    %3113 = vmatpush1.xpose.msra.mxu0 0.0
    %3114 = vmatprep.subr.mxu0 0.0
    %3115 = vmatpush1.xpose.msra.mxu0 0.0
    %3116 = vmatprep.subr.mxu0 0.0
    %3117 = vmatpush1.xpose.msra.mxu0 0.0
    %3118 = vmatprep.subr.mxu0 0.0
    %3119 = vmatpush1.xpose.msra.mxu0 0.0
    %3120 = vmatprep.subr.mxu0 0.0
    %3121 = vmatpush1.xpose.msra.mxu0 0.0
    %3122 = vmatprep.subr.mxu0 0.0
    %3123 = vmatpush1.xpose.msra.mxu0 0.0
    %3124 = vmatprep.subr.mxu0 0.0
    %3125 = vmatpush1.xpose.msra.mxu0 0.0
    %3126 = vmatprep.subr.mxu0 0.0
    %3127 = vmatpush1.xpose.msra.mxu0 0.0
    %3128 = vmatprep.subr.mxu0 0.0
    %3129 = vmatpush1.xpose.msra.mxu0 %v3096
    %3130 = vmatprep.subr.mxu0 0.0
    %3131 = vmatpush2.xpose.msra.mxu0 0.0
    %3132 = vmatprep.subr.mxu0 0.0
    %3133 = vmatpush2.xpose.msra.mxu0 0.0
    %3134 = vmatprep.subr.mxu0 0.0
    %3135 = vmatpush2.xpose.msra.mxu0 0.0
    %3136 = vmatprep.subr.mxu0 0.0
    %3137 = vmatpush2.xpose.msra.mxu0 0.0
    %3138 = vmatprep.subr.mxu0 0.0
    %3139 = vmatpush2.xpose.msra.mxu0 0.0
    %3140 = vmatprep.subr.mxu0 0.0
    %3141 = vmatpush2.xpose.msra.mxu0 0.0
    %3142 = vmatprep.subr.mxu0 0.0
    %3143 = vmatpush2.xpose.msra.mxu0 0.0
    %3144 = vmatprep.subr.mxu0 0.0
    %3145 = vmatpush2.xpose.msra.mxu0 0.0
    %3146 = vmatprep.subr.mxu0 0.0
    %3147 = vmatpush2.xpose.msra.mxu0 0.0
    %3148 = vmatprep.subr.mxu0 0.0
    %3149 = vmatpush2.xpose.msra.mxu0 0.0
    %3150 = vmatprep.subr.mxu0 0.0
    %3151 = vmatpush2.xpose.msra.mxu0 0.0
    %3152 = vmatprep.subr.mxu0 0.0
    %3153 = vmatpush2.xpose.msra.mxu0 0.0
    %3154 = vmatprep.subr.mxu0 0.0
    %3155 = vmatpush2.xpose.msra.mxu0 0.0
    %3156 = vmatprep.subr.mxu0 0.0
    %3157 = vmatpush2.xpose.msra.mxu0 0.0
    %3158 = vmatprep.subr.mxu0 0.0
    %3159 = vmatpush2.xpose.msra.mxu0 0.0
    %3160 = vmatprep.subr.mxu0 0.0
    %3161 = vmatpush2.xpose.msra.mxu0 0.0
    %3162 = vmatprep.mubr.f32.mxu0 0.0
    %3163 = vmatmul.mubr.f32.gmra.mxu0 %v3094
    %v3164 = vpop.f32.mrf.mxu0
    %v3165 = vadd.f32 0.0, %v3164
    %v3166 = vpop.f32.mrf.mxu0
    %3167 = vdwg.mxu0
    %3168 = vrot.lane.b32.xlu0 %v203, 112
    %v3169 = vpop.permute.xlu0 %3168
    %3170 = vrot.lane.b32.xlu0 %v343, 112
    %v3171 = vpop.permute.xlu0 %3170
    %v3172 = vsel %vm371, %v3169, 0
    %v3174 = vsel %vm371, %v3171, 0
    %3176 = vmatprep.subr.mxu0 0.0
    %3177 = vmatpush1.xpose.msra.mxu0 0.0
    %3178 = vmatprep.subr.mxu0 0.0
    %3179 = vmatpush1.xpose.msra.mxu0 0.0
    %3180 = vmatprep.subr.mxu0 0.0
    %3181 = vmatpush1.xpose.msra.mxu0 0.0
    %3182 = vmatprep.subr.mxu0 0.0
    %3183 = vmatpush1.xpose.msra.mxu0 0.0
    %3184 = vmatprep.subr.mxu0 0.0
    %3185 = vmatpush1.xpose.msra.mxu0 0.0
    %3186 = vmatprep.subr.mxu0 0.0
    %3187 = vmatpush1.xpose.msra.mxu0 0.0
    %3188 = vmatprep.subr.mxu0 0.0
    %3189 = vmatpush1.xpose.msra.mxu0 0.0
    %3190 = vmatprep.subr.mxu0 0.0
    %3191 = vmatpush1.xpose.msra.mxu0 0.0
    %3192 = vmatprep.subr.mxu0 0.0
    %3193 = vmatpush1.xpose.msra.mxu0 0.0
    %3194 = vmatprep.subr.mxu0 0.0
    %3195 = vmatpush1.xpose.msra.mxu0 0.0
    %3196 = vmatprep.subr.mxu0 0.0
    %3197 = vmatpush1.xpose.msra.mxu0 0.0
    %3198 = vmatprep.subr.mxu0 0.0
    %3199 = vmatpush1.xpose.msra.mxu0 0.0
    %3200 = vmatprep.subr.mxu0 0.0
    %3201 = vmatpush1.xpose.msra.mxu0 0.0
    %3202 = vmatprep.subr.mxu0 0.0
    %3203 = vmatpush1.xpose.msra.mxu0 0.0
    %3204 = vmatprep.subr.mxu0 0.0
    %3205 = vmatpush1.xpose.msra.mxu0 0.0
    %3206 = vmatprep.subr.mxu0 0.0
    %3207 = vmatpush1.xpose.msra.mxu0 %v3174
    %3208 = vmatprep.subr.mxu0 0.0
    %3209 = vmatpush2.xpose.msra.mxu0 0.0
    %3210 = vmatprep.subr.mxu0 0.0
    %3211 = vmatpush2.xpose.msra.mxu0 0.0
    %3212 = vmatprep.subr.mxu0 0.0
    %3213 = vmatpush2.xpose.msra.mxu0 0.0
    %3214 = vmatprep.subr.mxu0 0.0
    %3215 = vmatpush2.xpose.msra.mxu0 0.0
    %3216 = vmatprep.subr.mxu0 0.0
    %3217 = vmatpush2.xpose.msra.mxu0 0.0
    %3218 = vmatprep.subr.mxu0 0.0
    %3219 = vmatpush2.xpose.msra.mxu0 0.0
    %3220 = vmatprep.subr.mxu0 0.0
    %3221 = vmatpush2.xpose.msra.mxu0 0.0
    %3222 = vmatprep.subr.mxu0 0.0
    %3223 = vmatpush2.xpose.msra.mxu0 0.0
    %3224 = vmatprep.subr.mxu0 0.0
    %3225 = vmatpush2.xpose.msra.mxu0 0.0
    %3226 = vmatprep.subr.mxu0 0.0
    %3227 = vmatpush2.xpose.msra.mxu0 0.0
    %3228 = vmatprep.subr.mxu0 0.0
    %3229 = vmatpush2.xpose.msra.mxu0 0.0
    %3230 = vmatprep.subr.mxu0 0.0
    %3231 = vmatpush2.xpose.msra.mxu0 0.0
    %3232 = vmatprep.subr.mxu0 0.0
    %3233 = vmatpush2.xpose.msra.mxu0 0.0
    %3234 = vmatprep.subr.mxu0 0.0
    %3235 = vmatpush2.xpose.msra.mxu0 0.0
    %3236 = vmatprep.subr.mxu0 0.0
    %3237 = vmatpush2.xpose.msra.mxu0 0.0
    %3238 = vmatprep.subr.mxu0 0.0
    %3239 = vmatpush2.xpose.msra.mxu0 0.0
    %3240 = vmatprep.mubr.f32.mxu0 0.0
    %3241 = vmatmul.mubr.f32.gmra.mxu0 %v3172
    %v3242 = vpop.f32.mrf.mxu0
    %v3243 = vadd.f32 0.0, %v3242
    %v3244 = vpop.f32.mrf.mxu0
    %3245 = vdwg.mxu0
    %3246 = vrot.lane.b32.xlu0 %v208, 112
    %v3247 = vpop.permute.xlu0 %3246
    %3248 = vrot.lane.b32.xlu0 %v348, 112
    %v3249 = vpop.permute.xlu0 %3248
    %v3250 = vsel %vm371, %v3247, 0
    %v3252 = vsel %vm371, %v3249, 0
    %3254 = vmatprep.subr.mxu0 0.0
    %3255 = vmatpush1.xpose.msra.mxu0 0.0
    %3256 = vmatprep.subr.mxu0 0.0
    %3257 = vmatpush1.xpose.msra.mxu0 0.0
    %3258 = vmatprep.subr.mxu0 0.0
    %3259 = vmatpush1.xpose.msra.mxu0 0.0
    %3260 = vmatprep.subr.mxu0 0.0
    %3261 = vmatpush1.xpose.msra.mxu0 0.0
    %3262 = vmatprep.subr.mxu0 0.0
    %3263 = vmatpush1.xpose.msra.mxu0 0.0
    %3264 = vmatprep.subr.mxu0 0.0
    %3265 = vmatpush1.xpose.msra.mxu0 0.0
    %3266 = vmatprep.subr.mxu0 0.0
    %3267 = vmatpush1.xpose.msra.mxu0 0.0
    %3268 = vmatprep.subr.mxu0 0.0
    %3269 = vmatpush1.xpose.msra.mxu0 0.0
    %3270 = vmatprep.subr.mxu0 0.0
    %3271 = vmatpush1.xpose.msra.mxu0 0.0
    %3272 = vmatprep.subr.mxu0 0.0
    %3273 = vmatpush1.xpose.msra.mxu0 0.0
    %3274 = vmatprep.subr.mxu0 0.0
    %3275 = vmatpush1.xpose.msra.mxu0 0.0
    %3276 = vmatprep.subr.mxu0 0.0
    %3277 = vmatpush1.xpose.msra.mxu0 0.0
    %3278 = vmatprep.subr.mxu0 0.0
    %3279 = vmatpush1.xpose.msra.mxu0 0.0
    %3280 = vmatprep.subr.mxu0 0.0
    %3281 = vmatpush1.xpose.msra.mxu0 0.0
    %3282 = vmatprep.subr.mxu0 0.0
    %3283 = vmatpush1.xpose.msra.mxu0 0.0
    %3284 = vmatprep.subr.mxu0 0.0
    %3285 = vmatpush1.xpose.msra.mxu0 %v3252
    %3286 = vmatprep.subr.mxu0 0.0
    %3287 = vmatpush2.xpose.msra.mxu0 0.0
    %3288 = vmatprep.subr.mxu0 0.0
    %3289 = vmatpush2.xpose.msra.mxu0 0.0
    %3290 = vmatprep.subr.mxu0 0.0
    %3291 = vmatpush2.xpose.msra.mxu0 0.0
    %3292 = vmatprep.subr.mxu0 0.0
    %3293 = vmatpush2.xpose.msra.mxu0 0.0
    %3294 = vmatprep.subr.mxu0 0.0
    %3295 = vmatpush2.xpose.msra.mxu0 0.0
    %3296 = vmatprep.subr.mxu0 0.0
    %3297 = vmatpush2.xpose.msra.mxu0 0.0
    %3298 = vmatprep.subr.mxu0 0.0
    %3299 = vmatpush2.xpose.msra.mxu0 0.0
    %3300 = vmatprep.subr.mxu0 0.0
    %3301 = vmatpush2.xpose.msra.mxu0 0.0
    %3302 = vmatprep.subr.mxu0 0.0
    %3303 = vmatpush2.xpose.msra.mxu0 0.0
    %3304 = vmatprep.subr.mxu0 0.0
    %3305 = vmatpush2.xpose.msra.mxu0 0.0
    %3306 = vmatprep.subr.mxu0 0.0
    %3307 = vmatpush2.xpose.msra.mxu0 0.0
    %3308 = vmatprep.subr.mxu0 0.0
    %3309 = vmatpush2.xpose.msra.mxu0 0.0
    %3310 = vmatprep.subr.mxu0 0.0
    %3311 = vmatpush2.xpose.msra.mxu0 0.0
    %3312 = vmatprep.subr.mxu0 0.0
    %3313 = vmatpush2.xpose.msra.mxu0 0.0
    %3314 = vmatprep.subr.mxu0 0.0
    %3315 = vmatpush2.xpose.msra.mxu0 0.0
    %3316 = vmatprep.subr.mxu0 0.0
    %3317 = vmatpush2.xpose.msra.mxu0 0.0
    %3318 = vmatprep.mubr.f32.mxu0 0.0
    %3319 = vmatmul.mubr.f32.gmra.mxu0 %v3250
    %v3320 = vpop.f32.mrf.mxu0
    %v3321 = vadd.f32 0.0, %v3320
    %v3322 = vpop.f32.mrf.mxu0
    %3323 = vdwg.mxu0
    %3324 = vrot.lane.b32.xlu0 %v213, 112
    %v3325 = vpop.permute.xlu0 %3324
    %3326 = vrot.lane.b32.xlu0 %v353, 112
    %v3327 = vpop.permute.xlu0 %3326
    %v3328 = vsel %vm371, %v3325, 0
    %v3330 = vsel %vm371, %v3327, 0
    %3332 = vmatprep.subr.mxu0 0.0
    %3333 = vmatpush1.xpose.msra.mxu0 0.0
    %3334 = vmatprep.subr.mxu0 0.0
    %3335 = vmatpush1.xpose.msra.mxu0 0.0
    %3336 = vmatprep.subr.mxu0 0.0
    %3337 = vmatpush1.xpose.msra.mxu0 0.0
    %3338 = vmatprep.subr.mxu0 0.0
    %3339 = vmatpush1.xpose.msra.mxu0 0.0
    %3340 = vmatprep.subr.mxu0 0.0
    %3341 = vmatpush1.xpose.msra.mxu0 0.0
    %3342 = vmatprep.subr.mxu0 0.0
    %3343 = vmatpush1.xpose.msra.mxu0 0.0
    %3344 = vmatprep.subr.mxu0 0.0
    %3345 = vmatpush1.xpose.msra.mxu0 0.0
    %3346 = vmatprep.subr.mxu0 0.0
    %3347 = vmatpush1.xpose.msra.mxu0 0.0
    %3348 = vmatprep.subr.mxu0 0.0
    %3349 = vmatpush1.xpose.msra.mxu0 0.0
    %3350 = vmatprep.subr.mxu0 0.0
    %3351 = vmatpush1.xpose.msra.mxu0 0.0
    %3352 = vmatprep.subr.mxu0 0.0
    %3353 = vmatpush1.xpose.msra.mxu0 0.0
    %3354 = vmatprep.subr.mxu0 0.0
    %3355 = vmatpush1.xpose.msra.mxu0 0.0
    %3356 = vmatprep.subr.mxu0 0.0
    %3357 = vmatpush1.xpose.msra.mxu0 0.0
    %3358 = vmatprep.subr.mxu0 0.0
    %3359 = vmatpush1.xpose.msra.mxu0 0.0
    %3360 = vmatprep.subr.mxu0 0.0
    %3361 = vmatpush1.xpose.msra.mxu0 0.0
    %3362 = vmatprep.subr.mxu0 0.0
    %3363 = vmatpush1.xpose.msra.mxu0 %v3330
    %3364 = vmatprep.subr.mxu0 0.0
    %3365 = vmatpush2.xpose.msra.mxu0 0.0
    %3366 = vmatprep.subr.mxu0 0.0
    %3367 = vmatpush2.xpose.msra.mxu0 0.0
    %3368 = vmatprep.subr.mxu0 0.0
    %3369 = vmatpush2.xpose.msra.mxu0 0.0
    %3370 = vmatprep.subr.mxu0 0.0
    %3371 = vmatpush2.xpose.msra.mxu0 0.0
    %3372 = vmatprep.subr.mxu0 0.0
    %3373 = vmatpush2.xpose.msra.mxu0 0.0
    %3374 = vmatprep.subr.mxu0 0.0
    %3375 = vmatpush2.xpose.msra.mxu0 0.0
    %3376 = vmatprep.subr.mxu0 0.0
    %3377 = vmatpush2.xpose.msra.mxu0 0.0
    %3378 = vmatprep.subr.mxu0 0.0
    %3379 = vmatpush2.xpose.msra.mxu0 0.0
    %3380 = vmatprep.subr.mxu0 0.0
    %3381 = vmatpush2.xpose.msra.mxu0 0.0
    %3382 = vmatprep.subr.mxu0 0.0
    %3383 = vmatpush2.xpose.msra.mxu0 0.0
    %3384 = vmatprep.subr.mxu0 0.0
    %3385 = vmatpush2.xpose.msra.mxu0 0.0
    %3386 = vmatprep.subr.mxu0 0.0
    %3387 = vmatpush2.xpose.msra.mxu0 0.0
    %3388 = vmatprep.subr.mxu0 0.0
    %3389 = vmatpush2.xpose.msra.mxu0 0.0
    %3390 = vmatprep.subr.mxu0 0.0
    %3391 = vmatpush2.xpose.msra.mxu0 0.0
    %3392 = vmatprep.subr.mxu0 0.0
    %3393 = vmatpush2.xpose.msra.mxu0 0.0
    %3394 = vmatprep.subr.mxu0 0.0
    %3395 = vmatpush2.xpose.msra.mxu0 0.0
    %3396 = vmatprep.mubr.f32.mxu0 0.0
    %3397 = vmatmul.mubr.f32.gmra.mxu0 %v3328
    %v3398 = vpop.f32.mrf.mxu0
    %v3399 = vadd.f32 0.0, %v3398
    %v3400 = vpop.f32.mrf.mxu0
    %3401 = vdwg.mxu0
    %3402 = vrot.lane.b32.xlu0 %v218, 112
    %v3403 = vpop.permute.xlu0 %3402
    %3404 = vrot.lane.b32.xlu0 %v358, 112
    %v3405 = vpop.permute.xlu0 %3404
    %v3406 = vsel %vm371, %v3403, 0
    %v3408 = vsel %vm371, %v3405, 0
    %3410 = vmatprep.subr.mxu0 0.0
    %3411 = vmatpush1.xpose.msra.mxu0 0.0
    %3412 = vmatprep.subr.mxu0 0.0
    %3413 = vmatpush1.xpose.msra.mxu0 0.0
    %3414 = vmatprep.subr.mxu0 0.0
    %3415 = vmatpush1.xpose.msra.mxu0 0.0
    %3416 = vmatprep.subr.mxu0 0.0
    %3417 = vmatpush1.xpose.msra.mxu0 0.0
    %3418 = vmatprep.subr.mxu0 0.0
    %3419 = vmatpush1.xpose.msra.mxu0 0.0
    %3420 = vmatprep.subr.mxu0 0.0
    %3421 = vmatpush1.xpose.msra.mxu0 0.0
    %3422 = vmatprep.subr.mxu0 0.0
    %3423 = vmatpush1.xpose.msra.mxu0 0.0
    %3424 = vmatprep.subr.mxu0 0.0
    %3425 = vmatpush1.xpose.msra.mxu0 0.0
    %3426 = vmatprep.subr.mxu0 0.0
    %3427 = vmatpush1.xpose.msra.mxu0 0.0
    %3428 = vmatprep.subr.mxu0 0.0
    %3429 = vmatpush1.xpose.msra.mxu0 0.0
    %3430 = vmatprep.subr.mxu0 0.0
    %3431 = vmatpush1.xpose.msra.mxu0 0.0
    %3432 = vmatprep.subr.mxu0 0.0
    %3433 = vmatpush1.xpose.msra.mxu0 0.0
    %3434 = vmatprep.subr.mxu0 0.0
    %3435 = vmatpush1.xpose.msra.mxu0 0.0
    %3436 = vmatprep.subr.mxu0 0.0
    %3437 = vmatpush1.xpose.msra.mxu0 0.0
    %3438 = vmatprep.subr.mxu0 0.0
    %3439 = vmatpush1.xpose.msra.mxu0 0.0
    %3440 = vmatprep.subr.mxu0 0.0
    %3441 = vmatpush1.xpose.msra.mxu0 %v3408
    %3442 = vmatprep.subr.mxu0 0.0
    %3443 = vmatpush2.xpose.msra.mxu0 0.0
    %3444 = vmatprep.subr.mxu0 0.0
    %3445 = vmatpush2.xpose.msra.mxu0 0.0
    %3446 = vmatprep.subr.mxu0 0.0
    %3447 = vmatpush2.xpose.msra.mxu0 0.0
    %3448 = vmatprep.subr.mxu0 0.0
    %3449 = vmatpush2.xpose.msra.mxu0 0.0
    %3450 = vmatprep.subr.mxu0 0.0
    %3451 = vmatpush2.xpose.msra.mxu0 0.0
    %3452 = vmatprep.subr.mxu0 0.0
    %3453 = vmatpush2.xpose.msra.mxu0 0.0
    %3454 = vmatprep.subr.mxu0 0.0
    %3455 = vmatpush2.xpose.msra.mxu0 0.0
    %3456 = vmatprep.subr.mxu0 0.0
    %3457 = vmatpush2.xpose.msra.mxu0 0.0
    %3458 = vmatprep.subr.mxu0 0.0
    %3459 = vmatpush2.xpose.msra.mxu0 0.0
    %3460 = vmatprep.subr.mxu0 0.0
    %3461 = vmatpush2.xpose.msra.mxu0 0.0
    %3462 = vmatprep.subr.mxu0 0.0
    %3463 = vmatpush2.xpose.msra.mxu0 0.0
    %3464 = vmatprep.subr.mxu0 0.0
    %3465 = vmatpush2.xpose.msra.mxu0 0.0
    %3466 = vmatprep.subr.mxu0 0.0
    %3467 = vmatpush2.xpose.msra.mxu0 0.0
    %3468 = vmatprep.subr.mxu0 0.0
    %3469 = vmatpush2.xpose.msra.mxu0 0.0
    %3470 = vmatprep.subr.mxu0 0.0
    %3471 = vmatpush2.xpose.msra.mxu0 0.0
    %3472 = vmatprep.subr.mxu0 0.0
    %3473 = vmatpush2.xpose.msra.mxu0 0.0
    %3474 = vmatprep.mubr.f32.mxu0 0.0
    %3475 = vmatmul.mubr.f32.gmra.mxu0 %v3406
    %v3476 = vpop.f32.mrf.mxu0
    %v3477 = vadd.f32 0.0, %v3476
    %v3478 = vpop.f32.mrf.mxu0
    %3479 = vdwg.mxu0
    %3480 = vrot.lane.b32.xlu0 %v223, 112
    %v3481 = vpop.permute.xlu0 %3480
    %3482 = vrot.lane.b32.xlu0 %v363, 112
    %v3483 = vpop.permute.xlu0 %3482
    %v3484 = vsel %vm371, %v3481, 0
    %v3486 = vsel %vm371, %v3483, 0
    %3488 = vmatprep.subr.mxu0 0.0
    %3489 = vmatpush1.xpose.msra.mxu0 0.0
    %3490 = vmatprep.subr.mxu0 0.0
    %3491 = vmatpush1.xpose.msra.mxu0 0.0
    %3492 = vmatprep.subr.mxu0 0.0
    %3493 = vmatpush1.xpose.msra.mxu0 0.0
    %3494 = vmatprep.subr.mxu0 0.0
    %3495 = vmatpush1.xpose.msra.mxu0 0.0
    %3496 = vmatprep.subr.mxu0 0.0
    %3497 = vmatpush1.xpose.msra.mxu0 0.0
    %3498 = vmatprep.subr.mxu0 0.0
    %3499 = vmatpush1.xpose.msra.mxu0 0.0
    %3500 = vmatprep.subr.mxu0 0.0
    %3501 = vmatpush1.xpose.msra.mxu0 0.0
    %3502 = vmatprep.subr.mxu0 0.0
    %3503 = vmatpush1.xpose.msra.mxu0 0.0
    %3504 = vmatprep.subr.mxu0 0.0
    %3505 = vmatpush1.xpose.msra.mxu0 0.0
    %3506 = vmatprep.subr.mxu0 0.0
    %3507 = vmatpush1.xpose.msra.mxu0 0.0
    %3508 = vmatprep.subr.mxu0 0.0
    %3509 = vmatpush1.xpose.msra.mxu0 0.0
    %3510 = vmatprep.subr.mxu0 0.0
    %3511 = vmatpush1.xpose.msra.mxu0 0.0
    %3512 = vmatprep.subr.mxu0 0.0
    %3513 = vmatpush1.xpose.msra.mxu0 0.0
    %3514 = vmatprep.subr.mxu0 0.0
    %3515 = vmatpush1.xpose.msra.mxu0 0.0
    %3516 = vmatprep.subr.mxu0 0.0
    %3517 = vmatpush1.xpose.msra.mxu0 0.0
    %3518 = vmatprep.subr.mxu0 0.0
    %3519 = vmatpush1.xpose.msra.mxu0 %v3486
    %3520 = vmatprep.subr.mxu0 0.0
    %3521 = vmatpush2.xpose.msra.mxu0 0.0
    %3522 = vmatprep.subr.mxu0 0.0
    %3523 = vmatpush2.xpose.msra.mxu0 0.0
    %3524 = vmatprep.subr.mxu0 0.0
    %3525 = vmatpush2.xpose.msra.mxu0 0.0
    %3526 = vmatprep.subr.mxu0 0.0
    %3527 = vmatpush2.xpose.msra.mxu0 0.0
    %3528 = vmatprep.subr.mxu0 0.0
    %3529 = vmatpush2.xpose.msra.mxu0 0.0
    %3530 = vmatprep.subr.mxu0 0.0
    %3531 = vmatpush2.xpose.msra.mxu0 0.0
    %3532 = vmatprep.subr.mxu0 0.0
    %3533 = vmatpush2.xpose.msra.mxu0 0.0
    %3534 = vmatprep.subr.mxu0 0.0
    %3535 = vmatpush2.xpose.msra.mxu0 0.0
    %3536 = vmatprep.subr.mxu0 0.0
    %3537 = vmatpush2.xpose.msra.mxu0 0.0
    %3538 = vmatprep.subr.mxu0 0.0
    %3539 = vmatpush2.xpose.msra.mxu0 0.0
    %3540 = vmatprep.subr.mxu0 0.0
    %3541 = vmatpush2.xpose.msra.mxu0 0.0
    %3542 = vmatprep.subr.mxu0 0.0
    %3543 = vmatpush2.xpose.msra.mxu0 0.0
    %3544 = vmatprep.subr.mxu0 0.0
    %3545 = vmatpush2.xpose.msra.mxu0 0.0
    %3546 = vmatprep.subr.mxu0 0.0
    %3547 = vmatpush2.xpose.msra.mxu0 0.0
    %3548 = vmatprep.subr.mxu0 0.0
    %3549 = vmatpush2.xpose.msra.mxu0 0.0
    %3550 = vmatprep.subr.mxu0 0.0
    %3551 = vmatpush2.xpose.msra.mxu0 0.0
    %3552 = vmatprep.mubr.f32.mxu0 0.0
    %3553 = vmatmul.mubr.f32.gmra.mxu0 %v3484
    %v3554 = vpop.f32.mrf.mxu0
    %v3555 = vadd.f32 0.0, %v3554
    %v3556 = vpop.f32.mrf.mxu0
    %3557 = vdwg.mxu0
    %3558 = vrot.lane.b32.xlu0 %v228, 112
    %v3559 = vpop.permute.xlu0 %3558
    %3560 = vrot.lane.b32.xlu0 %v368, 112
    %v3561 = vpop.permute.xlu0 %3560
    %v3562 = vsel %vm371, %v3559, 0
    %v3564 = vsel %vm371, %v3561, 0
    %3566 = vmatprep.subr.mxu0 0.0
    %3567 = vmatpush1.xpose.msra.mxu0 0.0
    %3568 = vmatprep.subr.mxu0 0.0
    %3569 = vmatpush1.xpose.msra.mxu0 0.0
    %3570 = vmatprep.subr.mxu0 0.0
    %3571 = vmatpush1.xpose.msra.mxu0 0.0
    %3572 = vmatprep.subr.mxu0 0.0
    %3573 = vmatpush1.xpose.msra.mxu0 0.0
    %3574 = vmatprep.subr.mxu0 0.0
    %3575 = vmatpush1.xpose.msra.mxu0 0.0
    %3576 = vmatprep.subr.mxu0 0.0
    %3577 = vmatpush1.xpose.msra.mxu0 0.0
    %3578 = vmatprep.subr.mxu0 0.0
    %3579 = vmatpush1.xpose.msra.mxu0 0.0
    %3580 = vmatprep.subr.mxu0 0.0
    %3581 = vmatpush1.xpose.msra.mxu0 0.0
    %3582 = vmatprep.subr.mxu0 0.0
    %3583 = vmatpush1.xpose.msra.mxu0 0.0
    %3584 = vmatprep.subr.mxu0 0.0
    %3585 = vmatpush1.xpose.msra.mxu0 0.0
    %3586 = vmatprep.subr.mxu0 0.0
    %3587 = vmatpush1.xpose.msra.mxu0 0.0
    %3588 = vmatprep.subr.mxu0 0.0
    %3589 = vmatpush1.xpose.msra.mxu0 0.0
    %3590 = vmatprep.subr.mxu0 0.0
    %3591 = vmatpush1.xpose.msra.mxu0 0.0
    %3592 = vmatprep.subr.mxu0 0.0
    %3593 = vmatpush1.xpose.msra.mxu0 0.0
    %3594 = vmatprep.subr.mxu0 0.0
    %3595 = vmatpush1.xpose.msra.mxu0 0.0
    %3596 = vmatprep.subr.mxu0 0.0
    %3597 = vmatpush1.xpose.msra.mxu0 %v3564
    %3598 = vmatprep.subr.mxu0 0.0
    %3599 = vmatpush2.xpose.msra.mxu0 0.0
    %3600 = vmatprep.subr.mxu0 0.0
    %3601 = vmatpush2.xpose.msra.mxu0 0.0
    %3602 = vmatprep.subr.mxu0 0.0
    %3603 = vmatpush2.xpose.msra.mxu0 0.0
    %3604 = vmatprep.subr.mxu0 0.0
    %3605 = vmatpush2.xpose.msra.mxu0 0.0
    %3606 = vmatprep.subr.mxu0 0.0
    %3607 = vmatpush2.xpose.msra.mxu0 0.0
    %3608 = vmatprep.subr.mxu0 0.0
    %3609 = vmatpush2.xpose.msra.mxu0 0.0
    %3610 = vmatprep.subr.mxu0 0.0
    %3611 = vmatpush2.xpose.msra.mxu0 0.0
    %3612 = vmatprep.subr.mxu0 0.0
    %3613 = vmatpush2.xpose.msra.mxu0 0.0
    %3614 = vmatprep.subr.mxu0 0.0
    %3615 = vmatpush2.xpose.msra.mxu0 0.0
    %3616 = vmatprep.subr.mxu0 0.0
    %3617 = vmatpush2.xpose.msra.mxu0 0.0
    %3618 = vmatprep.subr.mxu0 0.0
    %3619 = vmatpush2.xpose.msra.mxu0 0.0
    %3620 = vmatprep.subr.mxu0 0.0
    %3621 = vmatpush2.xpose.msra.mxu0 0.0
    %3622 = vmatprep.subr.mxu0 0.0
    %3623 = vmatpush2.xpose.msra.mxu0 0.0
    %3624 = vmatprep.subr.mxu0 0.0
    %3625 = vmatpush2.xpose.msra.mxu0 0.0
    %3626 = vmatprep.subr.mxu0 0.0
    %3627 = vmatpush2.xpose.msra.mxu0 0.0
    %3628 = vmatprep.subr.mxu0 0.0
    %3629 = vmatpush2.xpose.msra.mxu0 0.0
    %3630 = vmatprep.mubr.f32.mxu0 0.0
    %3631 = vmatmul.mubr.f32.gmra.mxu0 %v3562
    %v3632 = vpop.f32.mrf.mxu0
    %v3633 = vadd.f32 0.0, %v3632
    %v3634 = vpop.f32.mrf.mxu0
    %3635 = vdwg.mxu0
    %v3636 = vmul.f32 %v3087, 0.35355338
    %v3637 = vmul.f32 %v3165, 0.35355338
    %v3638 = vmul.f32 %v3243, 0.35355338
    %v3639 = vmul.f32 %v3321, 0.35355338
    %v3640 = vmul.f32 %v3399, 0.35355338
    %v3641 = vmul.f32 %v3477, 0.35355338
    %v3642 = vmul.f32 %v3555, 0.35355338
    %v3643 = vmul.f32 %v3633, 0.35355338
    %v3644 = vsel %vm371, %v3636, -inf
    %3645 = vmax.xlane.f32.xlu0 %v3644
    %v3646 = vpop.xlane.xlu0 %3645
    %v3647 = vsel %vm371, %v3637, -inf
    %3648 = vmax.xlane.f32.xlu0 %v3647
    %v3649 = vpop.xlane.xlu0 %3648
    %v3650 = vsel %vm371, %v3638, -inf
    %3651 = vmax.xlane.f32.xlu0 %v3650
    %v3652 = vpop.xlane.xlu0 %3651
    %v3653 = vsel %vm371, %v3639, -inf
    %3654 = vmax.xlane.f32.xlu0 %v3653
    %v3655 = vpop.xlane.xlu0 %3654
    %v3656 = vsel %vm371, %v3640, -inf
    %3657 = vmax.xlane.f32.xlu0 %v3656
    %v3658 = vpop.xlane.xlu0 %3657
    %v3659 = vsel %vm371, %v3641, -inf
    %3660 = vmax.xlane.f32.xlu0 %v3659
    %v3661 = vpop.xlane.xlu0 %3660
    %v3662 = vsel %vm371, %v3642, -inf
    %3663 = vmax.xlane.f32.xlu0 %v3662
    %v3664 = vpop.xlane.xlu0 %3663
    %v3665 = vsel %vm371, %v3643, -inf
    %3666 = vmax.xlane.f32.xlu0 %v3665
    %v3667 = vpop.xlane.xlu0 %3666
    %v3668 = vsub.f32 %v3636, %v3646
    %v3669 = vsub.f32 %v3637, %v3649
    %v3670 = vsub.f32 %v3638, %v3652
    %v3671 = vsub.f32 %v3639, %v3655
    %v3672 = vsub.f32 %v3640, %v3658
    %v3673 = vsub.f32 %v3641, %v3661
    %v3674 = vsub.f32 %v3642, %v3664
    %v3675 = vsub.f32 %v3643, %v3667
    %v3676 = vmul.f32 %v3668, 1.442695
    %v3677 = vpow.pop %v3676
    %v3678 = vmul.f32 %v3669, 1.442695
    %v3679 = vpow.pop %v3678
    %v3680 = vmul.f32 %v3670, 1.442695
    %v3681 = vpow.pop %v3680
    %v3682 = vmul.f32 %v3671, 1.442695
    %v3683 = vpow.pop %v3682
    %v3684 = vmul.f32 %v3672, 1.442695
    %v3685 = vpow.pop %v3684
    %v3686 = vmul.f32 %v3673, 1.442695
    %v3687 = vpow.pop %v3686
    %v3688 = vmul.f32 %v3674, 1.442695
    %v3689 = vpow.pop %v3688
    %v3690 = vmul.f32 %v3675, 1.442695
    %v3691 = vpow.pop %v3690
    %v3692 = vsel %vm371, %v3677, 0.0
    %3693 = vadd.xlane.f32.xlu0 %v3692
    %v3694 = vpop.xlane.xlu0 %3693
    %v3695 = vsel %vm371, %v3679, 0.0
    %3696 = vadd.xlane.f32.xlu0 %v3695
    %v3697 = vpop.xlane.xlu0 %3696
    %v3698 = vsel %vm371, %v3681, 0.0
    %3699 = vadd.xlane.f32.xlu0 %v3698
    %v3700 = vpop.xlane.xlu0 %3699
    %v3701 = vsel %vm371, %v3683, 0.0
    %3702 = vadd.xlane.f32.xlu0 %v3701
    %v3703 = vpop.xlane.xlu0 %3702
    %v3704 = vsel %vm371, %v3685, 0.0
    %3705 = vadd.xlane.f32.xlu0 %v3704
    %v3706 = vpop.xlane.xlu0 %3705
    %v3707 = vsel %vm371, %v3687, 0.0
    %3708 = vadd.xlane.f32.xlu0 %v3707
    %v3709 = vpop.xlane.xlu0 %3708
    %v3710 = vsel %vm371, %v3689, 0.0
    %3711 = vadd.xlane.f32.xlu0 %v3710
    %v3712 = vpop.xlane.xlu0 %3711
    %v3713 = vsel %vm371, %v3691, 0.0
    %3714 = vadd.xlane.f32.xlu0 %v3713
    %v3715 = vpop.xlane.xlu0 %3714
    %v3716 = vrcp.pop %v3694
    %v3717 = vmul.f32 %v3677, %v3716
    %v3718 = vrcp.pop %v3697
    %v3719 = vmul.f32 %v3679, %v3718
    %v3720 = vrcp.pop %v3700
    %v3721 = vmul.f32 %v3681, %v3720
    %v3722 = vrcp.pop %v3703
    %v3723 = vmul.f32 %v3683, %v3722
    %v3724 = vrcp.pop %v3706
    %v3725 = vmul.f32 %v3685, %v3724
    %v3726 = vrcp.pop %v3709
    %v3727 = vmul.f32 %v3687, %v3726
    %v3728 = vrcp.pop %v3712
    %v3729 = vmul.f32 %v3689, %v3728
    %v3730 = vrcp.pop %v3715
    %v3731 = vmul.f32 %v3691, %v3730
    %3732 = vrot.lane.b32.xlu0 %v333, 80
    %v3733 = vpop.permute.xlu0 %3732
    %v3736 = vsel %vm371, %v3717, 0
    %3738 = vmatprep.subr.mxu0 0.0
    %3739 = vmatpush1.msra.mxu0 0.0
    %3740 = vmatprep.subr.mxu0 0.0
    %3741 = vmatpush1.msra.mxu0 0.0
    %3742 = vmatprep.subr.mxu0 0.0
    %3743 = vmatpush1.msra.mxu0 0.0
    %3744 = vmatprep.subr.mxu0 0.0
    %3745 = vmatpush1.msra.mxu0 0.0
    %3746 = vmatprep.subr.mxu0 0.0
    %3747 = vmatpush1.msra.mxu0 0.0
    %3748 = vmatprep.subr.mxu0 0.0
    %3749 = vmatpush1.msra.mxu0 0.0
    %3750 = vmatprep.subr.mxu0 0.0
    %3751 = vmatpush1.msra.mxu0 0.0
    %3752 = vmatprep.subr.mxu0 0.0
    %3753 = vmatpush1.msra.mxu0 0.0
    %3754 = vmatprep.subr.mxu0 0.0
    %3755 = vmatpush1.msra.mxu0 0.0
    %3756 = vmatprep.subr.mxu0 0.0
    %3757 = vmatpush1.msra.mxu0 0.0
    %3758 = vmatprep.subr.mxu0 0.0
    %3759 = vmatpush1.msra.mxu0 0.0
    %3760 = vmatprep.subr.mxu0 0.0
    %3761 = vmatpush1.msra.mxu0 0.0
    %3762 = vmatprep.subr.mxu0 0.0
    %3763 = vmatpush1.msra.mxu0 0.0
    %3764 = vmatprep.subr.mxu0 0.0
    %3765 = vmatpush1.msra.mxu0 0.0
    %3766 = vmatprep.subr.mxu0 0.0
    %3767 = vmatpush1.msra.mxu0 0.0
    %3768 = vmatprep.subr.mxu0 0.0
    %3769 = vmatpush1.msra.mxu0 %v3733
    %3770 = vmatprep.subr.mxu0 0.0
    %3771 = vmatpush2.msra.mxu0 0.0
    %3772 = vmatprep.subr.mxu0 0.0
    %3773 = vmatpush2.msra.mxu0 0.0
    %3774 = vmatprep.subr.mxu0 0.0
    %3775 = vmatpush2.msra.mxu0 0.0
    %3776 = vmatprep.subr.mxu0 0.0
    %3777 = vmatpush2.msra.mxu0 0.0
    %3778 = vmatprep.subr.mxu0 0.0
    %3779 = vmatpush2.msra.mxu0 0.0
    %3780 = vmatprep.subr.mxu0 0.0
    %3781 = vmatpush2.msra.mxu0 0.0
    %3782 = vmatprep.subr.mxu0 0.0
    %3783 = vmatpush2.msra.mxu0 0.0
    %3784 = vmatprep.subr.mxu0 0.0
    %3785 = vmatpush2.msra.mxu0 0.0
    %3786 = vmatprep.subr.mxu0 0.0
    %3787 = vmatpush2.msra.mxu0 0.0
    %3788 = vmatprep.subr.mxu0 0.0
    %3789 = vmatpush2.msra.mxu0 0.0
    %3790 = vmatprep.subr.mxu0 0.0
    %3791 = vmatpush2.msra.mxu0 0.0
    %3792 = vmatprep.subr.mxu0 0.0
    %3793 = vmatpush2.msra.mxu0 0.0
    %3794 = vmatprep.subr.mxu0 0.0
    %3795 = vmatpush2.msra.mxu0 0.0
    %3796 = vmatprep.subr.mxu0 0.0
    %3797 = vmatpush2.msra.mxu0 0.0
    %3798 = vmatprep.subr.mxu0 0.0
    %3799 = vmatpush2.msra.mxu0 0.0
    %3800 = vmatprep.subr.mxu0 0.0
    %3801 = vmatpush2.msra.mxu0 0.0
    %3802 = vmatprep.mubr.f32.mxu0 0.0
    %3803 = vmatmul.mubr.f32.gmra.mxu0 %v3736
    %v3804 = vpop.f32.mrf.mxu0
    %v3805 = vadd.f32 0.0, %v3804
    %v3806 = vpop.f32.mrf.mxu0
    %3807 = vdwg.mxu0
    %3808 = vrot.lane.b32.xlu0 %v338, 80
    %v3809 = vpop.permute.xlu0 %3808
    %v3812 = vsel %vm371, %v3719, 0
    %3814 = vmatprep.subr.mxu0 0.0
    %3815 = vmatpush1.msra.mxu0 0.0
    %3816 = vmatprep.subr.mxu0 0.0
    %3817 = vmatpush1.msra.mxu0 0.0
    %3818 = vmatprep.subr.mxu0 0.0
    %3819 = vmatpush1.msra.mxu0 0.0
    %3820 = vmatprep.subr.mxu0 0.0
    %3821 = vmatpush1.msra.mxu0 0.0
    %3822 = vmatprep.subr.mxu0 0.0
    %3823 = vmatpush1.msra.mxu0 0.0
    %3824 = vmatprep.subr.mxu0 0.0
    %3825 = vmatpush1.msra.mxu0 0.0
    %3826 = vmatprep.subr.mxu0 0.0
    %3827 = vmatpush1.msra.mxu0 0.0
    %3828 = vmatprep.subr.mxu0 0.0
    %3829 = vmatpush1.msra.mxu0 0.0
    %3830 = vmatprep.subr.mxu0 0.0
    %3831 = vmatpush1.msra.mxu0 0.0
    %3832 = vmatprep.subr.mxu0 0.0
    %3833 = vmatpush1.msra.mxu0 0.0
    %3834 = vmatprep.subr.mxu0 0.0
    %3835 = vmatpush1.msra.mxu0 0.0
    %3836 = vmatprep.subr.mxu0 0.0
    %3837 = vmatpush1.msra.mxu0 0.0
    %3838 = vmatprep.subr.mxu0 0.0
    %3839 = vmatpush1.msra.mxu0 0.0
    %3840 = vmatprep.subr.mxu0 0.0
    %3841 = vmatpush1.msra.mxu0 0.0
    %3842 = vmatprep.subr.mxu0 0.0
    %3843 = vmatpush1.msra.mxu0 0.0
    %3844 = vmatprep.subr.mxu0 0.0
    %3845 = vmatpush1.msra.mxu0 %v3809
    %3846 = vmatprep.subr.mxu0 0.0
    %3847 = vmatpush2.msra.mxu0 0.0
    %3848 = vmatprep.subr.mxu0 0.0
    %3849 = vmatpush2.msra.mxu0 0.0
    %3850 = vmatprep.subr.mxu0 0.0
    %3851 = vmatpush2.msra.mxu0 0.0
    %3852 = vmatprep.subr.mxu0 0.0
    %3853 = vmatpush2.msra.mxu0 0.0
    %3854 = vmatprep.subr.mxu0 0.0
    %3855 = vmatpush2.msra.mxu0 0.0
    %3856 = vmatprep.subr.mxu0 0.0
    %3857 = vmatpush2.msra.mxu0 0.0
    %3858 = vmatprep.subr.mxu0 0.0
    %3859 = vmatpush2.msra.mxu0 0.0
    %3860 = vmatprep.subr.mxu0 0.0
    %3861 = vmatpush2.msra.mxu0 0.0
    %3862 = vmatprep.subr.mxu0 0.0
    %3863 = vmatpush2.msra.mxu0 0.0
    %3864 = vmatprep.subr.mxu0 0.0
    %3865 = vmatpush2.msra.mxu0 0.0
    %3866 = vmatprep.subr.mxu0 0.0
    %3867 = vmatpush2.msra.mxu0 0.0
    %3868 = vmatprep.subr.mxu0 0.0
    %3869 = vmatpush2.msra.mxu0 0.0
    %3870 = vmatprep.subr.mxu0 0.0
    %3871 = vmatpush2.msra.mxu0 0.0
    %3872 = vmatprep.subr.mxu0 0.0
    %3873 = vmatpush2.msra.mxu0 0.0
    %3874 = vmatprep.subr.mxu0 0.0
    %3875 = vmatpush2.msra.mxu0 0.0
    %3876 = vmatprep.subr.mxu0 0.0
    %3877 = vmatpush2.msra.mxu0 0.0
    %3878 = vmatprep.mubr.f32.mxu0 0.0
    %3879 = vmatmul.mubr.f32.gmra.mxu0 %v3812
    %v3880 = vpop.f32.mrf.mxu0
    %v3881 = vadd.f32 0.0, %v3880
    %v3882 = vpop.f32.mrf.mxu0
    %3883 = vdwg.mxu0
    %3884 = vrot.lane.b32.xlu0 %v343, 80
    %v3885 = vpop.permute.xlu0 %3884
    %v3888 = vsel %vm371, %v3721, 0
    %3890 = vmatprep.subr.mxu0 0.0
    %3891 = vmatpush1.msra.mxu0 0.0
    %3892 = vmatprep.subr.mxu0 0.0
    %3893 = vmatpush1.msra.mxu0 0.0
    %3894 = vmatprep.subr.mxu0 0.0
    %3895 = vmatpush1.msra.mxu0 0.0
    %3896 = vmatprep.subr.mxu0 0.0
    %3897 = vmatpush1.msra.mxu0 0.0
    %3898 = vmatprep.subr.mxu0 0.0
    %3899 = vmatpush1.msra.mxu0 0.0
    %3900 = vmatprep.subr.mxu0 0.0
    %3901 = vmatpush1.msra.mxu0 0.0
    %3902 = vmatprep.subr.mxu0 0.0
    %3903 = vmatpush1.msra.mxu0 0.0
    %3904 = vmatprep.subr.mxu0 0.0
    %3905 = vmatpush1.msra.mxu0 0.0
    %3906 = vmatprep.subr.mxu0 0.0
    %3907 = vmatpush1.msra.mxu0 0.0
    %3908 = vmatprep.subr.mxu0 0.0
    %3909 = vmatpush1.msra.mxu0 0.0
    %3910 = vmatprep.subr.mxu0 0.0
    %3911 = vmatpush1.msra.mxu0 0.0
    %3912 = vmatprep.subr.mxu0 0.0
    %3913 = vmatpush1.msra.mxu0 0.0
    %3914 = vmatprep.subr.mxu0 0.0
    %3915 = vmatpush1.msra.mxu0 0.0
    %3916 = vmatprep.subr.mxu0 0.0
    %3917 = vmatpush1.msra.mxu0 0.0
    %3918 = vmatprep.subr.mxu0 0.0
    %3919 = vmatpush1.msra.mxu0 0.0
    %3920 = vmatprep.subr.mxu0 0.0
    %3921 = vmatpush1.msra.mxu0 %v3885
    %3922 = vmatprep.subr.mxu0 0.0
    %3923 = vmatpush2.msra.mxu0 0.0
    %3924 = vmatprep.subr.mxu0 0.0
    %3925 = vmatpush2.msra.mxu0 0.0
    %3926 = vmatprep.subr.mxu0 0.0
    %3927 = vmatpush2.msra.mxu0 0.0
    %3928 = vmatprep.subr.mxu0 0.0
    %3929 = vmatpush2.msra.mxu0 0.0
    %3930 = vmatprep.subr.mxu0 0.0
    %3931 = vmatpush2.msra.mxu0 0.0
    %3932 = vmatprep.subr.mxu0 0.0
    %3933 = vmatpush2.msra.mxu0 0.0
    %3934 = vmatprep.subr.mxu0 0.0
    %3935 = vmatpush2.msra.mxu0 0.0
    %3936 = vmatprep.subr.mxu0 0.0
    %3937 = vmatpush2.msra.mxu0 0.0
    %3938 = vmatprep.subr.mxu0 0.0
    %3939 = vmatpush2.msra.mxu0 0.0
    %3940 = vmatprep.subr.mxu0 0.0
    %3941 = vmatpush2.msra.mxu0 0.0
    %3942 = vmatprep.subr.mxu0 0.0
    %3943 = vmatpush2.msra.mxu0 0.0
    %3944 = vmatprep.subr.mxu0 0.0
    %3945 = vmatpush2.msra.mxu0 0.0
    %3946 = vmatprep.subr.mxu0 0.0
    %3947 = vmatpush2.msra.mxu0 0.0
    %3948 = vmatprep.subr.mxu0 0.0
    %3949 = vmatpush2.msra.mxu0 0.0
    %3950 = vmatprep.subr.mxu0 0.0
    %3951 = vmatpush2.msra.mxu0 0.0
    %3952 = vmatprep.subr.mxu0 0.0
    %3953 = vmatpush2.msra.mxu0 0.0
    %3954 = vmatprep.mubr.f32.mxu0 0.0
    %3955 = vmatmul.mubr.f32.gmra.mxu0 %v3888
    %v3956 = vpop.f32.mrf.mxu0
    %v3957 = vadd.f32 0.0, %v3956
    %v3958 = vpop.f32.mrf.mxu0
    %3959 = vdwg.mxu0
    %3960 = vrot.lane.b32.xlu0 %v348, 80
    %v3961 = vpop.permute.xlu0 %3960
    %v3964 = vsel %vm371, %v3723, 0
    %3966 = vmatprep.subr.mxu0 0.0
    %3967 = vmatpush1.msra.mxu0 0.0
    %3968 = vmatprep.subr.mxu0 0.0
    %3969 = vmatpush1.msra.mxu0 0.0
    %3970 = vmatprep.subr.mxu0 0.0
    %3971 = vmatpush1.msra.mxu0 0.0
    %3972 = vmatprep.subr.mxu0 0.0
    %3973 = vmatpush1.msra.mxu0 0.0
    %3974 = vmatprep.subr.mxu0 0.0
    %3975 = vmatpush1.msra.mxu0 0.0
    %3976 = vmatprep.subr.mxu0 0.0
    %3977 = vmatpush1.msra.mxu0 0.0
    %3978 = vmatprep.subr.mxu0 0.0
    %3979 = vmatpush1.msra.mxu0 0.0
    %3980 = vmatprep.subr.mxu0 0.0
    %3981 = vmatpush1.msra.mxu0 0.0
    %3982 = vmatprep.subr.mxu0 0.0
    %3983 = vmatpush1.msra.mxu0 0.0
    %3984 = vmatprep.subr.mxu0 0.0
    %3985 = vmatpush1.msra.mxu0 0.0
    %3986 = vmatprep.subr.mxu0 0.0
    %3987 = vmatpush1.msra.mxu0 0.0
    %3988 = vmatprep.subr.mxu0 0.0
    %3989 = vmatpush1.msra.mxu0 0.0
    %3990 = vmatprep.subr.mxu0 0.0
    %3991 = vmatpush1.msra.mxu0 0.0
    %3992 = vmatprep.subr.mxu0 0.0
    %3993 = vmatpush1.msra.mxu0 0.0
    %3994 = vmatprep.subr.mxu0 0.0
    %3995 = vmatpush1.msra.mxu0 0.0
    %3996 = vmatprep.subr.mxu0 0.0
    %3997 = vmatpush1.msra.mxu0 %v3961
    %3998 = vmatprep.subr.mxu0 0.0
    %3999 = vmatpush2.msra.mxu0 0.0
    %4000 = vmatprep.subr.mxu0 0.0
    %4001 = vmatpush2.msra.mxu0 0.0
    %4002 = vmatprep.subr.mxu0 0.0
    %4003 = vmatpush2.msra.mxu0 0.0
    %4004 = vmatprep.subr.mxu0 0.0
    %4005 = vmatpush2.msra.mxu0 0.0
    %4006 = vmatprep.subr.mxu0 0.0
    %4007 = vmatpush2.msra.mxu0 0.0
    %4008 = vmatprep.subr.mxu0 0.0
    %4009 = vmatpush2.msra.mxu0 0.0
    %4010 = vmatprep.subr.mxu0 0.0
    %4011 = vmatpush2.msra.mxu0 0.0
    %4012 = vmatprep.subr.mxu0 0.0
    %4013 = vmatpush2.msra.mxu0 0.0
    %4014 = vmatprep.subr.mxu0 0.0
    %4015 = vmatpush2.msra.mxu0 0.0
    %4016 = vmatprep.subr.mxu0 0.0
    %4017 = vmatpush2.msra.mxu0 0.0
    %4018 = vmatprep.subr.mxu0 0.0
    %4019 = vmatpush2.msra.mxu0 0.0
    %4020 = vmatprep.subr.mxu0 0.0
    %4021 = vmatpush2.msra.mxu0 0.0
    %4022 = vmatprep.subr.mxu0 0.0
    %4023 = vmatpush2.msra.mxu0 0.0
    %4024 = vmatprep.subr.mxu0 0.0
    %4025 = vmatpush2.msra.mxu0 0.0
    %4026 = vmatprep.subr.mxu0 0.0
    %4027 = vmatpush2.msra.mxu0 0.0
    %4028 = vmatprep.subr.mxu0 0.0
    %4029 = vmatpush2.msra.mxu0 0.0
    %4030 = vmatprep.mubr.f32.mxu0 0.0
    %4031 = vmatmul.mubr.f32.gmra.mxu0 %v3964
    %v4032 = vpop.f32.mrf.mxu0
    %v4033 = vadd.f32 0.0, %v4032
    %v4034 = vpop.f32.mrf.mxu0
    %4035 = vdwg.mxu0
    %4036 = vrot.lane.b32.xlu0 %v353, 80
    %v4037 = vpop.permute.xlu0 %4036
    %v4040 = vsel %vm371, %v3725, 0
    %4042 = vmatprep.subr.mxu0 0.0
    %4043 = vmatpush1.msra.mxu0 0.0
    %4044 = vmatprep.subr.mxu0 0.0
    %4045 = vmatpush1.msra.mxu0 0.0
    %4046 = vmatprep.subr.mxu0 0.0
    %4047 = vmatpush1.msra.mxu0 0.0
    %4048 = vmatprep.subr.mxu0 0.0
    %4049 = vmatpush1.msra.mxu0 0.0
    %4050 = vmatprep.subr.mxu0 0.0
    %4051 = vmatpush1.msra.mxu0 0.0
    %4052 = vmatprep.subr.mxu0 0.0
    %4053 = vmatpush1.msra.mxu0 0.0
    %4054 = vmatprep.subr.mxu0 0.0
    %4055 = vmatpush1.msra.mxu0 0.0
    %4056 = vmatprep.subr.mxu0 0.0
    %4057 = vmatpush1.msra.mxu0 0.0
    %4058 = vmatprep.subr.mxu0 0.0
    %4059 = vmatpush1.msra.mxu0 0.0
    %4060 = vmatprep.subr.mxu0 0.0
    %4061 = vmatpush1.msra.mxu0 0.0
    %4062 = vmatprep.subr.mxu0 0.0
    %4063 = vmatpush1.msra.mxu0 0.0
    %4064 = vmatprep.subr.mxu0 0.0
    %4065 = vmatpush1.msra.mxu0 0.0
    %4066 = vmatprep.subr.mxu0 0.0
    %4067 = vmatpush1.msra.mxu0 0.0
    %4068 = vmatprep.subr.mxu0 0.0
    %4069 = vmatpush1.msra.mxu0 0.0
    %4070 = vmatprep.subr.mxu0 0.0
    %4071 = vmatpush1.msra.mxu0 0.0
    %4072 = vmatprep.subr.mxu0 0.0
    %4073 = vmatpush1.msra.mxu0 %v4037
    %4074 = vmatprep.subr.mxu0 0.0
    %4075 = vmatpush2.msra.mxu0 0.0
    %4076 = vmatprep.subr.mxu0 0.0
    %4077 = vmatpush2.msra.mxu0 0.0
    %4078 = vmatprep.subr.mxu0 0.0
    %4079 = vmatpush2.msra.mxu0 0.0
    %4080 = vmatprep.subr.mxu0 0.0
    %4081 = vmatpush2.msra.mxu0 0.0
    %4082 = vmatprep.subr.mxu0 0.0
    %4083 = vmatpush2.msra.mxu0 0.0
    %4084 = vmatprep.subr.mxu0 0.0
    %4085 = vmatpush2.msra.mxu0 0.0
    %4086 = vmatprep.subr.mxu0 0.0
    %4087 = vmatpush2.msra.mxu0 0.0
    %4088 = vmatprep.subr.mxu0 0.0
    %4089 = vmatpush2.msra.mxu0 0.0
    %4090 = vmatprep.subr.mxu0 0.0
    %4091 = vmatpush2.msra.mxu0 0.0
    %4092 = vmatprep.subr.mxu0 0.0
    %4093 = vmatpush2.msra.mxu0 0.0
    %4094 = vmatprep.subr.mxu0 0.0
    %4095 = vmatpush2.msra.mxu0 0.0
    %4096 = vmatprep.subr.mxu0 0.0
    %4097 = vmatpush2.msra.mxu0 0.0
    %4098 = vmatprep.subr.mxu0 0.0
    %4099 = vmatpush2.msra.mxu0 0.0
    %4100 = vmatprep.subr.mxu0 0.0
    %4101 = vmatpush2.msra.mxu0 0.0
    %4102 = vmatprep.subr.mxu0 0.0
    %4103 = vmatpush2.msra.mxu0 0.0
    %4104 = vmatprep.subr.mxu0 0.0
    %4105 = vmatpush2.msra.mxu0 0.0
    %4106 = vmatprep.mubr.f32.mxu0 0.0
    %4107 = vmatmul.mubr.f32.gmra.mxu0 %v4040
    %v4108 = vpop.f32.mrf.mxu0
    %v4109 = vadd.f32 0.0, %v4108
    %v4110 = vpop.f32.mrf.mxu0
    %4111 = vdwg.mxu0
    %4112 = vrot.lane.b32.xlu0 %v358, 80
    %v4113 = vpop.permute.xlu0 %4112
    %v4116 = vsel %vm371, %v3727, 0
    %4118 = vmatprep.subr.mxu0 0.0
    %4119 = vmatpush1.msra.mxu0 0.0
    %4120 = vmatprep.subr.mxu0 0.0
    %4121 = vmatpush1.msra.mxu0 0.0
    %4122 = vmatprep.subr.mxu0 0.0
    %4123 = vmatpush1.msra.mxu0 0.0
    %4124 = vmatprep.subr.mxu0 0.0
    %4125 = vmatpush1.msra.mxu0 0.0
    %4126 = vmatprep.subr.mxu0 0.0
    %4127 = vmatpush1.msra.mxu0 0.0
    %4128 = vmatprep.subr.mxu0 0.0
    %4129 = vmatpush1.msra.mxu0 0.0
    %4130 = vmatprep.subr.mxu0 0.0
    %4131 = vmatpush1.msra.mxu0 0.0
    %4132 = vmatprep.subr.mxu0 0.0
    %4133 = vmatpush1.msra.mxu0 0.0
    %4134 = vmatprep.subr.mxu0 0.0
    %4135 = vmatpush1.msra.mxu0 0.0
    %4136 = vmatprep.subr.mxu0 0.0
    %4137 = vmatpush1.msra.mxu0 0.0
    %4138 = vmatprep.subr.mxu0 0.0
    %4139 = vmatpush1.msra.mxu0 0.0
    %4140 = vmatprep.subr.mxu0 0.0
    %4141 = vmatpush1.msra.mxu0 0.0
    %4142 = vmatprep.subr.mxu0 0.0
    %4143 = vmatpush1.msra.mxu0 0.0
    %4144 = vmatprep.subr.mxu0 0.0
    %4145 = vmatpush1.msra.mxu0 0.0
    %4146 = vmatprep.subr.mxu0 0.0
    %4147 = vmatpush1.msra.mxu0 0.0
    %4148 = vmatprep.subr.mxu0 0.0
    %4149 = vmatpush1.msra.mxu0 %v4113
    %4150 = vmatprep.subr.mxu0 0.0
    %4151 = vmatpush2.msra.mxu0 0.0
    %4152 = vmatprep.subr.mxu0 0.0
    %4153 = vmatpush2.msra.mxu0 0.0
    %4154 = vmatprep.subr.mxu0 0.0
    %4155 = vmatpush2.msra.mxu0 0.0
    %4156 = vmatprep.subr.mxu0 0.0
    %4157 = vmatpush2.msra.mxu0 0.0
    %4158 = vmatprep.subr.mxu0 0.0
    %4159 = vmatpush2.msra.mxu0 0.0
    %4160 = vmatprep.subr.mxu0 0.0
    %4161 = vmatpush2.msra.mxu0 0.0
    %4162 = vmatprep.subr.mxu0 0.0
    %4163 = vmatpush2.msra.mxu0 0.0
    %4164 = vmatprep.subr.mxu0 0.0
    %4165 = vmatpush2.msra.mxu0 0.0
    %4166 = vmatprep.subr.mxu0 0.0
    %4167 = vmatpush2.msra.mxu0 0.0
    %4168 = vmatprep.subr.mxu0 0.0
    %4169 = vmatpush2.msra.mxu0 0.0
    %4170 = vmatprep.subr.mxu0 0.0
    %4171 = vmatpush2.msra.mxu0 0.0
    %4172 = vmatprep.subr.mxu0 0.0
    %4173 = vmatpush2.msra.mxu0 0.0
    %4174 = vmatprep.subr.mxu0 0.0
    %4175 = vmatpush2.msra.mxu0 0.0
    %4176 = vmatprep.subr.mxu0 0.0
    %4177 = vmatpush2.msra.mxu0 0.0
    %4178 = vmatprep.subr.mxu0 0.0
    %4179 = vmatpush2.msra.mxu0 0.0
    %4180 = vmatprep.subr.mxu0 0.0
    %4181 = vmatpush2.msra.mxu0 0.0
    %4182 = vmatprep.mubr.f32.mxu0 0.0
    %4183 = vmatmul.mubr.f32.gmra.mxu0 %v4116
    %v4184 = vpop.f32.mrf.mxu0
    %v4185 = vadd.f32 0.0, %v4184
    %v4186 = vpop.f32.mrf.mxu0
    %4187 = vdwg.mxu0
    %4188 = vrot.lane.b32.xlu0 %v363, 80
    %v4189 = vpop.permute.xlu0 %4188
    %v4192 = vsel %vm371, %v3729, 0
    %4194 = vmatprep.subr.mxu0 0.0
    %4195 = vmatpush1.msra.mxu0 0.0
    %4196 = vmatprep.subr.mxu0 0.0
    %4197 = vmatpush1.msra.mxu0 0.0
    %4198 = vmatprep.subr.mxu0 0.0
    %4199 = vmatpush1.msra.mxu0 0.0
    %4200 = vmatprep.subr.mxu0 0.0
    %4201 = vmatpush1.msra.mxu0 0.0
    %4202 = vmatprep.subr.mxu0 0.0
    %4203 = vmatpush1.msra.mxu0 0.0
    %4204 = vmatprep.subr.mxu0 0.0
    %4205 = vmatpush1.msra.mxu0 0.0
    %4206 = vmatprep.subr.mxu0 0.0
    %4207 = vmatpush1.msra.mxu0 0.0
    %4208 = vmatprep.subr.mxu0 0.0
    %4209 = vmatpush1.msra.mxu0 0.0
    %4210 = vmatprep.subr.mxu0 0.0
    %4211 = vmatpush1.msra.mxu0 0.0
    %4212 = vmatprep.subr.mxu0 0.0
    %4213 = vmatpush1.msra.mxu0 0.0
    %4214 = vmatprep.subr.mxu0 0.0
    %4215 = vmatpush1.msra.mxu0 0.0
    %4216 = vmatprep.subr.mxu0 0.0
    %4217 = vmatpush1.msra.mxu0 0.0
    %4218 = vmatprep.subr.mxu0 0.0
    %4219 = vmatpush1.msra.mxu0 0.0
    %4220 = vmatprep.subr.mxu0 0.0
    %4221 = vmatpush1.msra.mxu0 0.0
    %4222 = vmatprep.subr.mxu0 0.0
    %4223 = vmatpush1.msra.mxu0 0.0
    %4224 = vmatprep.subr.mxu0 0.0
    %4225 = vmatpush1.msra.mxu0 %v4189
    %4226 = vmatprep.subr.mxu0 0.0
    %4227 = vmatpush2.msra.mxu0 0.0
    %4228 = vmatprep.subr.mxu0 0.0
    %4229 = vmatpush2.msra.mxu0 0.0
    %4230 = vmatprep.subr.mxu0 0.0
    %4231 = vmatpush2.msra.mxu0 0.0
    %4232 = vmatprep.subr.mxu0 0.0
    %4233 = vmatpush2.msra.mxu0 0.0
    %4234 = vmatprep.subr.mxu0 0.0
    %4235 = vmatpush2.msra.mxu0 0.0
    %4236 = vmatprep.subr.mxu0 0.0
    %4237 = vmatpush2.msra.mxu0 0.0
    %4238 = vmatprep.subr.mxu0 0.0
    %4239 = vmatpush2.msra.mxu0 0.0
    %4240 = vmatprep.subr.mxu0 0.0
    %4241 = vmatpush2.msra.mxu0 0.0
    %4242 = vmatprep.subr.mxu0 0.0
    %4243 = vmatpush2.msra.mxu0 0.0
    %4244 = vmatprep.subr.mxu0 0.0
    %4245 = vmatpush2.msra.mxu0 0.0
    %4246 = vmatprep.subr.mxu0 0.0
    %4247 = vmatpush2.msra.mxu0 0.0
    %4248 = vmatprep.subr.mxu0 0.0
    %4249 = vmatpush2.msra.mxu0 0.0
    %4250 = vmatprep.subr.mxu0 0.0
    %4251 = vmatpush2.msra.mxu0 0.0
    %4252 = vmatprep.subr.mxu0 0.0
    %4253 = vmatpush2.msra.mxu0 0.0
    %4254 = vmatprep.subr.mxu0 0.0
    %4255 = vmatpush2.msra.mxu0 0.0
    %4256 = vmatprep.subr.mxu0 0.0
    %4257 = vmatpush2.msra.mxu0 0.0
    %4258 = vmatprep.mubr.f32.mxu0 0.0
    %4259 = vmatmul.mubr.f32.gmra.mxu0 %v4192
    %v4260 = vpop.f32.mrf.mxu0
    %v4261 = vadd.f32 0.0, %v4260
    %v4262 = vpop.f32.mrf.mxu0
    %4263 = vdwg.mxu0
    %4264 = vrot.lane.b32.xlu0 %v368, 80
    %v4265 = vpop.permute.xlu0 %4264
    %v4268 = vsel %vm371, %v3731, 0
    %4270 = vmatprep.subr.mxu0 0.0
    %4271 = vmatpush1.msra.mxu0 0.0
    %4272 = vmatprep.subr.mxu0 0.0
    %4273 = vmatpush1.msra.mxu0 0.0
    %4274 = vmatprep.subr.mxu0 0.0
    %4275 = vmatpush1.msra.mxu0 0.0
    %4276 = vmatprep.subr.mxu0 0.0
    %4277 = vmatpush1.msra.mxu0 0.0
    %4278 = vmatprep.subr.mxu0 0.0
    %4279 = vmatpush1.msra.mxu0 0.0
    %4280 = vmatprep.subr.mxu0 0.0
    %4281 = vmatpush1.msra.mxu0 0.0
    %4282 = vmatprep.subr.mxu0 0.0
    %4283 = vmatpush1.msra.mxu0 0.0
    %4284 = vmatprep.subr.mxu0 0.0
    %4285 = vmatpush1.msra.mxu0 0.0
    %4286 = vmatprep.subr.mxu0 0.0
    %4287 = vmatpush1.msra.mxu0 0.0
    %4288 = vmatprep.subr.mxu0 0.0
    %4289 = vmatpush1.msra.mxu0 0.0
    %4290 = vmatprep.subr.mxu0 0.0
    %4291 = vmatpush1.msra.mxu0 0.0
    %4292 = vmatprep.subr.mxu0 0.0
    %4293 = vmatpush1.msra.mxu0 0.0
    %4294 = vmatprep.subr.mxu0 0.0
    %4295 = vmatpush1.msra.mxu0 0.0
    %4296 = vmatprep.subr.mxu0 0.0
    %4297 = vmatpush1.msra.mxu0 0.0
    %4298 = vmatprep.subr.mxu0 0.0
    %4299 = vmatpush1.msra.mxu0 0.0
    %4300 = vmatprep.subr.mxu0 0.0
    %4301 = vmatpush1.msra.mxu0 %v4265
    %4302 = vmatprep.subr.mxu0 0.0
    %4303 = vmatpush2.msra.mxu0 0.0
    %4304 = vmatprep.subr.mxu0 0.0
    %4305 = vmatpush2.msra.mxu0 0.0
    %4306 = vmatprep.subr.mxu0 0.0
    %4307 = vmatpush2.msra.mxu0 0.0
    %4308 = vmatprep.subr.mxu0 0.0
    %4309 = vmatpush2.msra.mxu0 0.0
    %4310 = vmatprep.subr.mxu0 0.0
    %4311 = vmatpush2.msra.mxu0 0.0
    %4312 = vmatprep.subr.mxu0 0.0
    %4313 = vmatpush2.msra.mxu0 0.0
    %4314 = vmatprep.subr.mxu0 0.0
    %4315 = vmatpush2.msra.mxu0 0.0
    %4316 = vmatprep.subr.mxu0 0.0
    %4317 = vmatpush2.msra.mxu0 0.0
    %4318 = vmatprep.subr.mxu0 0.0
    %4319 = vmatpush2.msra.mxu0 0.0
    %4320 = vmatprep.subr.mxu0 0.0
    %4321 = vmatpush2.msra.mxu0 0.0
    %4322 = vmatprep.subr.mxu0 0.0
    %4323 = vmatpush2.msra.mxu0 0.0
    %4324 = vmatprep.subr.mxu0 0.0
    %4325 = vmatpush2.msra.mxu0 0.0
    %4326 = vmatprep.subr.mxu0 0.0
    %4327 = vmatpush2.msra.mxu0 0.0
    %4328 = vmatprep.subr.mxu0 0.0
    %4329 = vmatpush2.msra.mxu0 0.0
    %4330 = vmatprep.subr.mxu0 0.0
    %4331 = vmatpush2.msra.mxu0 0.0
    %4332 = vmatprep.subr.mxu0 0.0
    %4333 = vmatpush2.msra.mxu0 0.0
    %4334 = vmatprep.mubr.f32.mxu0 0.0
    %4335 = vmatmul.mubr.f32.gmra.mxu0 %v4268
    %v4336 = vpop.f32.mrf.mxu0
    %v4337 = vadd.f32 0.0, %v4336
    %v4338 = vpop.f32.mrf.mxu0
    %4339 = vdwg.mxu0
    %4340 = vrot.lane.b32.xlu0 %v193, 104
    %v4341 = vpop.permute.xlu0 %4340
    %4342 = vrot.lane.b32.xlu0 %v333, 104
    %v4343 = vpop.permute.xlu0 %4342
    %v4344 = vsel %vm371, %v4341, 0
    %v4346 = vsel %vm371, %v4343, 0
    %4348 = vmatprep.subr.mxu0 0.0
    %4349 = vmatpush1.xpose.msra.mxu0 0.0
    %4350 = vmatprep.subr.mxu0 0.0
    %4351 = vmatpush1.xpose.msra.mxu0 0.0
    %4352 = vmatprep.subr.mxu0 0.0
    %4353 = vmatpush1.xpose.msra.mxu0 0.0
    %4354 = vmatprep.subr.mxu0 0.0
    %4355 = vmatpush1.xpose.msra.mxu0 0.0
    %4356 = vmatprep.subr.mxu0 0.0
    %4357 = vmatpush1.xpose.msra.mxu0 0.0
    %4358 = vmatprep.subr.mxu0 0.0
    %4359 = vmatpush1.xpose.msra.mxu0 0.0
    %4360 = vmatprep.subr.mxu0 0.0
    %4361 = vmatpush1.xpose.msra.mxu0 0.0
    %4362 = vmatprep.subr.mxu0 0.0
    %4363 = vmatpush1.xpose.msra.mxu0 0.0
    %4364 = vmatprep.subr.mxu0 0.0
    %4365 = vmatpush1.xpose.msra.mxu0 0.0
    %4366 = vmatprep.subr.mxu0 0.0
    %4367 = vmatpush1.xpose.msra.mxu0 0.0
    %4368 = vmatprep.subr.mxu0 0.0
    %4369 = vmatpush1.xpose.msra.mxu0 0.0
    %4370 = vmatprep.subr.mxu0 0.0
    %4371 = vmatpush1.xpose.msra.mxu0 0.0
    %4372 = vmatprep.subr.mxu0 0.0
    %4373 = vmatpush1.xpose.msra.mxu0 0.0
    %4374 = vmatprep.subr.mxu0 0.0
    %4375 = vmatpush1.xpose.msra.mxu0 0.0
    %4376 = vmatprep.subr.mxu0 0.0
    %4377 = vmatpush1.xpose.msra.mxu0 0.0
    %4378 = vmatprep.subr.mxu0 0.0
    %4379 = vmatpush1.xpose.msra.mxu0 %v4346
    %4380 = vmatprep.subr.mxu0 0.0
    %4381 = vmatpush2.xpose.msra.mxu0 0.0
    %4382 = vmatprep.subr.mxu0 0.0
    %4383 = vmatpush2.xpose.msra.mxu0 0.0
    %4384 = vmatprep.subr.mxu0 0.0
    %4385 = vmatpush2.xpose.msra.mxu0 0.0
    %4386 = vmatprep.subr.mxu0 0.0
    %4387 = vmatpush2.xpose.msra.mxu0 0.0
    %4388 = vmatprep.subr.mxu0 0.0
    %4389 = vmatpush2.xpose.msra.mxu0 0.0
    %4390 = vmatprep.subr.mxu0 0.0
    %4391 = vmatpush2.xpose.msra.mxu0 0.0
    %4392 = vmatprep.subr.mxu0 0.0
    %4393 = vmatpush2.xpose.msra.mxu0 0.0
    %4394 = vmatprep.subr.mxu0 0.0
    %4395 = vmatpush2.xpose.msra.mxu0 0.0
    %4396 = vmatprep.subr.mxu0 0.0
    %4397 = vmatpush2.xpose.msra.mxu0 0.0
    %4398 = vmatprep.subr.mxu0 0.0
    %4399 = vmatpush2.xpose.msra.mxu0 0.0
    %4400 = vmatprep.subr.mxu0 0.0
    %4401 = vmatpush2.xpose.msra.mxu0 0.0
    %4402 = vmatprep.subr.mxu0 0.0
    %4403 = vmatpush2.xpose.msra.mxu0 0.0
    %4404 = vmatprep.subr.mxu0 0.0
    %4405 = vmatpush2.xpose.msra.mxu0 0.0
    %4406 = vmatprep.subr.mxu0 0.0
    %4407 = vmatpush2.xpose.msra.mxu0 0.0
    %4408 = vmatprep.subr.mxu0 0.0
    %4409 = vmatpush2.xpose.msra.mxu0 0.0
    %4410 = vmatprep.subr.mxu0 0.0
    %4411 = vmatpush2.xpose.msra.mxu0 0.0
    %4412 = vmatprep.mubr.f32.mxu0 0.0
    %4413 = vmatmul.mubr.f32.gmra.mxu0 %v4344
    %v4414 = vpop.f32.mrf.mxu0
    %v4415 = vadd.f32 0.0, %v4414
    %v4416 = vpop.f32.mrf.mxu0
    %4417 = vdwg.mxu0
    %4418 = vrot.lane.b32.xlu0 %v198, 104
    %v4419 = vpop.permute.xlu0 %4418
    %4420 = vrot.lane.b32.xlu0 %v338, 104
    %v4421 = vpop.permute.xlu0 %4420
    %v4422 = vsel %vm371, %v4419, 0
    %v4424 = vsel %vm371, %v4421, 0
    %4426 = vmatprep.subr.mxu0 0.0
    %4427 = vmatpush1.xpose.msra.mxu0 0.0
    %4428 = vmatprep.subr.mxu0 0.0
    %4429 = vmatpush1.xpose.msra.mxu0 0.0
    %4430 = vmatprep.subr.mxu0 0.0
    %4431 = vmatpush1.xpose.msra.mxu0 0.0
    %4432 = vmatprep.subr.mxu0 0.0
    %4433 = vmatpush1.xpose.msra.mxu0 0.0
    %4434 = vmatprep.subr.mxu0 0.0
    %4435 = vmatpush1.xpose.msra.mxu0 0.0
    %4436 = vmatprep.subr.mxu0 0.0
    %4437 = vmatpush1.xpose.msra.mxu0 0.0
    %4438 = vmatprep.subr.mxu0 0.0
    %4439 = vmatpush1.xpose.msra.mxu0 0.0
    %4440 = vmatprep.subr.mxu0 0.0
    %4441 = vmatpush1.xpose.msra.mxu0 0.0
    %4442 = vmatprep.subr.mxu0 0.0
    %4443 = vmatpush1.xpose.msra.mxu0 0.0
    %4444 = vmatprep.subr.mxu0 0.0
    %4445 = vmatpush1.xpose.msra.mxu0 0.0
    %4446 = vmatprep.subr.mxu0 0.0
    %4447 = vmatpush1.xpose.msra.mxu0 0.0
    %4448 = vmatprep.subr.mxu0 0.0
    %4449 = vmatpush1.xpose.msra.mxu0 0.0
    %4450 = vmatprep.subr.mxu0 0.0
    %4451 = vmatpush1.xpose.msra.mxu0 0.0
    %4452 = vmatprep.subr.mxu0 0.0
    %4453 = vmatpush1.xpose.msra.mxu0 0.0
    %4454 = vmatprep.subr.mxu0 0.0
    %4455 = vmatpush1.xpose.msra.mxu0 0.0
    %4456 = vmatprep.subr.mxu0 0.0
    %4457 = vmatpush1.xpose.msra.mxu0 %v4424
    %4458 = vmatprep.subr.mxu0 0.0
    %4459 = vmatpush2.xpose.msra.mxu0 0.0
    %4460 = vmatprep.subr.mxu0 0.0
    %4461 = vmatpush2.xpose.msra.mxu0 0.0
    %4462 = vmatprep.subr.mxu0 0.0
    %4463 = vmatpush2.xpose.msra.mxu0 0.0
    %4464 = vmatprep.subr.mxu0 0.0
    %4465 = vmatpush2.xpose.msra.mxu0 0.0
    %4466 = vmatprep.subr.mxu0 0.0
    %4467 = vmatpush2.xpose.msra.mxu0 0.0
    %4468 = vmatprep.subr.mxu0 0.0
    %4469 = vmatpush2.xpose.msra.mxu0 0.0
    %4470 = vmatprep.subr.mxu0 0.0
    %4471 = vmatpush2.xpose.msra.mxu0 0.0
    %4472 = vmatprep.subr.mxu0 0.0
    %4473 = vmatpush2.xpose.msra.mxu0 0.0
    %4474 = vmatprep.subr.mxu0 0.0
    %4475 = vmatpush2.xpose.msra.mxu0 0.0
    %4476 = vmatprep.subr.mxu0 0.0
    %4477 = vmatpush2.xpose.msra.mxu0 0.0
    %4478 = vmatprep.subr.mxu0 0.0
    %4479 = vmatpush2.xpose.msra.mxu0 0.0
    %4480 = vmatprep.subr.mxu0 0.0
    %4481 = vmatpush2.xpose.msra.mxu0 0.0
    %4482 = vmatprep.subr.mxu0 0.0
    %4483 = vmatpush2.xpose.msra.mxu0 0.0
    %4484 = vmatprep.subr.mxu0 0.0
    %4485 = vmatpush2.xpose.msra.mxu0 0.0
    %4486 = vmatprep.subr.mxu0 0.0
    %4487 = vmatpush2.xpose.msra.mxu0 0.0
    %4488 = vmatprep.subr.mxu0 0.0
    %4489 = vmatpush2.xpose.msra.mxu0 0.0
    %4490 = vmatprep.mubr.f32.mxu0 0.0
    %4491 = vmatmul.mubr.f32.gmra.mxu0 %v4422
    %v4492 = vpop.f32.mrf.mxu0
    %v4493 = vadd.f32 0.0, %v4492
    %v4494 = vpop.f32.mrf.mxu0
    %4495 = vdwg.mxu0
    %4496 = vrot.lane.b32.xlu0 %v203, 104
    %v4497 = vpop.permute.xlu0 %4496
    %4498 = vrot.lane.b32.xlu0 %v343, 104
    %v4499 = vpop.permute.xlu0 %4498
    %v4500 = vsel %vm371, %v4497, 0
    %v4502 = vsel %vm371, %v4499, 0
    %4504 = vmatprep.subr.mxu0 0.0
    %4505 = vmatpush1.xpose.msra.mxu0 0.0
    %4506 = vmatprep.subr.mxu0 0.0
    %4507 = vmatpush1.xpose.msra.mxu0 0.0
    %4508 = vmatprep.subr.mxu0 0.0
    %4509 = vmatpush1.xpose.msra.mxu0 0.0
    %4510 = vmatprep.subr.mxu0 0.0
    %4511 = vmatpush1.xpose.msra.mxu0 0.0
    %4512 = vmatprep.subr.mxu0 0.0
    %4513 = vmatpush1.xpose.msra.mxu0 0.0
    %4514 = vmatprep.subr.mxu0 0.0
    %4515 = vmatpush1.xpose.msra.mxu0 0.0
    %4516 = vmatprep.subr.mxu0 0.0
    %4517 = vmatpush1.xpose.msra.mxu0 0.0
    %4518 = vmatprep.subr.mxu0 0.0
    %4519 = vmatpush1.xpose.msra.mxu0 0.0
    %4520 = vmatprep.subr.mxu0 0.0
    %4521 = vmatpush1.xpose.msra.mxu0 0.0
    %4522 = vmatprep.subr.mxu0 0.0
    %4523 = vmatpush1.xpose.msra.mxu0 0.0
    %4524 = vmatprep.subr.mxu0 0.0
    %4525 = vmatpush1.xpose.msra.mxu0 0.0
    %4526 = vmatprep.subr.mxu0 0.0
    %4527 = vmatpush1.xpose.msra.mxu0 0.0
    %4528 = vmatprep.subr.mxu0 0.0
    %4529 = vmatpush1.xpose.msra.mxu0 0.0
    %4530 = vmatprep.subr.mxu0 0.0
    %4531 = vmatpush1.xpose.msra.mxu0 0.0
    %4532 = vmatprep.subr.mxu0 0.0
    %4533 = vmatpush1.xpose.msra.mxu0 0.0
    %4534 = vmatprep.subr.mxu0 0.0
    %4535 = vmatpush1.xpose.msra.mxu0 %v4502
    %4536 = vmatprep.subr.mxu0 0.0
    %4537 = vmatpush2.xpose.msra.mxu0 0.0
    %4538 = vmatprep.subr.mxu0 0.0
    %4539 = vmatpush2.xpose.msra.mxu0 0.0
    %4540 = vmatprep.subr.mxu0 0.0
    %4541 = vmatpush2.xpose.msra.mxu0 0.0
    %4542 = vmatprep.subr.mxu0 0.0
    %4543 = vmatpush2.xpose.msra.mxu0 0.0
    %4544 = vmatprep.subr.mxu0 0.0
    %4545 = vmatpush2.xpose.msra.mxu0 0.0
    %4546 = vmatprep.subr.mxu0 0.0
    %4547 = vmatpush2.xpose.msra.mxu0 0.0
    %4548 = vmatprep.subr.mxu0 0.0
    %4549 = vmatpush2.xpose.msra.mxu0 0.0
    %4550 = vmatprep.subr.mxu0 0.0
    %4551 = vmatpush2.xpose.msra.mxu0 0.0
    %4552 = vmatprep.subr.mxu0 0.0
    %4553 = vmatpush2.xpose.msra.mxu0 0.0
    %4554 = vmatprep.subr.mxu0 0.0
    %4555 = vmatpush2.xpose.msra.mxu0 0.0
    %4556 = vmatprep.subr.mxu0 0.0
    %4557 = vmatpush2.xpose.msra.mxu0 0.0
    %4558 = vmatprep.subr.mxu0 0.0
    %4559 = vmatpush2.xpose.msra.mxu0 0.0
    %4560 = vmatprep.subr.mxu0 0.0
    %4561 = vmatpush2.xpose.msra.mxu0 0.0
    %4562 = vmatprep.subr.mxu0 0.0
    %4563 = vmatpush2.xpose.msra.mxu0 0.0
    %4564 = vmatprep.subr.mxu0 0.0
    %4565 = vmatpush2.xpose.msra.mxu0 0.0
    %4566 = vmatprep.subr.mxu0 0.0
    %4567 = vmatpush2.xpose.msra.mxu0 0.0
    %4568 = vmatprep.mubr.f32.mxu0 0.0
    %4569 = vmatmul.mubr.f32.gmra.mxu0 %v4500
    %v4570 = vpop.f32.mrf.mxu0
    %v4571 = vadd.f32 0.0, %v4570
    %v4572 = vpop.f32.mrf.mxu0
    %4573 = vdwg.mxu0
    %4574 = vrot.lane.b32.xlu0 %v208, 104
    %v4575 = vpop.permute.xlu0 %4574
    %4576 = vrot.lane.b32.xlu0 %v348, 104
    %v4577 = vpop.permute.xlu0 %4576
    %v4578 = vsel %vm371, %v4575, 0
    %v4580 = vsel %vm371, %v4577, 0
    %4582 = vmatprep.subr.mxu0 0.0
    %4583 = vmatpush1.xpose.msra.mxu0 0.0
    %4584 = vmatprep.subr.mxu0 0.0
    %4585 = vmatpush1.xpose.msra.mxu0 0.0
    %4586 = vmatprep.subr.mxu0 0.0
    %4587 = vmatpush1.xpose.msra.mxu0 0.0
    %4588 = vmatprep.subr.mxu0 0.0
    %4589 = vmatpush1.xpose.msra.mxu0 0.0
    %4590 = vmatprep.subr.mxu0 0.0
    %4591 = vmatpush1.xpose.msra.mxu0 0.0
    %4592 = vmatprep.subr.mxu0 0.0
    %4593 = vmatpush1.xpose.msra.mxu0 0.0
    %4594 = vmatprep.subr.mxu0 0.0
    %4595 = vmatpush1.xpose.msra.mxu0 0.0
    %4596 = vmatprep.subr.mxu0 0.0
    %4597 = vmatpush1.xpose.msra.mxu0 0.0
    %4598 = vmatprep.subr.mxu0 0.0
    %4599 = vmatpush1.xpose.msra.mxu0 0.0
    %4600 = vmatprep.subr.mxu0 0.0
    %4601 = vmatpush1.xpose.msra.mxu0 0.0
    %4602 = vmatprep.subr.mxu0 0.0
    %4603 = vmatpush1.xpose.msra.mxu0 0.0
    %4604 = vmatprep.subr.mxu0 0.0
    %4605 = vmatpush1.xpose.msra.mxu0 0.0
    %4606 = vmatprep.subr.mxu0 0.0
    %4607 = vmatpush1.xpose.msra.mxu0 0.0
    %4608 = vmatprep.subr.mxu0 0.0
    %4609 = vmatpush1.xpose.msra.mxu0 0.0
    %4610 = vmatprep.subr.mxu0 0.0
    %4611 = vmatpush1.xpose.msra.mxu0 0.0
    %4612 = vmatprep.subr.mxu0 0.0
    %4613 = vmatpush1.xpose.msra.mxu0 %v4580
    %4614 = vmatprep.subr.mxu0 0.0
    %4615 = vmatpush2.xpose.msra.mxu0 0.0
    %4616 = vmatprep.subr.mxu0 0.0
    %4617 = vmatpush2.xpose.msra.mxu0 0.0
    %4618 = vmatprep.subr.mxu0 0.0
    %4619 = vmatpush2.xpose.msra.mxu0 0.0
    %4620 = vmatprep.subr.mxu0 0.0
    %4621 = vmatpush2.xpose.msra.mxu0 0.0
    %4622 = vmatprep.subr.mxu0 0.0
    %4623 = vmatpush2.xpose.msra.mxu0 0.0
    %4624 = vmatprep.subr.mxu0 0.0
    %4625 = vmatpush2.xpose.msra.mxu0 0.0
    %4626 = vmatprep.subr.mxu0 0.0
    %4627 = vmatpush2.xpose.msra.mxu0 0.0
    %4628 = vmatprep.subr.mxu0 0.0
    %4629 = vmatpush2.xpose.msra.mxu0 0.0
    %4630 = vmatprep.subr.mxu0 0.0
    %4631 = vmatpush2.xpose.msra.mxu0 0.0
    %4632 = vmatprep.subr.mxu0 0.0
    %4633 = vmatpush2.xpose.msra.mxu0 0.0
    %4634 = vmatprep.subr.mxu0 0.0
    %4635 = vmatpush2.xpose.msra.mxu0 0.0
    %4636 = vmatprep.subr.mxu0 0.0
    %4637 = vmatpush2.xpose.msra.mxu0 0.0
    %4638 = vmatprep.subr.mxu0 0.0
    %4639 = vmatpush2.xpose.msra.mxu0 0.0
    %4640 = vmatprep.subr.mxu0 0.0
    %4641 = vmatpush2.xpose.msra.mxu0 0.0
    %4642 = vmatprep.subr.mxu0 0.0
    %4643 = vmatpush2.xpose.msra.mxu0 0.0
    %4644 = vmatprep.subr.mxu0 0.0
    %4645 = vmatpush2.xpose.msra.mxu0 0.0
    %4646 = vmatprep.mubr.f32.mxu0 0.0
    %4647 = vmatmul.mubr.f32.gmra.mxu0 %v4578
    %v4648 = vpop.f32.mrf.mxu0
    %v4649 = vadd.f32 0.0, %v4648
    %v4650 = vpop.f32.mrf.mxu0
    %4651 = vdwg.mxu0
    %4652 = vrot.lane.b32.xlu0 %v213, 104
    %v4653 = vpop.permute.xlu0 %4652
    %4654 = vrot.lane.b32.xlu0 %v353, 104
    %v4655 = vpop.permute.xlu0 %4654
    %v4656 = vsel %vm371, %v4653, 0
    %v4658 = vsel %vm371, %v4655, 0
    %4660 = vmatprep.subr.mxu0 0.0
    %4661 = vmatpush1.xpose.msra.mxu0 0.0
    %4662 = vmatprep.subr.mxu0 0.0
    %4663 = vmatpush1.xpose.msra.mxu0 0.0
    %4664 = vmatprep.subr.mxu0 0.0
    %4665 = vmatpush1.xpose.msra.mxu0 0.0
    %4666 = vmatprep.subr.mxu0 0.0
    %4667 = vmatpush1.xpose.msra.mxu0 0.0
    %4668 = vmatprep.subr.mxu0 0.0
    %4669 = vmatpush1.xpose.msra.mxu0 0.0
    %4670 = vmatprep.subr.mxu0 0.0
    %4671 = vmatpush1.xpose.msra.mxu0 0.0
    %4672 = vmatprep.subr.mxu0 0.0
    %4673 = vmatpush1.xpose.msra.mxu0 0.0
    %4674 = vmatprep.subr.mxu0 0.0
    %4675 = vmatpush1.xpose.msra.mxu0 0.0
    %4676 = vmatprep.subr.mxu0 0.0
    %4677 = vmatpush1.xpose.msra.mxu0 0.0
    %4678 = vmatprep.subr.mxu0 0.0
    %4679 = vmatpush1.xpose.msra.mxu0 0.0
    %4680 = vmatprep.subr.mxu0 0.0
    %4681 = vmatpush1.xpose.msra.mxu0 0.0
    %4682 = vmatprep.subr.mxu0 0.0
    %4683 = vmatpush1.xpose.msra.mxu0 0.0
    %4684 = vmatprep.subr.mxu0 0.0
    %4685 = vmatpush1.xpose.msra.mxu0 0.0
    %4686 = vmatprep.subr.mxu0 0.0
    %4687 = vmatpush1.xpose.msra.mxu0 0.0
    %4688 = vmatprep.subr.mxu0 0.0
    %4689 = vmatpush1.xpose.msra.mxu0 0.0
    %4690 = vmatprep.subr.mxu0 0.0
    %4691 = vmatpush1.xpose.msra.mxu0 %v4658
    %4692 = vmatprep.subr.mxu0 0.0
    %4693 = vmatpush2.xpose.msra.mxu0 0.0
    %4694 = vmatprep.subr.mxu0 0.0
    %4695 = vmatpush2.xpose.msra.mxu0 0.0
    %4696 = vmatprep.subr.mxu0 0.0
    %4697 = vmatpush2.xpose.msra.mxu0 0.0
    %4698 = vmatprep.subr.mxu0 0.0
    %4699 = vmatpush2.xpose.msra.mxu0 0.0
    %4700 = vmatprep.subr.mxu0 0.0
    %4701 = vmatpush2.xpose.msra.mxu0 0.0
    %4702 = vmatprep.subr.mxu0 0.0
    %4703 = vmatpush2.xpose.msra.mxu0 0.0
    %4704 = vmatprep.subr.mxu0 0.0
    %4705 = vmatpush2.xpose.msra.mxu0 0.0
    %4706 = vmatprep.subr.mxu0 0.0
    %4707 = vmatpush2.xpose.msra.mxu0 0.0
    %4708 = vmatprep.subr.mxu0 0.0
    %4709 = vmatpush2.xpose.msra.mxu0 0.0
    %4710 = vmatprep.subr.mxu0 0.0
    %4711 = vmatpush2.xpose.msra.mxu0 0.0
    %4712 = vmatprep.subr.mxu0 0.0
    %4713 = vmatpush2.xpose.msra.mxu0 0.0
    %4714 = vmatprep.subr.mxu0 0.0
    %4715 = vmatpush2.xpose.msra.mxu0 0.0
    %4716 = vmatprep.subr.mxu0 0.0
    %4717 = vmatpush2.xpose.msra.mxu0 0.0
    %4718 = vmatprep.subr.mxu0 0.0
    %4719 = vmatpush2.xpose.msra.mxu0 0.0
    %4720 = vmatprep.subr.mxu0 0.0
    %4721 = vmatpush2.xpose.msra.mxu0 0.0
    %4722 = vmatprep.subr.mxu0 0.0
    %4723 = vmatpush2.xpose.msra.mxu0 0.0
    %4724 = vmatprep.mubr.f32.mxu0 0.0
    %4725 = vmatmul.mubr.f32.gmra.mxu0 %v4656
    %v4726 = vpop.f32.mrf.mxu0
    %v4727 = vadd.f32 0.0, %v4726
    %v4728 = vpop.f32.mrf.mxu0
    %4729 = vdwg.mxu0
    %4730 = vrot.lane.b32.xlu0 %v218, 104
    %v4731 = vpop.permute.xlu0 %4730
    %4732 = vrot.lane.b32.xlu0 %v358, 104
    %v4733 = vpop.permute.xlu0 %4732
    %v4734 = vsel %vm371, %v4731, 0
    %v4736 = vsel %vm371, %v4733, 0
    %4738 = vmatprep.subr.mxu0 0.0
    %4739 = vmatpush1.xpose.msra.mxu0 0.0
    %4740 = vmatprep.subr.mxu0 0.0
    %4741 = vmatpush1.xpose.msra.mxu0 0.0
    %4742 = vmatprep.subr.mxu0 0.0
    %4743 = vmatpush1.xpose.msra.mxu0 0.0
    %4744 = vmatprep.subr.mxu0 0.0
    %4745 = vmatpush1.xpose.msra.mxu0 0.0
    %4746 = vmatprep.subr.mxu0 0.0
    %4747 = vmatpush1.xpose.msra.mxu0 0.0
    %4748 = vmatprep.subr.mxu0 0.0
    %4749 = vmatpush1.xpose.msra.mxu0 0.0
    %4750 = vmatprep.subr.mxu0 0.0
    %4751 = vmatpush1.xpose.msra.mxu0 0.0
    %4752 = vmatprep.subr.mxu0 0.0
    %4753 = vmatpush1.xpose.msra.mxu0 0.0
    %4754 = vmatprep.subr.mxu0 0.0
    %4755 = vmatpush1.xpose.msra.mxu0 0.0
    %4756 = vmatprep.subr.mxu0 0.0
    %4757 = vmatpush1.xpose.msra.mxu0 0.0
    %4758 = vmatprep.subr.mxu0 0.0
    %4759 = vmatpush1.xpose.msra.mxu0 0.0
    %4760 = vmatprep.subr.mxu0 0.0
    %4761 = vmatpush1.xpose.msra.mxu0 0.0
    %4762 = vmatprep.subr.mxu0 0.0
    %4763 = vmatpush1.xpose.msra.mxu0 0.0
    %4764 = vmatprep.subr.mxu0 0.0
    %4765 = vmatpush1.xpose.msra.mxu0 0.0
    %4766 = vmatprep.subr.mxu0 0.0
    %4767 = vmatpush1.xpose.msra.mxu0 0.0
    %4768 = vmatprep.subr.mxu0 0.0
    %4769 = vmatpush1.xpose.msra.mxu0 %v4736
    %4770 = vmatprep.subr.mxu0 0.0
    %4771 = vmatpush2.xpose.msra.mxu0 0.0
    %4772 = vmatprep.subr.mxu0 0.0
    %4773 = vmatpush2.xpose.msra.mxu0 0.0
    %4774 = vmatprep.subr.mxu0 0.0
    %4775 = vmatpush2.xpose.msra.mxu0 0.0
    %4776 = vmatprep.subr.mxu0 0.0
    %4777 = vmatpush2.xpose.msra.mxu0 0.0
    %4778 = vmatprep.subr.mxu0 0.0
    %4779 = vmatpush2.xpose.msra.mxu0 0.0
    %4780 = vmatprep.subr.mxu0 0.0
    %4781 = vmatpush2.xpose.msra.mxu0 0.0
    %4782 = vmatprep.subr.mxu0 0.0
    %4783 = vmatpush2.xpose.msra.mxu0 0.0
    %4784 = vmatprep.subr.mxu0 0.0
    %4785 = vmatpush2.xpose.msra.mxu0 0.0
    %4786 = vmatprep.subr.mxu0 0.0
    %4787 = vmatpush2.xpose.msra.mxu0 0.0
    %4788 = vmatprep.subr.mxu0 0.0
    %4789 = vmatpush2.xpose.msra.mxu0 0.0
    %4790 = vmatprep.subr.mxu0 0.0
    %4791 = vmatpush2.xpose.msra.mxu0 0.0
    %4792 = vmatprep.subr.mxu0 0.0
    %4793 = vmatpush2.xpose.msra.mxu0 0.0
    %4794 = vmatprep.subr.mxu0 0.0
    %4795 = vmatpush2.xpose.msra.mxu0 0.0
    %4796 = vmatprep.subr.mxu0 0.0
    %4797 = vmatpush2.xpose.msra.mxu0 0.0
    %4798 = vmatprep.subr.mxu0 0.0
    %4799 = vmatpush2.xpose.msra.mxu0 0.0
    %4800 = vmatprep.subr.mxu0 0.0
    %4801 = vmatpush2.xpose.msra.mxu0 0.0
    %4802 = vmatprep.mubr.f32.mxu0 0.0
    %4803 = vmatmul.mubr.f32.gmra.mxu0 %v4734
    %v4804 = vpop.f32.mrf.mxu0
    %v4805 = vadd.f32 0.0, %v4804
    %v4806 = vpop.f32.mrf.mxu0
    %4807 = vdwg.mxu0
    %4808 = vrot.lane.b32.xlu0 %v223, 104
    %v4809 = vpop.permute.xlu0 %4808
    %4810 = vrot.lane.b32.xlu0 %v363, 104
    %v4811 = vpop.permute.xlu0 %4810
    %v4812 = vsel %vm371, %v4809, 0
    %v4814 = vsel %vm371, %v4811, 0
    %4816 = vmatprep.subr.mxu0 0.0
    %4817 = vmatpush1.xpose.msra.mxu0 0.0
    %4818 = vmatprep.subr.mxu0 0.0
    %4819 = vmatpush1.xpose.msra.mxu0 0.0
    %4820 = vmatprep.subr.mxu0 0.0
    %4821 = vmatpush1.xpose.msra.mxu0 0.0
    %4822 = vmatprep.subr.mxu0 0.0
    %4823 = vmatpush1.xpose.msra.mxu0 0.0
    %4824 = vmatprep.subr.mxu0 0.0
    %4825 = vmatpush1.xpose.msra.mxu0 0.0
    %4826 = vmatprep.subr.mxu0 0.0
    %4827 = vmatpush1.xpose.msra.mxu0 0.0
    %4828 = vmatprep.subr.mxu0 0.0
    %4829 = vmatpush1.xpose.msra.mxu0 0.0
    %4830 = vmatprep.subr.mxu0 0.0
    %4831 = vmatpush1.xpose.msra.mxu0 0.0
    %4832 = vmatprep.subr.mxu0 0.0
    %4833 = vmatpush1.xpose.msra.mxu0 0.0
    %4834 = vmatprep.subr.mxu0 0.0
    %4835 = vmatpush1.xpose.msra.mxu0 0.0
    %4836 = vmatprep.subr.mxu0 0.0
    %4837 = vmatpush1.xpose.msra.mxu0 0.0
    %4838 = vmatprep.subr.mxu0 0.0
    %4839 = vmatpush1.xpose.msra.mxu0 0.0
    %4840 = vmatprep.subr.mxu0 0.0
    %4841 = vmatpush1.xpose.msra.mxu0 0.0
    %4842 = vmatprep.subr.mxu0 0.0
    %4843 = vmatpush1.xpose.msra.mxu0 0.0
    %4844 = vmatprep.subr.mxu0 0.0
    %4845 = vmatpush1.xpose.msra.mxu0 0.0
    %4846 = vmatprep.subr.mxu0 0.0
    %4847 = vmatpush1.xpose.msra.mxu0 %v4814
    %4848 = vmatprep.subr.mxu0 0.0
    %4849 = vmatpush2.xpose.msra.mxu0 0.0
    %4850 = vmatprep.subr.mxu0 0.0
    %4851 = vmatpush2.xpose.msra.mxu0 0.0
    %4852 = vmatprep.subr.mxu0 0.0
    %4853 = vmatpush2.xpose.msra.mxu0 0.0
    %4854 = vmatprep.subr.mxu0 0.0
    %4855 = vmatpush2.xpose.msra.mxu0 0.0
    %4856 = vmatprep.subr.mxu0 0.0
    %4857 = vmatpush2.xpose.msra.mxu0 0.0
    %4858 = vmatprep.subr.mxu0 0.0
    %4859 = vmatpush2.xpose.msra.mxu0 0.0
    %4860 = vmatprep.subr.mxu0 0.0
    %4861 = vmatpush2.xpose.msra.mxu0 0.0
    %4862 = vmatprep.subr.mxu0 0.0
    %4863 = vmatpush2.xpose.msra.mxu0 0.0
    %4864 = vmatprep.subr.mxu0 0.0
    %4865 = vmatpush2.xpose.msra.mxu0 0.0
    %4866 = vmatprep.subr.mxu0 0.0
    %4867 = vmatpush2.xpose.msra.mxu0 0.0
    %4868 = vmatprep.subr.mxu0 0.0
    %4869 = vmatpush2.xpose.msra.mxu0 0.0
    %4870 = vmatprep.subr.mxu0 0.0
    %4871 = vmatpush2.xpose.msra.mxu0 0.0
    %4872 = vmatprep.subr.mxu0 0.0
    %4873 = vmatpush2.xpose.msra.mxu0 0.0
    %4874 = vmatprep.subr.mxu0 0.0
    %4875 = vmatpush2.xpose.msra.mxu0 0.0
    %4876 = vmatprep.subr.mxu0 0.0
    %4877 = vmatpush2.xpose.msra.mxu0 0.0
    %4878 = vmatprep.subr.mxu0 0.0
    %4879 = vmatpush2.xpose.msra.mxu0 0.0
    %4880 = vmatprep.mubr.f32.mxu0 0.0
    %4881 = vmatmul.mubr.f32.gmra.mxu0 %v4812
    %v4882 = vpop.f32.mrf.mxu0
    %v4883 = vadd.f32 0.0, %v4882
    %v4884 = vpop.f32.mrf.mxu0
    %4885 = vdwg.mxu0
    %4886 = vrot.lane.b32.xlu0 %v228, 104
    %v4887 = vpop.permute.xlu0 %4886
    %4888 = vrot.lane.b32.xlu0 %v368, 104
    %v4889 = vpop.permute.xlu0 %4888
    %v4890 = vsel %vm371, %v4887, 0
    %v4892 = vsel %vm371, %v4889, 0
    %4894 = vmatprep.subr.mxu0 0.0
    %4895 = vmatpush1.xpose.msra.mxu0 0.0
    %4896 = vmatprep.subr.mxu0 0.0
    %4897 = vmatpush1.xpose.msra.mxu0 0.0
    %4898 = vmatprep.subr.mxu0 0.0
    %4899 = vmatpush1.xpose.msra.mxu0 0.0
    %4900 = vmatprep.subr.mxu0 0.0
    %4901 = vmatpush1.xpose.msra.mxu0 0.0
    %4902 = vmatprep.subr.mxu0 0.0
    %4903 = vmatpush1.xpose.msra.mxu0 0.0
    %4904 = vmatprep.subr.mxu0 0.0
    %4905 = vmatpush1.xpose.msra.mxu0 0.0
    %4906 = vmatprep.subr.mxu0 0.0
    %4907 = vmatpush1.xpose.msra.mxu0 0.0
    %4908 = vmatprep.subr.mxu0 0.0
    %4909 = vmatpush1.xpose.msra.mxu0 0.0
    %4910 = vmatprep.subr.mxu0 0.0
    %4911 = vmatpush1.xpose.msra.mxu0 0.0
    %4912 = vmatprep.subr.mxu0 0.0
    %4913 = vmatpush1.xpose.msra.mxu0 0.0
    %4914 = vmatprep.subr.mxu0 0.0
    %4915 = vmatpush1.xpose.msra.mxu0 0.0
    %4916 = vmatprep.subr.mxu0 0.0
    %4917 = vmatpush1.xpose.msra.mxu0 0.0
    %4918 = vmatprep.subr.mxu0 0.0
    %4919 = vmatpush1.xpose.msra.mxu0 0.0
    %4920 = vmatprep.subr.mxu0 0.0
    %4921 = vmatpush1.xpose.msra.mxu0 0.0
    %4922 = vmatprep.subr.mxu0 0.0
    %4923 = vmatpush1.xpose.msra.mxu0 0.0
    %4924 = vmatprep.subr.mxu0 0.0
    %4925 = vmatpush1.xpose.msra.mxu0 %v4892
    %4926 = vmatprep.subr.mxu0 0.0
    %4927 = vmatpush2.xpose.msra.mxu0 0.0
    %4928 = vmatprep.subr.mxu0 0.0
    %4929 = vmatpush2.xpose.msra.mxu0 0.0
    %4930 = vmatprep.subr.mxu0 0.0
    %4931 = vmatpush2.xpose.msra.mxu0 0.0
    %4932 = vmatprep.subr.mxu0 0.0
    %4933 = vmatpush2.xpose.msra.mxu0 0.0
    %4934 = vmatprep.subr.mxu0 0.0
    %4935 = vmatpush2.xpose.msra.mxu0 0.0
    %4936 = vmatprep.subr.mxu0 0.0
    %4937 = vmatpush2.xpose.msra.mxu0 0.0
    %4938 = vmatprep.subr.mxu0 0.0
    %4939 = vmatpush2.xpose.msra.mxu0 0.0
    %4940 = vmatprep.subr.mxu0 0.0
    %4941 = vmatpush2.xpose.msra.mxu0 0.0
    %4942 = vmatprep.subr.mxu0 0.0
    %4943 = vmatpush2.xpose.msra.mxu0 0.0
    %4944 = vmatprep.subr.mxu0 0.0
    %4945 = vmatpush2.xpose.msra.mxu0 0.0
    %4946 = vmatprep.subr.mxu0 0.0
    %4947 = vmatpush2.xpose.msra.mxu0 0.0
    %4948 = vmatprep.subr.mxu0 0.0
    %4949 = vmatpush2.xpose.msra.mxu0 0.0
    %4950 = vmatprep.subr.mxu0 0.0
    %4951 = vmatpush2.xpose.msra.mxu0 0.0
    %4952 = vmatprep.subr.mxu0 0.0
    %4953 = vmatpush2.xpose.msra.mxu0 0.0
    %4954 = vmatprep.subr.mxu0 0.0
    %4955 = vmatpush2.xpose.msra.mxu0 0.0
    %4956 = vmatprep.subr.mxu0 0.0
    %4957 = vmatpush2.xpose.msra.mxu0 0.0
    %4958 = vmatprep.mubr.f32.mxu0 0.0
    %4959 = vmatmul.mubr.f32.gmra.mxu0 %v4890
    %v4960 = vpop.f32.mrf.mxu0
    %v4961 = vadd.f32 0.0, %v4960
    %v4962 = vpop.f32.mrf.mxu0
    %4963 = vdwg.mxu0
    %v4964 = vmul.f32 %v4415, 0.35355338
    %v4965 = vmul.f32 %v4493, 0.35355338
    %v4966 = vmul.f32 %v4571, 0.35355338
    %v4967 = vmul.f32 %v4649, 0.35355338
    %v4968 = vmul.f32 %v4727, 0.35355338
    %v4969 = vmul.f32 %v4805, 0.35355338
    %v4970 = vmul.f32 %v4883, 0.35355338
    %v4971 = vmul.f32 %v4961, 0.35355338
    %v4972 = vsel %vm371, %v4964, -inf
    %4973 = vmax.xlane.f32.xlu0 %v4972
    %v4974 = vpop.xlane.xlu0 %4973
    %v4975 = vsel %vm371, %v4965, -inf
    %4976 = vmax.xlane.f32.xlu0 %v4975
    %v4977 = vpop.xlane.xlu0 %4976
    %v4978 = vsel %vm371, %v4966, -inf
    %4979 = vmax.xlane.f32.xlu0 %v4978
    %v4980 = vpop.xlane.xlu0 %4979
    %v4981 = vsel %vm371, %v4967, -inf
    %4982 = vmax.xlane.f32.xlu0 %v4981
    %v4983 = vpop.xlane.xlu0 %4982
    %v4984 = vsel %vm371, %v4968, -inf
    %4985 = vmax.xlane.f32.xlu0 %v4984
    %v4986 = vpop.xlane.xlu0 %4985
    %v4987 = vsel %vm371, %v4969, -inf
    %4988 = vmax.xlane.f32.xlu0 %v4987
    %v4989 = vpop.xlane.xlu0 %4988
    %v4990 = vsel %vm371, %v4970, -inf
    %4991 = vmax.xlane.f32.xlu0 %v4990
    %v4992 = vpop.xlane.xlu0 %4991
    %v4993 = vsel %vm371, %v4971, -inf
    %4994 = vmax.xlane.f32.xlu0 %v4993
    %v4995 = vpop.xlane.xlu0 %4994
    %v4996 = vsub.f32 %v4964, %v4974
    %v4997 = vsub.f32 %v4965, %v4977
    %v4998 = vsub.f32 %v4966, %v4980
    %v4999 = vsub.f32 %v4967, %v4983
    %v5000 = vsub.f32 %v4968, %v4986
    %v5001 = vsub.f32 %v4969, %v4989
    %v5002 = vsub.f32 %v4970, %v4992
    %v5003 = vsub.f32 %v4971, %v4995
    %v5004 = vmul.f32 %v4996, 1.442695
    %v5005 = vpow.pop %v5004
    %v5006 = vmul.f32 %v4997, 1.442695
    %v5007 = vpow.pop %v5006
    %v5008 = vmul.f32 %v4998, 1.442695
    %v5009 = vpow.pop %v5008
    %v5010 = vmul.f32 %v4999, 1.442695
    %v5011 = vpow.pop %v5010
    %v5012 = vmul.f32 %v5000, 1.442695
    %v5013 = vpow.pop %v5012
    %v5014 = vmul.f32 %v5001, 1.442695
    %v5015 = vpow.pop %v5014
    %v5016 = vmul.f32 %v5002, 1.442695
    %v5017 = vpow.pop %v5016
    %v5018 = vmul.f32 %v5003, 1.442695
    %v5019 = vpow.pop %v5018
    %v5020 = vsel %vm371, %v5005, 0.0
    %5021 = vadd.xlane.f32.xlu0 %v5020
    %v5022 = vpop.xlane.xlu0 %5021
    %v5023 = vsel %vm371, %v5007, 0.0
    %5024 = vadd.xlane.f32.xlu0 %v5023
    %v5025 = vpop.xlane.xlu0 %5024
    %v5026 = vsel %vm371, %v5009, 0.0
    %5027 = vadd.xlane.f32.xlu0 %v5026
    %v5028 = vpop.xlane.xlu0 %5027
    %v5029 = vsel %vm371, %v5011, 0.0
    %5030 = vadd.xlane.f32.xlu0 %v5029
    %v5031 = vpop.xlane.xlu0 %5030
    %v5032 = vsel %vm371, %v5013, 0.0
    %5033 = vadd.xlane.f32.xlu0 %v5032
    %v5034 = vpop.xlane.xlu0 %5033
    %v5035 = vsel %vm371, %v5015, 0.0
    %5036 = vadd.xlane.f32.xlu0 %v5035
    %v5037 = vpop.xlane.xlu0 %5036
    %v5038 = vsel %vm371, %v5017, 0.0
    %5039 = vadd.xlane.f32.xlu0 %v5038
    %v5040 = vpop.xlane.xlu0 %5039
    %v5041 = vsel %vm371, %v5019, 0.0
    %5042 = vadd.xlane.f32.xlu0 %v5041
    %v5043 = vpop.xlane.xlu0 %5042
    %v5044 = vrcp.pop %v5022
    %v5045 = vmul.f32 %v5005, %v5044
    %v5046 = vrcp.pop %v5025
    %v5047 = vmul.f32 %v5007, %v5046
    %v5048 = vrcp.pop %v5028
    %v5049 = vmul.f32 %v5009, %v5048
    %v5050 = vrcp.pop %v5031
    %v5051 = vmul.f32 %v5011, %v5050
    %v5052 = vrcp.pop %v5034
    %v5053 = vmul.f32 %v5013, %v5052
    %v5054 = vrcp.pop %v5037
    %v5055 = vmul.f32 %v5015, %v5054
    %v5056 = vrcp.pop %v5040
    %v5057 = vmul.f32 %v5017, %v5056
    %v5058 = vrcp.pop %v5043
    %v5059 = vmul.f32 %v5019, %v5058
    %5060 = vrot.lane.b32.xlu0 %v333, 72
    %v5061 = vpop.permute.xlu0 %5060
    %v5064 = vsel %vm371, %v5045, 0
    %5066 = vmatprep.subr.mxu0 0.0
    %5067 = vmatpush1.msra.mxu0 0.0
    %5068 = vmatprep.subr.mxu0 0.0
    %5069 = vmatpush1.msra.mxu0 0.0
    %5070 = vmatprep.subr.mxu0 0.0
    %5071 = vmatpush1.msra.mxu0 0.0
    %5072 = vmatprep.subr.mxu0 0.0
    %5073 = vmatpush1.msra.mxu0 0.0
    %5074 = vmatprep.subr.mxu0 0.0
    %5075 = vmatpush1.msra.mxu0 0.0
    %5076 = vmatprep.subr.mxu0 0.0
    %5077 = vmatpush1.msra.mxu0 0.0
    %5078 = vmatprep.subr.mxu0 0.0
    %5079 = vmatpush1.msra.mxu0 0.0
    %5080 = vmatprep.subr.mxu0 0.0
    %5081 = vmatpush1.msra.mxu0 0.0
    %5082 = vmatprep.subr.mxu0 0.0
    %5083 = vmatpush1.msra.mxu0 0.0
    %5084 = vmatprep.subr.mxu0 0.0
    %5085 = vmatpush1.msra.mxu0 0.0
    %5086 = vmatprep.subr.mxu0 0.0
    %5087 = vmatpush1.msra.mxu0 0.0
    %5088 = vmatprep.subr.mxu0 0.0
    %5089 = vmatpush1.msra.mxu0 0.0
    %5090 = vmatprep.subr.mxu0 0.0
    %5091 = vmatpush1.msra.mxu0 0.0
    %5092 = vmatprep.subr.mxu0 0.0
    %5093 = vmatpush1.msra.mxu0 0.0
    %5094 = vmatprep.subr.mxu0 0.0
    %5095 = vmatpush1.msra.mxu0 0.0
    %5096 = vmatprep.subr.mxu0 0.0
    %5097 = vmatpush1.msra.mxu0 %v5061
    %5098 = vmatprep.subr.mxu0 0.0
    %5099 = vmatpush2.msra.mxu0 0.0
    %5100 = vmatprep.subr.mxu0 0.0
    %5101 = vmatpush2.msra.mxu0 0.0
    %5102 = vmatprep.subr.mxu0 0.0
    %5103 = vmatpush2.msra.mxu0 0.0
    %5104 = vmatprep.subr.mxu0 0.0
    %5105 = vmatpush2.msra.mxu0 0.0
    %5106 = vmatprep.subr.mxu0 0.0
    %5107 = vmatpush2.msra.mxu0 0.0
    %5108 = vmatprep.subr.mxu0 0.0
    %5109 = vmatpush2.msra.mxu0 0.0
    %5110 = vmatprep.subr.mxu0 0.0
    %5111 = vmatpush2.msra.mxu0 0.0
    %5112 = vmatprep.subr.mxu0 0.0
    %5113 = vmatpush2.msra.mxu0 0.0
    %5114 = vmatprep.subr.mxu0 0.0
    %5115 = vmatpush2.msra.mxu0 0.0
    %5116 = vmatprep.subr.mxu0 0.0
    %5117 = vmatpush2.msra.mxu0 0.0
    %5118 = vmatprep.subr.mxu0 0.0
    %5119 = vmatpush2.msra.mxu0 0.0
    %5120 = vmatprep.subr.mxu0 0.0
    %5121 = vmatpush2.msra.mxu0 0.0
    %5122 = vmatprep.subr.mxu0 0.0
    %5123 = vmatpush2.msra.mxu0 0.0
    %5124 = vmatprep.subr.mxu0 0.0
    %5125 = vmatpush2.msra.mxu0 0.0
    %5126 = vmatprep.subr.mxu0 0.0
    %5127 = vmatpush2.msra.mxu0 0.0
    %5128 = vmatprep.subr.mxu0 0.0
    %5129 = vmatpush2.msra.mxu0 0.0
    %5130 = vmatprep.mubr.f32.mxu0 0.0
    %5131 = vmatmul.mubr.f32.gmra.mxu0 %v5064
    %v5132 = vpop.f32.mrf.mxu0
    %v5133 = vadd.f32 0.0, %v5132
    %v5134 = vpop.f32.mrf.mxu0
    %5135 = vdwg.mxu0
    %5136 = vrot.lane.b32.xlu0 %v338, 72
    %v5137 = vpop.permute.xlu0 %5136
    %v5140 = vsel %vm371, %v5047, 0
    %5142 = vmatprep.subr.mxu0 0.0
    %5143 = vmatpush1.msra.mxu0 0.0
    %5144 = vmatprep.subr.mxu0 0.0
    %5145 = vmatpush1.msra.mxu0 0.0
    %5146 = vmatprep.subr.mxu0 0.0
    %5147 = vmatpush1.msra.mxu0 0.0
    %5148 = vmatprep.subr.mxu0 0.0
    %5149 = vmatpush1.msra.mxu0 0.0
    %5150 = vmatprep.subr.mxu0 0.0
    %5151 = vmatpush1.msra.mxu0 0.0
    %5152 = vmatprep.subr.mxu0 0.0
    %5153 = vmatpush1.msra.mxu0 0.0
    %5154 = vmatprep.subr.mxu0 0.0
    %5155 = vmatpush1.msra.mxu0 0.0
    %5156 = vmatprep.subr.mxu0 0.0
    %5157 = vmatpush1.msra.mxu0 0.0
    %5158 = vmatprep.subr.mxu0 0.0
    %5159 = vmatpush1.msra.mxu0 0.0
    %5160 = vmatprep.subr.mxu0 0.0
    %5161 = vmatpush1.msra.mxu0 0.0
    %5162 = vmatprep.subr.mxu0 0.0
    %5163 = vmatpush1.msra.mxu0 0.0
    %5164 = vmatprep.subr.mxu0 0.0
    %5165 = vmatpush1.msra.mxu0 0.0
    %5166 = vmatprep.subr.mxu0 0.0
    %5167 = vmatpush1.msra.mxu0 0.0
    %5168 = vmatprep.subr.mxu0 0.0
    %5169 = vmatpush1.msra.mxu0 0.0
    %5170 = vmatprep.subr.mxu0 0.0
    %5171 = vmatpush1.msra.mxu0 0.0
    %5172 = vmatprep.subr.mxu0 0.0
    %5173 = vmatpush1.msra.mxu0 %v5137
    %5174 = vmatprep.subr.mxu0 0.0
    %5175 = vmatpush2.msra.mxu0 0.0
    %5176 = vmatprep.subr.mxu0 0.0
    %5177 = vmatpush2.msra.mxu0 0.0
    %5178 = vmatprep.subr.mxu0 0.0
    %5179 = vmatpush2.msra.mxu0 0.0
    %5180 = vmatprep.subr.mxu0 0.0
    %5181 = vmatpush2.msra.mxu0 0.0
    %5182 = vmatprep.subr.mxu0 0.0
    %5183 = vmatpush2.msra.mxu0 0.0
    %5184 = vmatprep.subr.mxu0 0.0
    %5185 = vmatpush2.msra.mxu0 0.0
    %5186 = vmatprep.subr.mxu0 0.0
    %5187 = vmatpush2.msra.mxu0 0.0
    %5188 = vmatprep.subr.mxu0 0.0
    %5189 = vmatpush2.msra.mxu0 0.0
    %5190 = vmatprep.subr.mxu0 0.0
    %5191 = vmatpush2.msra.mxu0 0.0
    %5192 = vmatprep.subr.mxu0 0.0
    %5193 = vmatpush2.msra.mxu0 0.0
    %5194 = vmatprep.subr.mxu0 0.0
    %5195 = vmatpush2.msra.mxu0 0.0
    %5196 = vmatprep.subr.mxu0 0.0
    %5197 = vmatpush2.msra.mxu0 0.0
    %5198 = vmatprep.subr.mxu0 0.0
    %5199 = vmatpush2.msra.mxu0 0.0
    %5200 = vmatprep.subr.mxu0 0.0
    %5201 = vmatpush2.msra.mxu0 0.0
    %5202 = vmatprep.subr.mxu0 0.0
    %5203 = vmatpush2.msra.mxu0 0.0
    %5204 = vmatprep.subr.mxu0 0.0
    %5205 = vmatpush2.msra.mxu0 0.0
    %5206 = vmatprep.mubr.f32.mxu0 0.0
    %5207 = vmatmul.mubr.f32.gmra.mxu0 %v5140
    %v5208 = vpop.f32.mrf.mxu0
    %v5209 = vadd.f32 0.0, %v5208
    %v5210 = vpop.f32.mrf.mxu0
    %5211 = vdwg.mxu0
    %5212 = vrot.lane.b32.xlu0 %v343, 72
    %v5213 = vpop.permute.xlu0 %5212
    %v5216 = vsel %vm371, %v5049, 0
    %5218 = vmatprep.subr.mxu0 0.0
    %5219 = vmatpush1.msra.mxu0 0.0
    %5220 = vmatprep.subr.mxu0 0.0
    %5221 = vmatpush1.msra.mxu0 0.0
    %5222 = vmatprep.subr.mxu0 0.0
    %5223 = vmatpush1.msra.mxu0 0.0
    %5224 = vmatprep.subr.mxu0 0.0
    %5225 = vmatpush1.msra.mxu0 0.0
    %5226 = vmatprep.subr.mxu0 0.0
    %5227 = vmatpush1.msra.mxu0 0.0
    %5228 = vmatprep.subr.mxu0 0.0
    %5229 = vmatpush1.msra.mxu0 0.0
    %5230 = vmatprep.subr.mxu0 0.0
    %5231 = vmatpush1.msra.mxu0 0.0
    %5232 = vmatprep.subr.mxu0 0.0
    %5233 = vmatpush1.msra.mxu0 0.0
    %5234 = vmatprep.subr.mxu0 0.0
    %5235 = vmatpush1.msra.mxu0 0.0
    %5236 = vmatprep.subr.mxu0 0.0
    %5237 = vmatpush1.msra.mxu0 0.0
    %5238 = vmatprep.subr.mxu0 0.0
    %5239 = vmatpush1.msra.mxu0 0.0
    %5240 = vmatprep.subr.mxu0 0.0
    %5241 = vmatpush1.msra.mxu0 0.0
    %5242 = vmatprep.subr.mxu0 0.0
    %5243 = vmatpush1.msra.mxu0 0.0
    %5244 = vmatprep.subr.mxu0 0.0
    %5245 = vmatpush1.msra.mxu0 0.0
    %5246 = vmatprep.subr.mxu0 0.0
    %5247 = vmatpush1.msra.mxu0 0.0
    %5248 = vmatprep.subr.mxu0 0.0
    %5249 = vmatpush1.msra.mxu0 %v5213
    %5250 = vmatprep.subr.mxu0 0.0
    %5251 = vmatpush2.msra.mxu0 0.0
    %5252 = vmatprep.subr.mxu0 0.0
    %5253 = vmatpush2.msra.mxu0 0.0
    %5254 = vmatprep.subr.mxu0 0.0
    %5255 = vmatpush2.msra.mxu0 0.0
    %5256 = vmatprep.subr.mxu0 0.0
    %5257 = vmatpush2.msra.mxu0 0.0
    %5258 = vmatprep.subr.mxu0 0.0
    %5259 = vmatpush2.msra.mxu0 0.0
    %5260 = vmatprep.subr.mxu0 0.0
    %5261 = vmatpush2.msra.mxu0 0.0
    %5262 = vmatprep.subr.mxu0 0.0
    %5263 = vmatpush2.msra.mxu0 0.0
    %5264 = vmatprep.subr.mxu0 0.0
    %5265 = vmatpush2.msra.mxu0 0.0
    %5266 = vmatprep.subr.mxu0 0.0
    %5267 = vmatpush2.msra.mxu0 0.0
    %5268 = vmatprep.subr.mxu0 0.0
    %5269 = vmatpush2.msra.mxu0 0.0
    %5270 = vmatprep.subr.mxu0 0.0
    %5271 = vmatpush2.msra.mxu0 0.0
    %5272 = vmatprep.subr.mxu0 0.0
    %5273 = vmatpush2.msra.mxu0 0.0
    %5274 = vmatprep.subr.mxu0 0.0
    %5275 = vmatpush2.msra.mxu0 0.0
    %5276 = vmatprep.subr.mxu0 0.0
    %5277 = vmatpush2.msra.mxu0 0.0
    %5278 = vmatprep.subr.mxu0 0.0
    %5279 = vmatpush2.msra.mxu0 0.0
    %5280 = vmatprep.subr.mxu0 0.0
    %5281 = vmatpush2.msra.mxu0 0.0
    %5282 = vmatprep.mubr.f32.mxu0 0.0
    %5283 = vmatmul.mubr.f32.gmra.mxu0 %v5216
    %v5284 = vpop.f32.mrf.mxu0
    %v5285 = vadd.f32 0.0, %v5284
    %v5286 = vpop.f32.mrf.mxu0
    %5287 = vdwg.mxu0
    %5288 = vrot.lane.b32.xlu0 %v348, 72
    %v5289 = vpop.permute.xlu0 %5288
    %v5292 = vsel %vm371, %v5051, 0
    %5294 = vmatprep.subr.mxu0 0.0
    %5295 = vmatpush1.msra.mxu0 0.0
    %5296 = vmatprep.subr.mxu0 0.0
    %5297 = vmatpush1.msra.mxu0 0.0
    %5298 = vmatprep.subr.mxu0 0.0
    %5299 = vmatpush1.msra.mxu0 0.0
    %5300 = vmatprep.subr.mxu0 0.0
    %5301 = vmatpush1.msra.mxu0 0.0
    %5302 = vmatprep.subr.mxu0 0.0
    %5303 = vmatpush1.msra.mxu0 0.0
    %5304 = vmatprep.subr.mxu0 0.0
    %5305 = vmatpush1.msra.mxu0 0.0
    %5306 = vmatprep.subr.mxu0 0.0
    %5307 = vmatpush1.msra.mxu0 0.0
    %5308 = vmatprep.subr.mxu0 0.0
    %5309 = vmatpush1.msra.mxu0 0.0
    %5310 = vmatprep.subr.mxu0 0.0
    %5311 = vmatpush1.msra.mxu0 0.0
    %5312 = vmatprep.subr.mxu0 0.0
    %5313 = vmatpush1.msra.mxu0 0.0
    %5314 = vmatprep.subr.mxu0 0.0
    %5315 = vmatpush1.msra.mxu0 0.0
    %5316 = vmatprep.subr.mxu0 0.0
    %5317 = vmatpush1.msra.mxu0 0.0
    %5318 = vmatprep.subr.mxu0 0.0
    %5319 = vmatpush1.msra.mxu0 0.0
    %5320 = vmatprep.subr.mxu0 0.0
    %5321 = vmatpush1.msra.mxu0 0.0
    %5322 = vmatprep.subr.mxu0 0.0
    %5323 = vmatpush1.msra.mxu0 0.0
    %5324 = vmatprep.subr.mxu0 0.0
    %5325 = vmatpush1.msra.mxu0 %v5289
    %5326 = vmatprep.subr.mxu0 0.0
    %5327 = vmatpush2.msra.mxu0 0.0
    %5328 = vmatprep.subr.mxu0 0.0
    %5329 = vmatpush2.msra.mxu0 0.0
    %5330 = vmatprep.subr.mxu0 0.0
    %5331 = vmatpush2.msra.mxu0 0.0
    %5332 = vmatprep.subr.mxu0 0.0
    %5333 = vmatpush2.msra.mxu0 0.0
    %5334 = vmatprep.subr.mxu0 0.0
    %5335 = vmatpush2.msra.mxu0 0.0
    %5336 = vmatprep.subr.mxu0 0.0
    %5337 = vmatpush2.msra.mxu0 0.0
    %5338 = vmatprep.subr.mxu0 0.0
    %5339 = vmatpush2.msra.mxu0 0.0
    %5340 = vmatprep.subr.mxu0 0.0
    %5341 = vmatpush2.msra.mxu0 0.0
    %5342 = vmatprep.subr.mxu0 0.0
    %5343 = vmatpush2.msra.mxu0 0.0
    %5344 = vmatprep.subr.mxu0 0.0
    %5345 = vmatpush2.msra.mxu0 0.0
    %5346 = vmatprep.subr.mxu0 0.0
    %5347 = vmatpush2.msra.mxu0 0.0
    %5348 = vmatprep.subr.mxu0 0.0
    %5349 = vmatpush2.msra.mxu0 0.0
    %5350 = vmatprep.subr.mxu0 0.0
    %5351 = vmatpush2.msra.mxu0 0.0
    %5352 = vmatprep.subr.mxu0 0.0
    %5353 = vmatpush2.msra.mxu0 0.0
    %5354 = vmatprep.subr.mxu0 0.0
    %5355 = vmatpush2.msra.mxu0 0.0
    %5356 = vmatprep.subr.mxu0 0.0
    %5357 = vmatpush2.msra.mxu0 0.0
    %5358 = vmatprep.mubr.f32.mxu0 0.0
    %5359 = vmatmul.mubr.f32.gmra.mxu0 %v5292
    %v5360 = vpop.f32.mrf.mxu0
    %v5361 = vadd.f32 0.0, %v5360
    %v5362 = vpop.f32.mrf.mxu0
    %5363 = vdwg.mxu0
    %5364 = vrot.lane.b32.xlu0 %v353, 72
    %v5365 = vpop.permute.xlu0 %5364
    %v5368 = vsel %vm371, %v5053, 0
    %5370 = vmatprep.subr.mxu0 0.0
    %5371 = vmatpush1.msra.mxu0 0.0
    %5372 = vmatprep.subr.mxu0 0.0
    %5373 = vmatpush1.msra.mxu0 0.0
    %5374 = vmatprep.subr.mxu0 0.0
    %5375 = vmatpush1.msra.mxu0 0.0
    %5376 = vmatprep.subr.mxu0 0.0
    %5377 = vmatpush1.msra.mxu0 0.0
    %5378 = vmatprep.subr.mxu0 0.0
    %5379 = vmatpush1.msra.mxu0 0.0
    %5380 = vmatprep.subr.mxu0 0.0
    %5381 = vmatpush1.msra.mxu0 0.0
    %5382 = vmatprep.subr.mxu0 0.0
    %5383 = vmatpush1.msra.mxu0 0.0
    %5384 = vmatprep.subr.mxu0 0.0
    %5385 = vmatpush1.msra.mxu0 0.0
    %5386 = vmatprep.subr.mxu0 0.0
    %5387 = vmatpush1.msra.mxu0 0.0
    %5388 = vmatprep.subr.mxu0 0.0
    %5389 = vmatpush1.msra.mxu0 0.0
    %5390 = vmatprep.subr.mxu0 0.0
    %5391 = vmatpush1.msra.mxu0 0.0
    %5392 = vmatprep.subr.mxu0 0.0
    %5393 = vmatpush1.msra.mxu0 0.0
    %5394 = vmatprep.subr.mxu0 0.0
    %5395 = vmatpush1.msra.mxu0 0.0
    %5396 = vmatprep.subr.mxu0 0.0
    %5397 = vmatpush1.msra.mxu0 0.0
    %5398 = vmatprep.subr.mxu0 0.0
    %5399 = vmatpush1.msra.mxu0 0.0
    %5400 = vmatprep.subr.mxu0 0.0
    %5401 = vmatpush1.msra.mxu0 %v5365
    %5402 = vmatprep.subr.mxu0 0.0
    %5403 = vmatpush2.msra.mxu0 0.0
    %5404 = vmatprep.subr.mxu0 0.0
    %5405 = vmatpush2.msra.mxu0 0.0
    %5406 = vmatprep.subr.mxu0 0.0
    %5407 = vmatpush2.msra.mxu0 0.0
    %5408 = vmatprep.subr.mxu0 0.0
    %5409 = vmatpush2.msra.mxu0 0.0
    %5410 = vmatprep.subr.mxu0 0.0
    %5411 = vmatpush2.msra.mxu0 0.0
    %5412 = vmatprep.subr.mxu0 0.0
    %5413 = vmatpush2.msra.mxu0 0.0
    %5414 = vmatprep.subr.mxu0 0.0
    %5415 = vmatpush2.msra.mxu0 0.0
    %5416 = vmatprep.subr.mxu0 0.0
    %5417 = vmatpush2.msra.mxu0 0.0
    %5418 = vmatprep.subr.mxu0 0.0
    %5419 = vmatpush2.msra.mxu0 0.0
    %5420 = vmatprep.subr.mxu0 0.0
    %5421 = vmatpush2.msra.mxu0 0.0
    %5422 = vmatprep.subr.mxu0 0.0
    %5423 = vmatpush2.msra.mxu0 0.0
    %5424 = vmatprep.subr.mxu0 0.0
    %5425 = vmatpush2.msra.mxu0 0.0
    %5426 = vmatprep.subr.mxu0 0.0
    %5427 = vmatpush2.msra.mxu0 0.0
    %5428 = vmatprep.subr.mxu0 0.0
    %5429 = vmatpush2.msra.mxu0 0.0
    %5430 = vmatprep.subr.mxu0 0.0
    %5431 = vmatpush2.msra.mxu0 0.0
    %5432 = vmatprep.subr.mxu0 0.0
    %5433 = vmatpush2.msra.mxu0 0.0
    %5434 = vmatprep.mubr.f32.mxu0 0.0
    %5435 = vmatmul.mubr.f32.gmra.mxu0 %v5368
    %v5436 = vpop.f32.mrf.mxu0
    %v5437 = vadd.f32 0.0, %v5436
    %v5438 = vpop.f32.mrf.mxu0
    %5439 = vdwg.mxu0
    %5440 = vrot.lane.b32.xlu0 %v358, 72
    %v5441 = vpop.permute.xlu0 %5440
    %v5444 = vsel %vm371, %v5055, 0
    %5446 = vmatprep.subr.mxu0 0.0
    %5447 = vmatpush1.msra.mxu0 0.0
    %5448 = vmatprep.subr.mxu0 0.0
    %5449 = vmatpush1.msra.mxu0 0.0
    %5450 = vmatprep.subr.mxu0 0.0
    %5451 = vmatpush1.msra.mxu0 0.0
    %5452 = vmatprep.subr.mxu0 0.0
    %5453 = vmatpush1.msra.mxu0 0.0
    %5454 = vmatprep.subr.mxu0 0.0
    %5455 = vmatpush1.msra.mxu0 0.0
    %5456 = vmatprep.subr.mxu0 0.0
    %5457 = vmatpush1.msra.mxu0 0.0
    %5458 = vmatprep.subr.mxu0 0.0
    %5459 = vmatpush1.msra.mxu0 0.0
    %5460 = vmatprep.subr.mxu0 0.0
    %5461 = vmatpush1.msra.mxu0 0.0
    %5462 = vmatprep.subr.mxu0 0.0
    %5463 = vmatpush1.msra.mxu0 0.0
    %5464 = vmatprep.subr.mxu0 0.0
    %5465 = vmatpush1.msra.mxu0 0.0
    %5466 = vmatprep.subr.mxu0 0.0
    %5467 = vmatpush1.msra.mxu0 0.0
    %5468 = vmatprep.subr.mxu0 0.0
    %5469 = vmatpush1.msra.mxu0 0.0
    %5470 = vmatprep.subr.mxu0 0.0
    %5471 = vmatpush1.msra.mxu0 0.0
    %5472 = vmatprep.subr.mxu0 0.0
    %5473 = vmatpush1.msra.mxu0 0.0
    %5474 = vmatprep.subr.mxu0 0.0
    %5475 = vmatpush1.msra.mxu0 0.0
    %5476 = vmatprep.subr.mxu0 0.0
    %5477 = vmatpush1.msra.mxu0 %v5441
    %5478 = vmatprep.subr.mxu0 0.0
    %5479 = vmatpush2.msra.mxu0 0.0
    %5480 = vmatprep.subr.mxu0 0.0
    %5481 = vmatpush2.msra.mxu0 0.0
    %5482 = vmatprep.subr.mxu0 0.0
    %5483 = vmatpush2.msra.mxu0 0.0
    %5484 = vmatprep.subr.mxu0 0.0
    %5485 = vmatpush2.msra.mxu0 0.0
    %5486 = vmatprep.subr.mxu0 0.0
    %5487 = vmatpush2.msra.mxu0 0.0
    %5488 = vmatprep.subr.mxu0 0.0
    %5489 = vmatpush2.msra.mxu0 0.0
    %5490 = vmatprep.subr.mxu0 0.0
    %5491 = vmatpush2.msra.mxu0 0.0
    %5492 = vmatprep.subr.mxu0 0.0
    %5493 = vmatpush2.msra.mxu0 0.0
    %5494 = vmatprep.subr.mxu0 0.0
    %5495 = vmatpush2.msra.mxu0 0.0
    %5496 = vmatprep.subr.mxu0 0.0
    %5497 = vmatpush2.msra.mxu0 0.0
    %5498 = vmatprep.subr.mxu0 0.0
    %5499 = vmatpush2.msra.mxu0 0.0
    %5500 = vmatprep.subr.mxu0 0.0
    %5501 = vmatpush2.msra.mxu0 0.0
    %5502 = vmatprep.subr.mxu0 0.0
    %5503 = vmatpush2.msra.mxu0 0.0
    %5504 = vmatprep.subr.mxu0 0.0
    %5505 = vmatpush2.msra.mxu0 0.0
    %5506 = vmatprep.subr.mxu0 0.0
    %5507 = vmatpush2.msra.mxu0 0.0
    %5508 = vmatprep.subr.mxu0 0.0
    %5509 = vmatpush2.msra.mxu0 0.0
    %5510 = vmatprep.mubr.f32.mxu0 0.0
    %5511 = vmatmul.mubr.f32.gmra.mxu0 %v5444
    %v5512 = vpop.f32.mrf.mxu0
    %v5513 = vadd.f32 0.0, %v5512
    %v5514 = vpop.f32.mrf.mxu0
    %5515 = vdwg.mxu0
    %5516 = vrot.lane.b32.xlu0 %v363, 72
    %v5517 = vpop.permute.xlu0 %5516
    %v5520 = vsel %vm371, %v5057, 0
    %5522 = vmatprep.subr.mxu0 0.0
    %5523 = vmatpush1.msra.mxu0 0.0
    %5524 = vmatprep.subr.mxu0 0.0
    %5525 = vmatpush1.msra.mxu0 0.0
    %5526 = vmatprep.subr.mxu0 0.0
    %5527 = vmatpush1.msra.mxu0 0.0
    %5528 = vmatprep.subr.mxu0 0.0
    %5529 = vmatpush1.msra.mxu0 0.0
    %5530 = vmatprep.subr.mxu0 0.0
    %5531 = vmatpush1.msra.mxu0 0.0
    %5532 = vmatprep.subr.mxu0 0.0
    %5533 = vmatpush1.msra.mxu0 0.0
    %5534 = vmatprep.subr.mxu0 0.0
    %5535 = vmatpush1.msra.mxu0 0.0
    %5536 = vmatprep.subr.mxu0 0.0
    %5537 = vmatpush1.msra.mxu0 0.0
    %5538 = vmatprep.subr.mxu0 0.0
    %5539 = vmatpush1.msra.mxu0 0.0
    %5540 = vmatprep.subr.mxu0 0.0
    %5541 = vmatpush1.msra.mxu0 0.0
    %5542 = vmatprep.subr.mxu0 0.0
    %5543 = vmatpush1.msra.mxu0 0.0
    %5544 = vmatprep.subr.mxu0 0.0
    %5545 = vmatpush1.msra.mxu0 0.0
    %5546 = vmatprep.subr.mxu0 0.0
    %5547 = vmatpush1.msra.mxu0 0.0
    %5548 = vmatprep.subr.mxu0 0.0
    %5549 = vmatpush1.msra.mxu0 0.0
    %5550 = vmatprep.subr.mxu0 0.0
    %5551 = vmatpush1.msra.mxu0 0.0
    %5552 = vmatprep.subr.mxu0 0.0
    %5553 = vmatpush1.msra.mxu0 %v5517
    %5554 = vmatprep.subr.mxu0 0.0
    %5555 = vmatpush2.msra.mxu0 0.0
    %5556 = vmatprep.subr.mxu0 0.0
    %5557 = vmatpush2.msra.mxu0 0.0
    %5558 = vmatprep.subr.mxu0 0.0
    %5559 = vmatpush2.msra.mxu0 0.0
    %5560 = vmatprep.subr.mxu0 0.0
    %5561 = vmatpush2.msra.mxu0 0.0
    %5562 = vmatprep.subr.mxu0 0.0
    %5563 = vmatpush2.msra.mxu0 0.0
    %5564 = vmatprep.subr.mxu0 0.0
    %5565 = vmatpush2.msra.mxu0 0.0
    %5566 = vmatprep.subr.mxu0 0.0
    %5567 = vmatpush2.msra.mxu0 0.0
    %5568 = vmatprep.subr.mxu0 0.0
    %5569 = vmatpush2.msra.mxu0 0.0
    %5570 = vmatprep.subr.mxu0 0.0
    %5571 = vmatpush2.msra.mxu0 0.0
    %5572 = vmatprep.subr.mxu0 0.0
    %5573 = vmatpush2.msra.mxu0 0.0
    %5574 = vmatprep.subr.mxu0 0.0
    %5575 = vmatpush2.msra.mxu0 0.0
    %5576 = vmatprep.subr.mxu0 0.0
    %5577 = vmatpush2.msra.mxu0 0.0
    %5578 = vmatprep.subr.mxu0 0.0
    %5579 = vmatpush2.msra.mxu0 0.0
    %5580 = vmatprep.subr.mxu0 0.0
    %5581 = vmatpush2.msra.mxu0 0.0
    %5582 = vmatprep.subr.mxu0 0.0
    %5583 = vmatpush2.msra.mxu0 0.0
    %5584 = vmatprep.subr.mxu0 0.0
    %5585 = vmatpush2.msra.mxu0 0.0
    %5586 = vmatprep.mubr.f32.mxu0 0.0
    %5587 = vmatmul.mubr.f32.gmra.mxu0 %v5520
    %v5588 = vpop.f32.mrf.mxu0
    %v5589 = vadd.f32 0.0, %v5588
    %v5590 = vpop.f32.mrf.mxu0
    %5591 = vdwg.mxu0
    %5592 = vrot.lane.b32.xlu0 %v368, 72
    %v5593 = vpop.permute.xlu0 %5592
    %v5596 = vsel %vm371, %v5059, 0
    %5598 = vmatprep.subr.mxu0 0.0
    %5599 = vmatpush1.msra.mxu0 0.0
    %5600 = vmatprep.subr.mxu0 0.0
    %5601 = vmatpush1.msra.mxu0 0.0
    %5602 = vmatprep.subr.mxu0 0.0
    %5603 = vmatpush1.msra.mxu0 0.0
    %5604 = vmatprep.subr.mxu0 0.0
    %5605 = vmatpush1.msra.mxu0 0.0
    %5606 = vmatprep.subr.mxu0 0.0
    %5607 = vmatpush1.msra.mxu0 0.0
    %5608 = vmatprep.subr.mxu0 0.0
    %5609 = vmatpush1.msra.mxu0 0.0
    %5610 = vmatprep.subr.mxu0 0.0
    %5611 = vmatpush1.msra.mxu0 0.0
    %5612 = vmatprep.subr.mxu0 0.0
    %5613 = vmatpush1.msra.mxu0 0.0
    %5614 = vmatprep.subr.mxu0 0.0
    %5615 = vmatpush1.msra.mxu0 0.0
    %5616 = vmatprep.subr.mxu0 0.0
    %5617 = vmatpush1.msra.mxu0 0.0
    %5618 = vmatprep.subr.mxu0 0.0
    %5619 = vmatpush1.msra.mxu0 0.0
    %5620 = vmatprep.subr.mxu0 0.0
    %5621 = vmatpush1.msra.mxu0 0.0
    %5622 = vmatprep.subr.mxu0 0.0
    %5623 = vmatpush1.msra.mxu0 0.0
    %5624 = vmatprep.subr.mxu0 0.0
    %5625 = vmatpush1.msra.mxu0 0.0
    %5626 = vmatprep.subr.mxu0 0.0
    %5627 = vmatpush1.msra.mxu0 0.0
    %5628 = vmatprep.subr.mxu0 0.0
    %5629 = vmatpush1.msra.mxu0 %v5593
    %5630 = vmatprep.subr.mxu0 0.0
    %5631 = vmatpush2.msra.mxu0 0.0
    %5632 = vmatprep.subr.mxu0 0.0
    %5633 = vmatpush2.msra.mxu0 0.0
    %5634 = vmatprep.subr.mxu0 0.0
    %5635 = vmatpush2.msra.mxu0 0.0
    %5636 = vmatprep.subr.mxu0 0.0
    %5637 = vmatpush2.msra.mxu0 0.0
    %5638 = vmatprep.subr.mxu0 0.0
    %5639 = vmatpush2.msra.mxu0 0.0
    %5640 = vmatprep.subr.mxu0 0.0
    %5641 = vmatpush2.msra.mxu0 0.0
    %5642 = vmatprep.subr.mxu0 0.0
    %5643 = vmatpush2.msra.mxu0 0.0
    %5644 = vmatprep.subr.mxu0 0.0
    %5645 = vmatpush2.msra.mxu0 0.0
    %5646 = vmatprep.subr.mxu0 0.0
    %5647 = vmatpush2.msra.mxu0 0.0
    %5648 = vmatprep.subr.mxu0 0.0
    %5649 = vmatpush2.msra.mxu0 0.0
    %5650 = vmatprep.subr.mxu0 0.0
    %5651 = vmatpush2.msra.mxu0 0.0
    %5652 = vmatprep.subr.mxu0 0.0
    %5653 = vmatpush2.msra.mxu0 0.0
    %5654 = vmatprep.subr.mxu0 0.0
    %5655 = vmatpush2.msra.mxu0 0.0
    %5656 = vmatprep.subr.mxu0 0.0
    %5657 = vmatpush2.msra.mxu0 0.0
    %5658 = vmatprep.subr.mxu0 0.0
    %5659 = vmatpush2.msra.mxu0 0.0
    %5660 = vmatprep.subr.mxu0 0.0
    %5661 = vmatpush2.msra.mxu0 0.0
    %5662 = vmatprep.mubr.f32.mxu0 0.0
    %5663 = vmatmul.mubr.f32.gmra.mxu0 %v5596
    %v5664 = vpop.f32.mrf.mxu0
    %v5665 = vadd.f32 0.0, %v5664
    %v5666 = vpop.f32.mrf.mxu0
    %5667 = vdwg.mxu0
    %5668 = vst.msk [vmem:[#allocation9] sm:$0xff] %vm371, %v1061
    %5669 = vst.msk [vmem:[#allocation9 + $0x8] sm:$0xff] %vm371, %v2389
    %5670 = vst.msk [vmem:[#allocation9 + $0x10] sm:$0xff] %vm371, %v3717
    %5671 = vst.msk [vmem:[#allocation9 + $0x18] sm:$0xff] %vm371, %v5045
    %5672 = vst.msk [vmem:[#allocation9 + $0x20] sm:$0xff] %vm371, %v1063
    %5673 = vst.msk [vmem:[#allocation9 + $0x28] sm:$0xff] %vm371, %v2391
    %5674 = vst.msk [vmem:[#allocation9 + $0x30] sm:$0xff] %vm371, %v3719
    %5675 = vst.msk [vmem:[#allocation9 + $0x38] sm:$0xff] %vm371, %v5047
    %5676 = vst.msk [vmem:[#allocation9 + $0x40] sm:$0xff] %vm371, %v1065
    %5677 = vst.msk [vmem:[#allocation9 + $0x48] sm:$0xff] %vm371, %v2393
    %5678 = vst.msk [vmem:[#allocation9 + $0x50] sm:$0xff] %vm371, %v3721
    %5679 = vst.msk [vmem:[#allocation9 + $0x58] sm:$0xff] %vm371, %v5049
    %5680 = vst.msk [vmem:[#allocation9 + $0x60] sm:$0xff] %vm371, %v1067
    %5681 = vst.msk [vmem:[#allocation9 + $0x68] sm:$0xff] %vm371, %v2395
    %5682 = vst.msk [vmem:[#allocation9 + $0x70] sm:$0xff] %vm371, %v3723
    %5683 = vst.msk [vmem:[#allocation9 + $0x78] sm:$0xff] %vm371, %v5051
    %5684 = vst.msk [vmem:[#allocation9 + $0x80] sm:$0xff] %vm371, %v1069
    %5685 = vst.msk [vmem:[#allocation9 + $0x88] sm:$0xff] %vm371, %v2397
    %5686 = vst.msk [vmem:[#allocation9 + $0x90] sm:$0xff] %vm371, %v3725
    %5687 = vst.msk [vmem:[#allocation9 + $0x98] sm:$0xff] %vm371, %v5053
    %5688 = vst.msk [vmem:[#allocation9 + $0xa0] sm:$0xff] %vm371, %v1071
    %5689 = vst.msk [vmem:[#allocation9 + $0xa8] sm:$0xff] %vm371, %v2399
    %5690 = vst.msk [vmem:[#allocation9 + $0xb0] sm:$0xff] %vm371, %v3727
    %5691 = vst.msk [vmem:[#allocation9 + $0xb8] sm:$0xff] %vm371, %v5055
    %5692 = vst.msk [vmem:[#allocation9 + $0xc0] sm:$0xff] %vm371, %v1073
    %5693 = vst.msk [vmem:[#allocation9 + $0xc8] sm:$0xff] %vm371, %v2401
    %5694 = vst.msk [vmem:[#allocation9 + $0xd0] sm:$0xff] %vm371, %v3729
    %5695 = vst.msk [vmem:[#allocation9 + $0xd8] sm:$0xff] %vm371, %v5057
    %5696 = vst.msk [vmem:[#allocation9 + $0xe0] sm:$0xff] %vm371, %v1075
    %5697 = vst.msk [vmem:[#allocation9 + $0xe8] sm:$0xff] %vm371, %v2403
    %5698 = vst.msk [vmem:[#allocation9 + $0xf0] sm:$0xff] %vm371, %v3731
    %5699 = vst.msk [vmem:[#allocation9 + $0xf8] sm:$0xff] %vm371, %v5059
    %5708 = vrot.lane.b32.xlu0 %v2477, 8
    %v5709 = vpop.permute.xlu0 %5708
    %5710 = vrot.lane.b32.xlu0 %v2553, 8
    %v5711 = vpop.permute.xlu0 %5710
    %5712 = vrot.lane.b32.xlu0 %v2629, 8
    %v5713 = vpop.permute.xlu0 %5712
    %5714 = vrot.lane.b32.xlu0 %v2705, 8
    %v5715 = vpop.permute.xlu0 %5714
    %5716 = vrot.lane.b32.xlu0 %v2781, 8
    %v5717 = vpop.permute.xlu0 %5716
    %5718 = vrot.lane.b32.xlu0 %v2857, 8
    %v5719 = vpop.permute.xlu0 %5718
    %5720 = vrot.lane.b32.xlu0 %v2933, 8
    %v5721 = vpop.permute.xlu0 %5720
    %5722 = vrot.lane.b32.xlu0 %v3009, 8
    %v5723 = vpop.permute.xlu0 %5722
    %5740 = vrot.lane.b32.xlu0 %v3805, 16
    %v5741 = vpop.permute.xlu0 %5740
    %5742 = vrot.lane.b32.xlu0 %v3881, 16
    %v5743 = vpop.permute.xlu0 %5742
    %5744 = vrot.lane.b32.xlu0 %v3957, 16
    %v5745 = vpop.permute.xlu0 %5744
    %5746 = vrot.lane.b32.xlu0 %v4033, 16
    %v5747 = vpop.permute.xlu0 %5746
    %5748 = vrot.lane.b32.xlu0 %v4109, 16
    %v5749 = vpop.permute.xlu0 %5748
    %5750 = vrot.lane.b32.xlu0 %v4185, 16
    %v5751 = vpop.permute.xlu0 %5750
    %5752 = vrot.lane.b32.xlu0 %v4261, 16
    %v5753 = vpop.permute.xlu0 %5752
    %5754 = vrot.lane.b32.xlu0 %v4337, 16
    %v5755 = vpop.permute.xlu0 %5754
    %5772 = vrot.lane.b32.xlu0 %v5133, 24
    %v5773 = vpop.permute.xlu0 %5772
    %5774 = vrot.lane.b32.xlu0 %v5209, 24
    %v5775 = vpop.permute.xlu0 %5774
    %5776 = vrot.lane.b32.xlu0 %v5285, 24
    %v5777 = vpop.permute.xlu0 %5776
    %5778 = vrot.lane.b32.xlu0 %v5361, 24
    %v5779 = vpop.permute.xlu0 %5778
    %5780 = vrot.lane.b32.xlu0 %v5437, 24
    %v5781 = vpop.permute.xlu0 %5780
    %5782 = vrot.lane.b32.xlu0 %v5513, 24
    %v5783 = vpop.permute.xlu0 %5782
    %5784 = vrot.lane.b32.xlu0 %v5589, 24
    %v5785 = vpop.permute.xlu0 %5784
    %5786 = vrot.lane.b32.xlu0 %v5665, 24
    %v5787 = vpop.permute.xlu0 %5786
    %v5796 = vsel %vm371, %v1149, %v5709
    %v5797 = vsel %vm371, %v1225, %v5711
    %v5798 = vsel %vm371, %v1301, %v5713
    %v5799 = vsel %vm371, %v1377, %v5715
    %v5800 = vsel %vm371, %v1453, %v5717
    %v5801 = vsel %vm371, %v1529, %v5719
    %v5802 = vsel %vm371, %v1605, %v5721
    %v5803 = vsel %vm371, %v1681, %v5723
    %vm5804 = vcmask 130048
    %v5805 = vsel %vm5804, %v5796, %v5741
    %v5806 = vsel %vm5804, %v5797, %v5743
    %v5807 = vsel %vm5804, %v5798, %v5745
    %v5808 = vsel %vm5804, %v5799, %v5747
    %v5809 = vsel %vm5804, %v5800, %v5749
    %v5810 = vsel %vm5804, %v5801, %v5751
    %v5811 = vsel %vm5804, %v5802, %v5753
    %v5812 = vsel %vm5804, %v5803, %v5755
    %vm5813 = vcmask 195584
    %v5814 = vsel %vm5813, %v5805, %v5773
    %v5815 = vsel %vm5813, %v5806, %v5775
    %v5816 = vsel %vm5813, %v5807, %v5777
    %v5817 = vsel %vm5813, %v5808, %v5779
    %v5818 = vsel %vm5813, %v5809, %v5781
    %v5819 = vsel %vm5813, %v5810, %v5783
    %v5820 = vsel %vm5813, %v5811, %v5785
    %v5821 = vsel %vm5813, %v5812, %v5787
    %v5822 = vld [vmem:[%s6] sm:$0xff]
    %v5823 = vld [vmem:[%s6 + $0x8] sm:$0xff]
    %v5824 = vld [vmem:[%s6 + $0x10] sm:$0xff]
    %v5825 = vld [vmem:[%s6 + $0x18] sm:$0xff]
    %v5826 = vld [vmem:[%s7] sm:$0x1]
    %v5828 = vlaneseq
    %v5829 = vshrl.u32 %v5828, 7
    %v5830 = vsub.s32 0, %v5829
    %v5831 = vrot.slane %v5826, %v5830
    %v5834 = vsel %vm101, %v5814, 0
    %v5837 = vsel %vm101, %v5815, 0
    %v5840 = vsel %vm101, %v5816, 0
    %v5843 = vsel %vm101, %v5817, 0
    %v5846 = vsel %vm101, %v5818, 0
    %v5849 = vsel %vm101, %v5819, 0
    %v5852 = vsel %vm101, %v5820, 0
    %v5855 = vsel %vm101, %v5821, 0
    %5857 = vmatprep.subr.mxu0 0.0
    %5858 = vmatpush1.msra.mxu0 0.0
    %5859 = vmatprep.subr.mxu0 0.0
    %5860 = vmatpush1.msra.mxu0 0.0
    %5861 = vmatprep.subr.mxu0 0.0
    %5862 = vmatpush1.msra.mxu0 0.0
    %5863 = vmatprep.subr.mxu0 0.0
    %5864 = vmatpush1.msra.mxu0 0.0
    %5865 = vmatprep.subr.mxu0 0.0
    %5866 = vmatpush1.msra.mxu0 0.0
    %5867 = vmatprep.subr.mxu0 0.0
    %5868 = vmatpush1.msra.mxu0 0.0
    %5869 = vmatprep.subr.mxu0 0.0
    %5870 = vmatpush1.msra.mxu0 0.0
    %5871 = vmatprep.subr.mxu0 0.0
    %5872 = vmatpush1.msra.mxu0 0.0
    %5873 = vmatprep.subr.mxu0 0.0
    %5874 = vmatpush1.msra.mxu0 0.0
    %5875 = vmatprep.subr.mxu0 0.0
    %5876 = vmatpush1.msra.mxu0 0.0
    %5877 = vmatprep.subr.mxu0 0.0
    %5878 = vmatpush1.msra.mxu0 0.0
    %5879 = vmatprep.subr.mxu0 0.0
    %5880 = vmatpush1.msra.mxu0 0.0
    %5881 = vmatprep.subr.mxu0 0.0
    %5882 = vmatpush1.msra.mxu0 %v5825
    %5883 = vmatprep.subr.mxu0 0.0
    %5884 = vmatpush1.msra.mxu0 %v5824
    %5885 = vmatprep.subr.mxu0 0.0
    %5886 = vmatpush1.msra.mxu0 %v5823
    %5887 = vmatprep.subr.mxu0 0.0
    %5888 = vmatpush1.msra.mxu0 %v5822
    %5889 = vmatprep.subr.mxu0 0.0
    %5890 = vmatpush2.msra.mxu0 0.0
    %5891 = vmatprep.subr.mxu0 0.0
    %5892 = vmatpush2.msra.mxu0 0.0
    %5893 = vmatprep.subr.mxu0 0.0
    %5894 = vmatpush2.msra.mxu0 0.0
    %5895 = vmatprep.subr.mxu0 0.0
    %5896 = vmatpush2.msra.mxu0 0.0
    %5897 = vmatprep.subr.mxu0 0.0
    %5898 = vmatpush2.msra.mxu0 0.0
    %5899 = vmatprep.subr.mxu0 0.0
    %5900 = vmatpush2.msra.mxu0 0.0
    %5901 = vmatprep.subr.mxu0 0.0
    %5902 = vmatpush2.msra.mxu0 0.0
    %5903 = vmatprep.subr.mxu0 0.0
    %5904 = vmatpush2.msra.mxu0 0.0
    %5905 = vmatprep.subr.mxu0 0.0
    %5906 = vmatpush2.msra.mxu0 0.0
    %5907 = vmatprep.subr.mxu0 0.0
    %5908 = vmatpush2.msra.mxu0 0.0
    %5909 = vmatprep.subr.mxu0 0.0
    %5910 = vmatpush2.msra.mxu0 0.0
    %5911 = vmatprep.subr.mxu0 0.0
    %5912 = vmatpush2.msra.mxu0 0.0
    %5913 = vmatprep.subr.mxu0 0.0
    %5914 = vmatpush2.msra.mxu0 0.0
    %5915 = vmatprep.subr.mxu0 0.0
    %5916 = vmatpush2.msra.mxu0 0.0
    %5917 = vmatprep.subr.mxu0 0.0
    %5918 = vmatpush2.msra.mxu0 0.0
    %5919 = vmatprep.subr.mxu0 0.0
    %5920 = vmatpush2.msra.mxu0 0.0
    %5921 = vmatprep.mubr.f32.mxu0 0.0
    %5922 = vmatmul.mubr.f32.gmra.mxu0 %v5834
    %v5923 = vpop.f32.mrf.mxu0
    %v5924 = vadd.f32 %v5831, %v5923
    %v5925 = vpop.f32.mrf.mxu0
    %5926 = vmatprep.mubr.f32.mxu0 0.0
    %5927 = vmatmul.mubr.f32.gmra.mxu0 %v5837
    %v5928 = vpop.f32.mrf.mxu0
    %v5929 = vadd.f32 %v5831, %v5928
    %v5930 = vpop.f32.mrf.mxu0
    %5931 = vmatprep.mubr.f32.mxu0 0.0
    %5932 = vmatmul.mubr.f32.gmra.mxu0 %v5840
    %v5933 = vpop.f32.mrf.mxu0
    %v5934 = vadd.f32 %v5831, %v5933
    %v5935 = vpop.f32.mrf.mxu0
    %5936 = vmatprep.mubr.f32.mxu0 0.0
    %5937 = vmatmul.mubr.f32.gmra.mxu0 %v5843
    %v5938 = vpop.f32.mrf.mxu0
    %v5939 = vadd.f32 %v5831, %v5938
    %v5940 = vpop.f32.mrf.mxu0
    %5941 = vmatprep.mubr.f32.mxu0 0.0
    %5942 = vmatmul.mubr.f32.gmra.mxu0 %v5846
    %v5943 = vpop.f32.mrf.mxu0
    %v5944 = vadd.f32 %v5831, %v5943
    %v5945 = vpop.f32.mrf.mxu0
    %5946 = vmatprep.mubr.f32.mxu0 0.0
    %5947 = vmatmul.mubr.f32.gmra.mxu0 %v5849
    %v5948 = vpop.f32.mrf.mxu0
    %v5949 = vadd.f32 %v5831, %v5948
    %v5950 = vpop.f32.mrf.mxu0
    %5951 = vmatprep.mubr.f32.mxu0 0.0
    %5952 = vmatmul.mubr.f32.gmra.mxu0 %v5852
    %v5953 = vpop.f32.mrf.mxu0
    %v5954 = vadd.f32 %v5831, %v5953
    %v5955 = vpop.f32.mrf.mxu0
    %5956 = vmatprep.mubr.f32.mxu0 0.0
    %5957 = vmatmul.mubr.f32.gmra.mxu0 %v5855
    %v5958 = vpop.f32.mrf.mxu0
    %v5959 = vadd.f32 %v5831, %v5958
    %v5960 = vpop.f32.mrf.mxu0
    %5961 = vdwg.mxu0
    %5962 = vst.msk [vmem:[#allocation8] sm:$0xff] %vm5804, %v5924
    %5963 = vst.msk [vmem:[#allocation8 + $0x8] sm:$0xff] %vm5804, %v5929
    %5964 = vst.msk [vmem:[#allocation8 + $0x10] sm:$0xff] %vm5804, %v5934
    %5965 = vst.msk [vmem:[#allocation8 + $0x18] sm:$0xff] %vm5804, %v5939
    %5966 = vst.msk [vmem:[#allocation8 + $0x20] sm:$0xff] %vm5804, %v5944
    %5967 = vst.msk [vmem:[#allocation8 + $0x28] sm:$0xff] %vm5804, %v5949
    %5968 = vst.msk [vmem:[#allocation8 + $0x30] sm:$0xff] %vm5804, %v5954
    %5969 = vst.msk [vmem:[#allocation8 + $0x38] sm:$0xff] %vm5804, %v5959
    // Predicated region
    $region46: #{tpu_custom_call.1} parent=1 // pred_check
      _
    $region47: #{tpu_custom_call.1} parent=1 // pred_check_branch
      %5971 = sbr.rel (0) target = $region49
    $region48: #{tpu_custom_call.1} parent=1 // pred_region
      %s5973 = ssub.s32 1024, 1024
      %5974 = vsyncadd [#allocation4], %s5973
      %s5975 = sshll.u32 [#allocation8], 4
      %s5976 = int_to_ptr.vmem [resolvable:$true] %s5975
      %5981 = dma.vmem_to_hbm [thread:$0]  %s5976, 1024, %s8, [#allocation4], 128, 128, 8
    $region49: #{tpu_custom_call.1} parent=1 // pred_fallthru
      _
    // Predicated region
    $region50: #{tpu_custom_call.1} parent=1 // pred_check
      _
    $region51: #{tpu_custom_call.1} parent=1 // pred_check_branch
      %5983 = sbr.rel (0) target = $region53
    $region52: #{tpu_custom_call.1} parent=1 // pred_region
      %s5985 = ssub.s32 4096, 4096
      %5986 = vsyncadd [#allocation10], %s5985
      %s5987 = sshll.u32 [#allocation9], 4
      %s5988 = int_to_ptr.vmem [resolvable:$true] %s5987
      %5993 = dma.vmem_to_hbm [thread:$0]  %s5988, 4096, %s9, [#allocation10], 128, 128, 8
    $region53: #{tpu_custom_call.1} parent=1 // pred_fallthru
      _
    // Predicated region
    $region54: #{tpu_custom_call.1} parent=1 // pred_check
      _
    $region55: #{tpu_custom_call.1} parent=1 // pred_check_branch
      %5995 = sbr.rel (0) target = $region57
    $region56: #{tpu_custom_call.1} parent=1 // pred_region
      %5996 = dma.done [#allocation4], 1024
    $region57: #{tpu_custom_call.1} parent=1 // pred_fallthru
      _
    // Predicated region
    $region58: #{tpu_custom_call.1} parent=1 // pred_check
      _
    $region59: #{tpu_custom_call.1} parent=1 // pred_check_branch
      %5998 = sbr.rel (0) target = $region61
    $region60: #{tpu_custom_call.1} parent=1 // pred_region
      %5999 = dma.done [#allocation10], 4096
    $region61: #{tpu_custom_call.1} parent=1 // pred_fallthru
      _
    %6000 = vsyncpa [#allocation3], 1
    %6001 = vsyncpa [#allocation6], 1
    %6002 = vsyncpa [#allocation4], 1
    %6003 = vsyncpa [#allocation10], 1

</llo_original>
